<compile_context>
chip_gen: v6e
topology: v6e:2x2x1
jax: 0.10.0
libtpu: 0.0.40
codegen_flags: <defaults>
</compile_context>

<pallas_src>
import functools

import jax
import jax.numpy as jnp
import numpy as np
from jax import lax
from jax.experimental import pallas as pl
from jax.experimental.pallas import tpu as pltpu

BN_EPS = 1e-5
_MiB = 1024 * 1024


def _round_up(x, m):
    return ((x + m - 1) // m) * m


def _vmem_limit_bytes():
    """Generation-aware VMEM budget (~48 MiB on v7x, 96 MiB on v5e/v6e)."""
    try:
        info = pltpu.get_tpu_info()
        cap = int(getattr(info, "vmem_capacity_bytes", 0) or 0)
    except Exception:
        cap = 0
    if cap <= 0:
        return 32 * _MiB  # safe default scoped limit on every generation
    return min(96 * _MiB, int(cap * 0.75))


def _proj_vmem_bytes(Cp, Cip, tn):
    x_blk = Cp * tn * 4 * 2                  # f32 x tile, double-buffered
    w = 3 * Cip * Cp * 2 * 2                 # bf16 stacked weights
    b = 3 * Cip * 4 * 2
    outs = 3 * Cip * tn * 2 * 2              # 3 bf16 output tiles, double-buffered
    trans = 3 * Cip * tn * 4 + Cp * tn * 2   # f32 proj transient + bf16 x cast
    return x_blk + w + b + outs + trans


def _attn_vmem_bytes(Cp, Cip, tq, tk):
    tht = tq * Cip * 2 * 2
    kv = 2 * Cip * tk * 2 * 2                # phi + g
    xq = Cp * tq * 4 * 2
    ww = Cp * Cip * 2 * 2
    out = Cp * tq * 4 * 2
    scratch = tq * Cip * 4 + 2 * tq * 4
    trans = 3 * tq * tk * 4                  # s / p transients
    return tht + kv + xq + ww + out + scratch + trans


def _pick_proj_tile(N, Cp, Cip, vmem_limit):
    budget = int(0.8 * vmem_limit)
    for tn in (2048, 1024, 512, 256, 128):
        if N % tn == 0 and _proj_vmem_bytes(Cp, Cip, tn) <= budget:
            return tn
    if N % 128 == 0:
        return 128
    # TODO(synk): pad N to a 128 multiple and mask padded key positions so tiles stay
    # bounded for spatial sizes like 28x28 / 56x56 (N % 128 != 0).
    return N


def _pick_attn_tiles(N, Cp, Cip, vmem_limit):
    budget = int(0.8 * vmem_limit)
    small_vmem = vmem_limit <= 48 * _MiB     # v7x-class (64 MiB physical VMEM)
    tq_cands = (256, 128) if small_vmem else (1024, 512, 256, 128)
    for tq in tq_cands:
        if N % tq:
            continue
        for tk in (512, 256, 128):
            if N % tk:
                continue
            if _attn_vmem_bytes(Cp, Cip, tq, tk) <= budget:
                return tq, tk
    if N % 128 == 0:
        return 128, 128
    # TODO(synk): same N % 128 masking fallback as _pick_proj_tile.
    return N, N


# --------------------------------------------------------------------------
# Kernel 1: stacked 1x1-conv projections (theta / phi / g), bf16 outputs.
# --------------------------------------------------------------------------
def _proj_kernel(x_ref, w_ref, b_ref, tht_ref, phi_ref, g_ref):
    # x_ref: (Cp, TN) f32 ; w_ref: (3*Cip, Cp) bf16 ; b_ref: (3*Cip, 1) f32
    # Cast x in-kernel (cheap VPU work) so the MXU runs a native bf16 x bf16 matmul
    # without an extra HBM pass and without degrading the f32 residual of kernel 2.
    x_bf = x_ref[...].astype(w_ref.dtype)
    proj = jnp.dot(w_ref[...], x_bf,
                   preferred_element_type=jnp.float32) + b_ref[...]
    cip = phi_ref.shape[0]
    # theta stored transposed (positions on sublanes, channels on lanes) so the score
    # matmul is a plain (TQ, Ci) @ (Ci, TK); cast to bf16 BEFORE the transpose so the
    # XLU only moves half the bytes.
    tht_ref[...] = jnp.transpose(proj[0:cip, :].astype(tht_ref.dtype), (1, 0))
    phi_ref[...] = proj[cip:2 * cip, :].astype(phi_ref.dtype)
    g_ref[...] = proj[2 * cip:3 * cip, :].astype(g_ref.dtype)


# --------------------------------------------------------------------------
# Kernel 2: flash-style attention + folded-BN W projection + residual.
# --------------------------------------------------------------------------
def _attn_kernel(tht_ref, phi_ref, g_ref, xq_ref, ww_ref, bw_ref, out_ref,
                 m_sc, l_sc, acc_sc):
    ki = pl.program_id(2)

    @pl.when(ki == 0)
    def _init():
        m_sc[...] = jnp.full_like(m_sc, -jnp.inf)
        l_sc[...] = jnp.zeros_like(l_sc)
        acc_sc[...] = jnp.zeros_like(acc_sc)

    # Scores for this (q-tile, k-tile): bf16 MXU operands, f32 accumulation.
    s = jnp.dot(tht_ref[...], phi_ref[...],
                preferred_element_type=jnp.float32)              # (TQ, TK) f32

    # Online softmax update (all elementwise math stays f32 -> v5e-safe).
    m_prev = m_sc[...]                                           # (TQ, 1)
    m_new = jnp.maximum(m_prev, jnp.max(s, axis=-1, keepdims=True))
    alpha = jnp.exp(m_prev - m_new)                              # (TQ, 1)
    p = jnp.exp(s - m_new)                                       # (TQ, TK) f32
    l_sc[...] = alpha * l_sc[...] + jnp.sum(p, axis=-1, keepdims=True)
    # acc += p @ g^T  (contract key dim; g tile is (Ci, TK)); bf16 MXU operands.
    acc_sc[...] = alpha * acc_sc[...] + lax.dot_general(
        p.astype(g_ref.dtype), g_ref[...],
        (((1,), (1,)), ((), ())), preferred_element_type=jnp.float32)
    m_sc[...] = m_new

    @pl.when(ki == pl.num_programs(2) - 1)
    def _finalize():
        # Exact reciprocal: the EUP slot is idle here, so it is essentially free and
        # keeps tighter parity with the f32 reference.
        y = acc_sc[...] * pl.reciprocal(l_sc[...])               # (TQ, Ci) f32
        # W projection with inference-mode BatchNorm folded in (bf16 MXU operands):
        # (C, Ci) contracted with (TQ, Ci) -> (C, TQ), f32 accumulation.
        wy = lax.dot_general(ww_ref[...], y.astype(ww_ref.dtype),
                             (((1,), (1,)), ((), ())),
                             preferred_element_type=jnp.float32) + bw_ref[...]
        out_ref[...] = (wy + xq_ref[...]).astype(out_ref.dtype)  # residual, lane-dense store


# --------------------------------------------------------------------------
# Wrapper
# --------------------------------------------------------------------------
@functools.partial(jax.jit, static_argnames=("tq", "tk"))
def nonlocal_block(x_nchw, params, *, tq=None, tk=None):
    """NonLocalBlock forward. x_nchw: (B, C, H, W) f32 -> (B, C, H, W) f32."""
    B, C, H, W = x_nchw.shape
    N = H * W
    Ci = params["wt"].shape[0]

    Cp = _round_up(C, 16)       # bf16 sublane-pack granule
    Cip = _round_up(Ci, 128)    # lane-dense theta_t store + bf16-friendly phi/g tiles
    vmem_limit = _vmem_limit_bytes()

    tn_proj = _pick_proj_tile(N, Cp, Cip, vmem_limit)
    tq_auto, tk_auto = _pick_attn_tiles(N, Cp, Cip, vmem_limit)
    tq = tq_auto if tq is None else tq
    tk = tk_auto if tk is None else tk
    if N % tq or N % tk:
        raise ValueError("tq/tk must divide H*W")

    # ---- wrapper-side parameter prep (BN folding + padding + stacking) ----
    scale = params["gamma"] * lax.rsqrt(params["var"] + BN_EPS)
    ww_f = params["ww"] * scale[:, None]
    bw_f = (params["bw"] - params["mean"]) * scale + params["beta"]

    def pad_w(w, rows, cols):
        return jnp.zeros((rows, cols), jnp.float32).at[:w.shape[0], :w.shape[1]].set(w)

    def pad_b(b, rows):
        return jnp.zeros((rows, 1), jnp.float32).at[:b.shape[0], 0].set(b)

    w_all = jnp.concatenate([pad_w(params["wt"], Cip, Cp),
                             pad_w(params["wp"], Cip, Cp),
                             pad_w(params["wg"], Cip, Cp)],
                            axis=0).astype(jnp.bfloat16)           # (3Cip, Cp) bf16
    b_all = jnp.concatenate([pad_b(params["bt"], Cip),
                             pad_b(params["bp"], Cip),
                             pad_b(params["bg"], Cip)], axis=0)    # (3Cip, 1) f32
    ww_p = pad_w(ww_f, Cp, Cip).astype(jnp.bfloat16)               # (Cp, Cip) bf16
    bw_p = pad_b(bw_f, Cp)                                         # (Cp, 1) f32

    # NCHW -> (B, C, N) is a pure reshape (no transpose / HBM round trip).
    x_flat = x_nchw.reshape(B, C, N)
    if Cp != C:
        x_p = jnp.zeros((B, Cp, N), x_nchw.dtype).at[:, :C, :].set(x_flat)
    else:
        x_p = x_flat

    # ---- kernel 1: projections (own, larger N-tile; memory-bound) ----
    theta_t, phi, g = pl.pallas_call(
        _proj_kernel,
        out_shape=(jax.ShapeDtypeStruct((B, N, Cip), jnp.bfloat16),
                   jax.ShapeDtypeStruct((B, Cip, N), jnp.bfloat16),
                   jax.ShapeDtypeStruct((B, Cip, N), jnp.bfloat16)),
        grid_spec=pltpu.PrefetchScalarGridSpec(
            num_scalar_prefetch=0,
            grid=(B, N // tn_proj),
            in_specs=[
                pl.BlockSpec((None, Cp, tn_proj), lambda b, n: (b, 0, n)),
                pl.BlockSpec((3 * Cip, Cp), lambda b, n: (0, 0)),
                pl.BlockSpec((3 * Cip, 1), lambda b, n: (0, 0)),
            ],
            out_specs=[
                pl.BlockSpec((None, tn_proj, Cip), lambda b, n: (b, n, 0)),
                pl.BlockSpec((None, Cip, tn_proj), lambda b, n: (b, 0, n)),
                pl.BlockSpec((None, Cip, tn_proj), lambda b, n: (b, 0, n)),
            ],
        ),
        compiler_params=pltpu.CompilerParams(
            dimension_semantics=("parallel", "parallel"),
            vmem_limit_bytes=vmem_limit),
    )(x_p, w_all, b_all)

    # Donate the residual input into the output only when x_p is already a fresh
    # padded intermediate; when Cp == C it aliases the jit argument and XLA would
    # insert a defensive HBM copy (a bandwidth loss), so skip in that case.
    io_alias = {3: 0} if Cp != C else {}

    # TODO(synk): on v5e consider pipeline_mode=pl.Buffered(3) on the phi/g specs if
    # traces show the k-axis DMA exposed.
    out_p = pl.pallas_call(
        _attn_kernel,
        out_shape=jax.ShapeDtypeStruct((B, Cp, N), x_nchw.dtype),
        grid_spec=pltpu.PrefetchScalarGridSpec(
            num_scalar_prefetch=0,
            grid=(B, N // tq, N // tk),
            in_specs=[
                pl.BlockSpec((None, tq, Cip), lambda b, q, k: (b, q, 0)),   # theta^T q-tile
                pl.BlockSpec((None, Cip, tk), lambda b, q, k: (b, 0, k)),   # phi k-tile
                pl.BlockSpec((None, Cip, tk), lambda b, q, k: (b, 0, k)),   # g k-tile
                pl.BlockSpec((None, Cp, tq), lambda b, q, k: (b, 0, q)),    # x q-tile (residual)
                pl.BlockSpec((Cp, Cip), lambda b, q, k: (0, 0)),            # folded W (bf16)
                pl.BlockSpec((Cp, 1), lambda b, q, k: (0, 0)),              # folded bias (f32)
            ],
            out_specs=pl.BlockSpec((None, Cp, tq), lambda b, q, k: (b, 0, q)),
            scratch_shapes=[
                pltpu.VMEM((tq, 1), jnp.float32),     # m
                pltpu.VMEM((tq, 1), jnp.float32),     # l
                pltpu.VMEM((tq, Cip), jnp.float32),   # acc
            ],
        ),
        input_output_aliases=io_alias,
        compiler_params=pltpu.CompilerParams(
            dimension_semantics=("parallel", "parallel", "arbitrary"),
            vmem_limit_bytes=vmem_limit),
    )(theta_t, phi, g, x_p, ww_p, bw_p)

    return out_p[:, :C, :].reshape(B, C, H, W)


# --------------------------------------------------------------------------
# Parameters & pure-JAX reference
# --------------------------------------------------------------------------
def make_params(key, in_channels, inter_channels):
    """Synthetic parameters in PyTorch conv orientation (out_ch, in_ch).

    NOTE: the PyTorch module initializes the BatchNorm gamma/beta to 0, which zeroes
    the whole non-local branch (z == x) and would make the test vacuous. We use
    generic non-zero BN parameters / running stats so the attention path is actually
    validated; the implemented math (inference-mode BN) is identical.
    """
    C, Ci = in_channels, inter_channels
    ks = jax.random.split(key, 12)
    s = 0.1
    wt = s * jax.random.normal(ks[0], (Ci, C), jnp.float32)
    wp = s * jax.random.normal(ks[1], (Ci, C), jnp.float32)
    wg = s * jax.random.normal(ks[2], (Ci, C), jnp.float32)
    ww = s * jax.random.normal(ks[3], (C, Ci), jnp.float32)
    bt = s * jax.random.normal(ks[4], (Ci,), jnp.float32)
    bp = s * jax.random.normal(ks[5], (Ci,), jnp.float32)
    bg = s * jax.random.normal(ks[6], (Ci,), jnp.float32)
    bw = s * jax.random.normal(ks[7], (C,), jnp.float32)
    gamma = 1.0 + 0.2 * jax.random.normal(ks[8], (C,), jnp.float32)
    beta = 0.1 * jax.random.normal(ks[9], (C,), jnp.float32)
    mean = 0.1 * jax.random.normal(ks[10], (C,), jnp.float32)
    var = jax.random.uniform(ks[11], (C,), jnp.float32, minval=0.5, maxval=1.5)
    return dict(wt=wt, wp=wp, wg=wg, ww=ww, bt=bt, bp=bp, bg=bg, bw=bw,
                gamma=gamma, beta=beta, mean=mean, var=var)


def reference(x_nchw, params):
    """Pure-JAX f32 reference mirroring the PyTorch forward (inference-mode BN)."""
    B, C, H, W = x_nchw.shape
    N = H * W
    x = x_nchw.reshape(B, C, N)
    theta = jnp.einsum("oc,bcn->bon", params["wt"], x) + params["bt"][None, :, None]
    phi = jnp.einsum("oc,bcn->bon", params["wp"], x) + params["bp"][None, :, None]
    g = jnp.einsum("oc,bcn->bon", params["wg"], x) + params["bg"][None, :, None]
    f = jnp.einsum("bcq,bck->bqk", theta, phi)
    p = jax.nn.softmax(f, axis=-1)
    y = jnp.einsum("bqk,bck->bcq", p, g)
    wy = jnp.einsum("oc,bcn->bon", params["ww"], y) + params["bw"][None, :, None]
    scale = params["gamma"] / jnp.sqrt(params["var"] + BN_EPS)
    bn = wy * scale[None, :, None] + (params["beta"] - params["mean"] * scale)[None, :, None]
    z = bn + x
    return z.reshape(B, C, H, W)


if __name__ == "__main__":
    in_channels = 8
    inter_channels = in_channels // 2    # module default: in_channels // 2
    B, H, W = 2, 16, 16

    key = jax.random.PRNGKey(0)
    kx, kp = jax.random.split(key)
    x = jax.random.normal(kx, (B, in_channels, H, W), jnp.float32)
    params = make_params(kp, in_channels, inter_channels)

    # tq=tk=128 at N=256 gives a (B, 2, 2) grid, exercising the multi-step
    # online-softmax carry (init / accumulate / finalize paths).
    out = nonlocal_block(x, params, tq=128, tk=128)
    out = jax.block_until_ready(out)

    ref = reference(x, params)
    # Kernel uses bf16 MXU operands (f32 accumulation), so compare at a
    # correspondingly relaxed (but still meaningful) tolerance vs f32 reference.
    np.testing.assert_allclose(np.asarray(out), np.asarray(ref), rtol=5e-3, atol=5e-3)

    print("KERNEL_OK")
</pallas_src>

<mosaic_0001>
module attributes {stable_mosaic.version = 11 : i64} {
  func.func @_proj_kernel(%arg0: i32, %arg1: i32, %arg2: memref<1x16x256xf32, #tpu.memory_space<vmem>>, %arg3: memref<384x16xbf16, #tpu.memory_space<vmem>>, %arg4: memref<384x1xf32, #tpu.memory_space<vmem>>, %arg5: memref<1x256x128xbf16, #tpu.memory_space<vmem>>, %arg6: memref<1x128x256xbf16, #tpu.memory_space<vmem>>, %arg7: memref<1x128x256xbf16, #tpu.memory_space<vmem>>) attributes {dimension_semantics = [#tpu.dimension_semantics<parallel>, #tpu.dimension_semantics<parallel>], iteration_bounds = array<i64: 2, 1>, scalar_prefetch = 0 : i64, scratch_operands = 0 : i64, tpu.core_type = #tpu.core_type<tc>, window_params = [{transform_indices = @transform_0, window_bounds = array<i64: 1, 16, 256>}, {pipeline_mode = #tpu.pipeline_mode<synchronous>, transform_indices = @transform_1, window_bounds = array<i64: 384, 16>}, {pipeline_mode = #tpu.pipeline_mode<synchronous>, transform_indices = @transform_2, window_bounds = array<i64: 384, 1>}, {transform_indices = @transform_3, window_bounds = array<i64: 1, 256, 128>}, {transform_indices = @transform_4, window_bounds = array<i64: 1, 128, 256>}, {transform_indices = @transform_5, window_bounds = array<i64: 1, 128, 256>}]} {
    %c0 = arith.constant 0 : index
    %c0_0 = arith.constant 0 : index
    %c0_1 = arith.constant 0 : index
    %0 = vector.load %arg2[%c0, %c0_0, %c0_1] : memref<1x16x256xf32, #tpu.memory_space<vmem>>, vector<1x16x256xf32>
    %1 = vector.shape_cast %0 : vector<1x16x256xf32> to vector<16x256xf32>
    %2 = arith.truncf %1 : vector<16x256xf32> to vector<16x256xbf16>
    %c0_2 = arith.constant 0 : index
    %c0_3 = arith.constant 0 : index
    %3 = vector.load %arg3[%c0_2, %c0_3] : memref<384x16xbf16, #tpu.memory_space<vmem>>, vector<384x16xbf16>
    %cst = arith.constant dense<0.000000e+00> : vector<384x256xf32>
    %4 = tpu.matmul %3, %2, %cst {dimension_numbers = #tpu.dot_dimension_numbers<[1], [0], [0], [1], [0, 0, 1, 1], [], []>} : vector<384x16xbf16>, vector<16x256xbf16>, vector<384x256xf32> -> vector<384x256xf32>
    %c0_4 = arith.constant 0 : index
    %c0_5 = arith.constant 0 : index
    %5 = vector.load %arg4[%c0_4, %c0_5] : memref<384x1xf32, #tpu.memory_space<vmem>>, vector<384x1xf32>
    %6 = vector.broadcast %5 : vector<384x1xf32> to vector<384x256xf32>
    %7 = arith.addf %4, %6 : vector<384x256xf32>
    %8 = vector.extract_strided_slice %7 {offsets = [0, 0], sizes = [128, 256], strides = [1, 1]} : vector<384x256xf32> to vector<128x256xf32>
    %9 = arith.truncf %8 : vector<128x256xf32> to vector<128x256xbf16>
    %10 = tpu.transpose %9, [1, 0] : vector<128x256xbf16> -> vector<256x128xbf16>
    %c0_6 = arith.constant 0 : index
    %c0_7 = arith.constant 0 : index
    %c0_8 = arith.constant 0 : index
    %11 = vector.load %arg5[%c0_6, %c0_7, %c0_8] : memref<1x256x128xbf16, #tpu.memory_space<vmem>>, vector<1x256x128xbf16>
    %12 = vector.shape_cast %11 : vector<1x256x128xbf16> to vector<256x128xbf16>
    %13 = vector.shape_cast %10 : vector<256x128xbf16> to vector<1x256x128xbf16>
    tpu.vector_store %arg5[%c0_6, %c0_7, %c0_8], %13 {strides = array<i32>} : memref<1x256x128xbf16, #tpu.memory_space<vmem>>, vector<1x256x128xbf16>,
    %14 = vector.extract_strided_slice %7 {offsets = [128, 0], sizes = [128, 256], strides = [1, 1]} : vector<384x256xf32> to vector<128x256xf32>
    %15 = arith.truncf %14 : vector<128x256xf32> to vector<128x256xbf16>
    %c0_9 = arith.constant 0 : index
    %c0_10 = arith.constant 0 : index
    %c0_11 = arith.constant 0 : index
    %16 = vector.load %arg6[%c0_9, %c0_10, %c0_11] : memref<1x128x256xbf16, #tpu.memory_space<vmem>>, vector<1x128x256xbf16>
    %17 = vector.shape_cast %16 : vector<1x128x256xbf16> to vector<128x256xbf16>
    %18 = vector.shape_cast %15 : vector<128x256xbf16> to vector<1x128x256xbf16>
    tpu.vector_store %arg6[%c0_9, %c0_10, %c0_11], %18 {strides = array<i32>} : memref<1x128x256xbf16, #tpu.memory_space<vmem>>, vector<1x128x256xbf16>,
    %19 = vector.extract_strided_slice %7 {offsets = [256, 0], sizes = [128, 256], strides = [1, 1]} : vector<384x256xf32> to vector<128x256xf32>
    %20 = arith.truncf %19 : vector<128x256xf32> to vector<128x256xbf16>
    %c0_12 = arith.constant 0 : index
    %c0_13 = arith.constant 0 : index
    %c0_14 = arith.constant 0 : index
    %21 = vector.load %arg7[%c0_12, %c0_13, %c0_14] : memref<1x128x256xbf16, #tpu.memory_space<vmem>>, vector<1x128x256xbf16>
    %22 = vector.shape_cast %21 : vector<1x128x256xbf16> to vector<128x256xbf16>
    %23 = vector.shape_cast %20 : vector<128x256xbf16> to vector<1x128x256xbf16>
    tpu.vector_store %arg7[%c0_12, %c0_13, %c0_14], %23 {strides = array<i32>} : memref<1x128x256xbf16, #tpu.memory_space<vmem>>, vector<1x128x256xbf16>,
    return
  }
  func.func @transform_0(%arg0: i32, %arg1: i32) -> (i32, i32, i32) {
    %c0_i32 = arith.constant 0 : i32
    %c0_i32_0 = arith.constant 0 : i32
    return %arg0, %c0_i32, %arg1 : i32, i32, i32
  }
  func.func @transform_1(%arg0: i32, %arg1: i32) -> (i32, i32) {
    %c0_i32 = arith.constant 0 : i32
    %c0_i32_0 = arith.constant 0 : i32
    %c0_i32_1 = arith.constant 0 : i32
    return %c0_i32, %c0_i32_0 : i32, i32
  }
  func.func @transform_2(%arg0: i32, %arg1: i32) -> (i32, i32) {
    %c0_i32 = arith.constant 0 : i32
    %c0_i32_0 = arith.constant 0 : i32
    %c0_i32_1 = arith.constant 0 : i32
    return %c0_i32, %c0_i32_0 : i32, i32
  }
  func.func @transform_3(%arg0: i32, %arg1: i32) -> (i32, i32, i32) {
    %c0_i32 = arith.constant 0 : i32
    %c0_i32_0 = arith.constant 0 : i32
    return %arg0, %arg1, %c0_i32 : i32, i32, i32
  }
  func.func @transform_4(%arg0: i32, %arg1: i32) -> (i32, i32, i32) {
    %c0_i32 = arith.constant 0 : i32
    %c0_i32_0 = arith.constant 0 : i32
    return %arg0, %c0_i32, %arg1 : i32, i32, i32
  }
  func.func @transform_5(%arg0: i32, %arg1: i32) -> (i32, i32, i32) {
    %c0_i32 = arith.constant 0 : i32
    %c0_i32_0 = arith.constant 0 : i32
    return %arg0, %c0_i32, %arg1 : i32, i32, i32
  }
}

module attributes {stable_mosaic.version = 11 : i64} {
  func.func @_attn_kernel(%arg0: i32, %arg1: i32, %arg2: i32, %arg3: memref<1x128x128xbf16, #tpu.memory_space<vmem>>, %arg4: memref<1x128x128xbf16, #tpu.memory_space<vmem>>, %arg5: memref<1x128x128xbf16, #tpu.memory_space<vmem>>, %arg6: memref<1x16x128xf32, #tpu.memory_space<vmem>>, %arg7: memref<16x128xbf16, #tpu.memory_space<vmem>>, %arg8: memref<16x1xf32, #tpu.memory_space<vmem>>, %arg9: memref<1x16x128xf32, #tpu.memory_space<vmem>>, %arg10: memref<128x1xf32, #tpu.memory_space<vmem>>, %arg11: memref<128x1xf32, #tpu.memory_space<vmem>>, %arg12: memref<128x128xf32, #tpu.memory_space<vmem>>) attributes {dimension_semantics = [#tpu.dimension_semantics<parallel>, #tpu.dimension_semantics<parallel>, #tpu.dimension_semantics<arbitrary>], iteration_bounds = array<i64: 2, 2, 2>, scalar_prefetch = 0 : i64, scratch_operands = 3 : i64, tpu.core_type = #tpu.core_type<tc>, window_params = [{transform_indices = @transform_0, window_bounds = array<i64: 1, 128, 128>}, {transform_indices = @transform_1, window_bounds = array<i64: 1, 128, 128>}, {transform_indices = @transform_2, window_bounds = array<i64: 1, 128, 128>}, {transform_indices = @transform_3, window_bounds = array<i64: 1, 16, 128>}, {pipeline_mode = #tpu.pipeline_mode<synchronous>, transform_indices = @transform_4, window_bounds = array<i64: 16, 128>}, {pipeline_mode = #tpu.pipeline_mode<synchronous>, transform_indices = @transform_5, window_bounds = array<i64: 16, 1>}, {transform_indices = @transform_6, window_bounds = array<i64: 1, 16, 128>}]} {
    %c0_i32 = arith.constant 0 : i32
    %0 = arith.cmpi eq, %arg2, %c0_i32 : i32
    %1 = arith.extui %0 : i1 to i32
    %c0_i32_0 = arith.constant 0 : i32
    %2 = arith.cmpi ne, %1, %c0_i32_0 : i32
    scf.if %2 {
      %cst_25 = arith.constant 0xFF800000 : f32
      %36 = vector.broadcast %cst_25 : f32 to vector<128x1xf32>
      %c0_26 = arith.constant 0 : index
      %c0_27 = arith.constant 0 : index
      %37 = vector.load %arg10[%c0_26, %c0_27] : memref<128x1xf32, #tpu.memory_space<vmem>>, vector<128x1xf32>
      tpu.vector_store %arg10[%c0_26, %c0_27], %36 {strides = array<i32>} : memref<128x1xf32, #tpu.memory_space<vmem>>, vector<128x1xf32>,
      %cst_28 = arith.constant 0.000000e+00 : f32
      %38 = vector.broadcast %cst_28 : f32 to vector<128x1xf32>
      %c0_29 = arith.constant 0 : index
      %c0_30 = arith.constant 0 : index
      %39 = vector.load %arg11[%c0_29, %c0_30] : memref<128x1xf32, #tpu.memory_space<vmem>>, vector<128x1xf32>
      tpu.vector_store %arg11[%c0_29, %c0_30], %38 {strides = array<i32>} : memref<128x1xf32, #tpu.memory_space<vmem>>, vector<128x1xf32>,
      %cst_31 = arith.constant 0.000000e+00 : f32
      %40 = vector.broadcast %cst_31 : f32 to vector<128x128xf32>
      %c0_32 = arith.constant 0 : index
      %c0_33 = arith.constant 0 : index
      %41 = vector.load %arg12[%c0_32, %c0_33] : memref<128x128xf32, #tpu.memory_space<vmem>>, vector<128x128xf32>
      tpu.vector_store %arg12[%c0_32, %c0_33], %40 {strides = array<i32>} : memref<128x128xf32, #tpu.memory_space<vmem>>, vector<128x128xf32>,
    } else {
    }
    %c0 = arith.constant 0 : index
    %c0_1 = arith.constant 0 : index
    %c0_2 = arith.constant 0 : index
    %3 = vector.load %arg3[%c0, %c0_1, %c0_2] : memref<1x128x128xbf16, #tpu.memory_space<vmem>>, vector<1x128x128xbf16>
    %4 = vector.shape_cast %3 : vector<1x128x128xbf16> to vector<128x128xbf16>
    %c0_3 = arith.constant 0 : index
    %c0_4 = arith.constant 0 : index
    %c0_5 = arith.constant 0 : index
    %5 = vector.load %arg4[%c0_3, %c0_4, %c0_5] : memref<1x128x128xbf16, #tpu.memory_space<vmem>>, vector<1x128x128xbf16>
    %6 = vector.shape_cast %5 : vector<1x128x128xbf16> to vector<128x128xbf16>
    %cst = arith.constant dense<0.000000e+00> : vector<128x128xf32>
    %7 = tpu.matmul %4, %6, %cst {dimension_numbers = #tpu.dot_dimension_numbers<[1], [0], [0], [1], [0, 0, 1, 1], [], []>} : vector<128x128xbf16>, vector<128x128xbf16>, vector<128x128xf32> -> vector<128x128xf32>
    %c0_6 = arith.constant 0 : index
    %c0_7 = arith.constant 0 : index
    %8 = vector.load %arg10[%c0_6, %c0_7] : memref<128x1xf32, #tpu.memory_space<vmem>>, vector<128x1xf32>
    %cst_8 = arith.constant dense<0xFF800000> : vector<128xf32>
    %9 = vector.multi_reduction <maximumf>, %7, %cst_8 [1] : vector<128x128xf32> to vector<128xf32>
    %10 = vector.shape_cast %9 : vector<128xf32> to vector<128x1xf32>
    %11 = arith.maximumf %8, %10 : vector<128x1xf32>
    %12 = arith.subf %8, %11 : vector<128x1xf32>
    %13 = math.exp %12 : vector<128x1xf32>
    %14 = vector.broadcast %11 : vector<128x1xf32> to vector<128x128xf32>
    %15 = arith.subf %7, %14 : vector<128x128xf32>
    %16 = math.exp %15 : vector<128x128xf32>
    %c0_9 = arith.constant 0 : index
    %c0_10 = arith.constant 0 : index
    %17 = vector.load %arg11[%c0_9, %c0_10] : memref<128x1xf32, #tpu.memory_space<vmem>>, vector<128x1xf32>
    %18 = arith.mulf %13, %17 : vector<128x1xf32>
    %cst_11 = arith.constant dense<0.000000e+00> : vector<128xf32>
    %19 = vector.multi_reduction <add>, %16, %cst_11 [1] : vector<128x128xf32> to vector<128xf32>
    %20 = vector.shape_cast %19 : vector<128xf32> to vector<128x1xf32>
    %21 = arith.addf %18, %20 : vector<128x1xf32>
    %c0_12 = arith.constant 0 : index
    %c0_13 = arith.constant 0 : index
    %22 = vector.load %arg11[%c0_12, %c0_13] : memref<128x1xf32, #tpu.memory_space<vmem>>, vector<128x1xf32>
    tpu.vector_store %arg11[%c0_12, %c0_13], %21 {strides = array<i32>} : memref<128x1xf32, #tpu.memory_space<vmem>>, vector<128x1xf32>,
    %c0_14 = arith.constant 0 : index
    %c0_15 = arith.constant 0 : index
    %23 = vector.load %arg12[%c0_14, %c0_15] : memref<128x128xf32, #tpu.memory_space<vmem>>, vector<128x128xf32>
    %24 = vector.broadcast %13 : vector<128x1xf32> to vector<128x128xf32>
    %25 = arith.mulf %24, %23 : vector<128x128xf32>
    %26 = arith.truncf %16 : vector<128x128xf32> to vector<128x128xbf16>
    %c0_16 = arith.constant 0 : index
    %c0_17 = arith.constant 0 : index
    %c0_18 = arith.constant 0 : index
    %27 = vector.load %arg5[%c0_16, %c0_17, %c0_18] : memref<1x128x128xbf16, #tpu.memory_space<vmem>>, vector<1x128x128xbf16>
    %28 = vector.shape_cast %27 : vector<1x128x128xbf16> to vector<128x128xbf16>
    %cst_19 = arith.constant dense<0.000000e+00> : vector<128x128xf32>
    %29 = tpu.matmul %26, %28, %cst_19 {dimension_numbers = #tpu.dot_dimension_numbers<[1], [1], [0], [0], [0, 0, 1, 0], [], []>} : vector<128x128xbf16>, vector<128x128xbf16>, vector<128x128xf32> -> vector<128x128xf32>
    %30 = arith.addf %25, %29 : vector<128x128xf32>
    %c0_20 = arith.constant 0 : index
    %c0_21 = arith.constant 0 : index
    %31 = vector.load %arg12[%c0_20, %c0_21] : memref<128x128xf32, #tpu.memory_space<vmem>>, vector<128x128xf32>
    tpu.vector_store %arg12[%c0_20, %c0_21], %30 {strides = array<i32>} : memref<128x128xf32, #tpu.memory_space<vmem>>, vector<128x128xf32>,
    %c0_22 = arith.constant 0 : index
    %c0_23 = arith.constant 0 : index
    %32 = vector.load %arg10[%c0_22, %c0_23] : memref<128x1xf32, #tpu.memory_space<vmem>>, vector<128x1xf32>
    tpu.vector_store %arg10[%c0_22, %c0_23], %11 {strides = array<i32>} : memref<128x1xf32, #tpu.memory_space<vmem>>, vector<128x1xf32>,
    %c1_i32 = arith.constant 1 : i32
    %33 = arith.cmpi eq, %arg2, %c1_i32 : i32
    %34 = arith.extui %33 : i1 to i32
    %c0_i32_24 = arith.constant 0 : i32
    %35 = arith.cmpi ne, %34, %c0_i32_24 : i32
    scf.if %35 {
      %c0_25 = arith.constant 0 : index
      %c0_26 = arith.constant 0 : index
      %36 = vector.load %arg12[%c0_25, %c0_26] : memref<128x128xf32, #tpu.memory_space<vmem>>, vector<128x128xf32>
      %c0_27 = arith.constant 0 : index
      %c0_28 = arith.constant 0 : index
      %37 = vector.load %arg11[%c0_27, %c0_28] : memref<128x1xf32, #tpu.memory_space<vmem>>, vector<128x1xf32>
      %38 = tpu.reciprocal %37 : vector<128x1xf32> -> vector<128x1xf32>
      %39 = vector.broadcast %38 : vector<128x1xf32> to vector<128x128xf32>
      %40 = arith.mulf %36, %39 : vector<128x128xf32>
      %c0_29 = arith.constant 0 : index
      %c0_30 = arith.constant 0 : index
      %41 = vector.load %arg7[%c0_29, %c0_30] : memref<16x128xbf16, #tpu.memory_space<vmem>>, vector<16x128xbf16>
      %42 = arith.truncf %40 : vector<128x128xf32> to vector<128x128xbf16>
      %cst_31 = arith.constant dense<0.000000e+00> : vector<16x128xf32>
      %43 = tpu.matmul %41, %42, %cst_31 {dimension_numbers = #tpu.dot_dimension_numbers<[1], [1], [0], [0], [0, 0, 1, 0], [], []>} : vector<16x128xbf16>, vector<128x128xbf16>, vector<16x128xf32> -> vector<16x128xf32>
      %c0_32 = arith.constant 0 : index
      %c0_33 = arith.constant 0 : index
      %44 = vector.load %arg8[%c0_32, %c0_33] : memref<16x1xf32, #tpu.memory_space<vmem>>, vector<16x1xf32>
      %45 = vector.broadcast %44 : vector<16x1xf32> to vector<16x128xf32>
      %46 = arith.addf %43, %45 : vector<16x128xf32>
      %c0_34 = arith.constant 0 : index
      %c0_35 = arith.constant 0 : index
      %c0_36 = arith.constant 0 : index
      %47 = vector.load %arg6[%c0_34, %c0_35, %c0_36] : memref<1x16x128xf32, #tpu.memory_space<vmem>>, vector<1x16x128xf32>
      %48 = vector.shape_cast %47 : vector<1x16x128xf32> to vector<16x128xf32>
      %49 = arith.addf %46, %48 : vector<16x128xf32>
      %c0_37 = arith.constant 0 : index
      %c0_38 = arith.constant 0 : index
      %c0_39 = arith.constant 0 : index
      %50 = vector.load %arg9[%c0_37, %c0_38, %c0_39] : memref<1x16x128xf32, #tpu.memory_space<vmem>>, vector<1x16x128xf32>
      %51 = vector.shape_cast %50 : vector<1x16x128xf32> to vector<16x128xf32>
      %52 = vector.shape_cast %49 : vector<16x128xf32> to vector<1x16x128xf32>
      tpu.vector_store %arg9[%c0_37, %c0_38, %c0_39], %52 {strides = array<i32>} : memref<1x16x128xf32, #tpu.memory_space<vmem>>, vector<1x16x128xf32>,
    } else {
    }
    return
  }
  func.func @transform_0(%arg0: i32, %arg1: i32, %arg2: i32) -> (i32, i32, i32) {
    %c0_i32 = arith.constant 0 : i32
    %c0_i32_0 = arith.constant 0 : i32
    return %arg0, %arg1, %c0_i32 : i32, i32, i32
  }
  func.func @transform_1(%arg0: i32, %arg1: i32, %arg2: i32) -> (i32, i32, i32) {
    %c0_i32 = arith.constant 0 : i32
    %c0_i32_0 = arith.constant 0 : i32
    return %arg0, %c0_i32, %arg2 : i32, i32, i32
  }
  func.func @transform_2(%arg0: i32, %arg1: i32, %arg2: i32) -> (i32, i32, i32) {
    %c0_i32 = arith.constant 0 : i32
    %c0_i32_0 = arith.constant 0 : i32
    return %arg0, %c0_i32, %arg2 : i32, i32, i32
  }
  func.func @transform_3(%arg0: i32, %arg1: i32, %arg2: i32) -> (i32, i32, i32) {
    %c0_i32 = arith.constant 0 : i32
    %c0_i32_0 = arith.constant 0 : i32
    return %arg0, %c0_i32, %arg1 : i32, i32, i32
  }
  func.func @transform_4(%arg0: i32, %arg1: i32, %arg2: i32) -> (i32, i32) {
    %c0_i32 = arith.constant 0 : i32
    %c0_i32_0 = arith.constant 0 : i32
    %c0_i32_1 = arith.constant 0 : i32
    return %c0_i32, %c0_i32_0 : i32, i32
  }
  func.func @transform_5(%arg0: i32, %arg1: i32, %arg2: i32) -> (i32, i32) {
    %c0_i32 = arith.constant 0 : i32
    %c0_i32_0 = arith.constant 0 : i32
    %c0_i32_1 = arith.constant 0 : i32
    return %c0_i32, %c0_i32_0 : i32, i32
  }
  func.func @transform_6(%arg0: i32, %arg1: i32, %arg2: i32) -> (i32, i32, i32) {
    %c0_i32 = arith.constant 0 : i32
    %c0_i32_0 = arith.constant 0 : i32
    return %arg0, %c0_i32, %arg1 : i32, i32, i32
  }
}

</mosaic_0001>

<llo_original>
// kernel: nonlocal_block.2
$region0: #{nonlocal_block.2}
  #allocation0 [shape = 'u32[]', space=smem, size = 0x4, offset = 0x4, fixed_abs, tag = 'smem constant byte address 0x4 - core index']
  #allocation1 [shape = 'u32[144,128]{1,0:T(1,128)}', space=vmem, size = 0x12000, scoped, tag = 'internal scratch']
  %s0 = inlined_call_operand.vmem [shape: f32[2,16,256], index: 0, kind: input, shape index: {}]
  %s1 = inlined_call_operand.vmem [shape: bf16[384,16], index: 1, kind: input, shape index: {}]
  %s2 = inlined_call_operand.vmem [shape: f32[384,1], index: 2, kind: input, shape index: {}]
  %s3 = inlined_call_operand.vmem [shape: bf16[2,256,128], index: 3, kind: output, shape index: {0}]
  %s4 = inlined_call_operand.vmem [shape: bf16[2,128,256], index: 4, kind: output, shape index: {1}]
  %s5 = inlined_call_operand.vmem [shape: bf16[2,128,256], index: 5, kind: output, shape index: {2}]
  %6 = xla_tuple %s3, %s4, %s5
  %s7 = sld [smem:[#allocation0]]
  $region61: #{nonlocal_block.2} parent=0
    _
  %s9 = ssub.s32 1, %s7
  %s10 = scalar_select 0, %s9, %s7
  loop: start=0, step=1, limit=4
  $region2: #{nonlocal_block.2} parent=0 // loop_pre_header
    _
  $region3: #{nonlocal_block.2} parent=0 // loop_header
    %s12 = sphi 0, %s16
    %p13 = scmp.ge.s32.totalorder %s12, 4
    %s19 = sphi 0, %s31
    %s20 = sphi 0, %s27
    %s21 = sphi 0, %s19
    %s22 = sphi 0, %s20
    %s23 = sphi 0, %s21
    %s24 = sphi 0, %s22
    %s36 = sphi 0, %s38
    %s39 = sphi 0, %s36
    %s40 = sphi 0, %s39
    %s56 = sphi 0, %s40
    %s60 = sphi 0, %s60
    %s62 = sphi 0, %s60
    %s63 = sphi 0, %s62
    %s77 = sphi 0, %s63
    %s81 = sphi 0, %s81
    %s83 = sphi 0, %s81
    %s84 = sphi 0, %s83
    %s98 = sphi 0, %s84
    %s106 = sphi 0, %s108
    %s109 = sphi 0, %s106
    %s110 = sphi 0, %s109
    %s126 = sphi 0, %s110
    %s134 = sphi 0, %s136
    %s137 = sphi 0, %s134
    %s138 = sphi 0, %s137
    %s154 = sphi 0, %s138
    %s162 = sphi 0, %s164
    %s165 = sphi 0, %s162
    %s166 = sphi 0, %s165
    %s182 = sphi 0, %s166
  $region4: #{nonlocal_block.2} parent=0 // loop_header_branch
    %15 = sbr.rel (%p13) target = $region8
  $region5: #{nonlocal_block.2} parent=0 // loop_body
    %s17 = ssub.s32 %s12, 1
    %s18 = ssub.s32 %s12, 2
    %s25 = sadd.s32 1, %s20
    %p26 = scmp.ge.s32.totalorder %s25, 1
    %s27 = scalar_select %p26, 0, %s25
    %s28 = sadd.s32 1, %s19
    %s29 = scalar_select %p26, %s28, %s19
    %p30 = scmp.ge.s32.totalorder %s29, 2
    %s31 = scalar_select %p30, 0, %s29
    %s32 = ssub.s32 %s19, %s31
    %s33 = ssub.s32 %s20, %s27
    %s34 = sor.u32 %s32, %s33
    %p35 = scmp.eq.s32.totalorder %s34, 0
    %s37 = sadd.s32 %s36, 1
    %s38 = scalar_select %p35, %s36, %s37
    %p41 = pneg %p35
    %p42 = scmp.eq.s32.totalorder %s12, 1
    %p43 = por %p41, %p42
    %p44 = scmp.ne.s32.totalorder %s36, %s39
    %p45 = scmp.eq.s32.totalorder %s12, 0
    %p46 = por %p44, %p45
    %p47 = scmp.ne.s32.totalorder %s36, %s39
    %p48 = scmp.eq.s32.totalorder %s17, 1
    %p49 = por %p47, %p48
    %p50 = scmp.ne.s32.totalorder %s39, %s40
    %p51 = scmp.eq.s32.totalorder %s17, 0
    %p52 = por %p50, %p51
    %p53 = scmp.ne.s32.totalorder %s39, %s40
    %p54 = scmp.eq.s32.totalorder %s18, 1
    %p55 = por %p53, %p54
    %p57 = scmp.ne.s32.totalorder %s40, %s56
    %p58 = scmp.eq.s32.totalorder %s18, 0
    %p59 = por %p57, %p58
    %s61 = sadd.s32 %s60, 1
    %p64 = scmp.eq.s32.totalorder %s12, 1
    %p65 = scmp.ne.s32.totalorder %s60, %s62
    %p66 = scmp.eq.s32.totalorder %s12, 0
    %p67 = por %p65, %p66
    %p68 = scmp.ne.s32.totalorder %s60, %s62
    %p69 = scmp.eq.s32.totalorder %s17, 1
    %p70 = por %p68, %p69
    %p71 = scmp.ne.s32.totalorder %s62, %s63
    %p72 = scmp.eq.s32.totalorder %s17, 0
    %p73 = por %p71, %p72
    %p74 = scmp.ne.s32.totalorder %s62, %s63
    %p75 = scmp.eq.s32.totalorder %s18, 1
    %p76 = por %p74, %p75
    %p78 = scmp.ne.s32.totalorder %s63, %s77
    %p79 = scmp.eq.s32.totalorder %s18, 0
    %p80 = por %p78, %p79
    %s82 = sadd.s32 %s81, 1
    %p85 = scmp.eq.s32.totalorder %s12, 1
    %p86 = scmp.ne.s32.totalorder %s81, %s83
    %p87 = scmp.eq.s32.totalorder %s12, 0
    %p88 = por %p86, %p87
    %p89 = scmp.ne.s32.totalorder %s81, %s83
    %p90 = scmp.eq.s32.totalorder %s17, 1
    %p91 = por %p89, %p90
    %p92 = scmp.ne.s32.totalorder %s83, %s84
    %p93 = scmp.eq.s32.totalorder %s17, 0
    %p94 = por %p92, %p93
    %p95 = scmp.ne.s32.totalorder %s83, %s84
    %p96 = scmp.eq.s32.totalorder %s18, 1
    %p97 = por %p95, %p96
    %p99 = scmp.ne.s32.totalorder %s84, %s98
    %p100 = scmp.eq.s32.totalorder %s18, 0
    %p101 = por %p99, %p100
    %s102 = ssub.s32 %s19, %s31
    %s103 = ssub.s32 %s20, %s27
    %s104 = sor.u32 %s102, %s103
    %p105 = scmp.eq.s32.totalorder %s104, 0
    %s107 = sadd.s32 %s106, 1
    %s108 = scalar_select %p105, %s106, %s107
    %p111 = pneg %p105
    %p112 = scmp.eq.s32.totalorder %s12, 1
    %p113 = por %p111, %p112
    %p114 = scmp.ne.s32.totalorder %s106, %s109
    %p115 = scmp.eq.s32.totalorder %s12, 0
    %p116 = por %p114, %p115
    %p117 = scmp.ne.s32.totalorder %s106, %s109
    %p118 = scmp.eq.s32.totalorder %s17, 1
    %p119 = por %p117, %p118
    %p120 = scmp.ne.s32.totalorder %s109, %s110
    %p121 = scmp.eq.s32.totalorder %s17, 0
    %p122 = por %p120, %p121
    %p123 = scmp.ne.s32.totalorder %s109, %s110
    %p124 = scmp.eq.s32.totalorder %s18, 1
    %p125 = por %p123, %p124
    %p127 = scmp.ne.s32.totalorder %s110, %s126
    %p128 = scmp.eq.s32.totalorder %s18, 0
    %p129 = por %p127, %p128
    %s130 = ssub.s32 %s19, %s31
    %s131 = ssub.s32 %s20, %s27
    %s132 = sor.u32 %s130, %s131
    %p133 = scmp.eq.s32.totalorder %s132, 0
    %s135 = sadd.s32 %s134, 1
    %s136 = scalar_select %p133, %s134, %s135
    %p139 = pneg %p133
    %p140 = scmp.eq.s32.totalorder %s12, 1
    %p141 = por %p139, %p140
    %p142 = scmp.ne.s32.totalorder %s134, %s137
    %p143 = scmp.eq.s32.totalorder %s12, 0
    %p144 = por %p142, %p143
    %p145 = scmp.ne.s32.totalorder %s134, %s137
    %p146 = scmp.eq.s32.totalorder %s17, 1
    %p147 = por %p145, %p146
    %p148 = scmp.ne.s32.totalorder %s137, %s138
    %p149 = scmp.eq.s32.totalorder %s17, 0
    %p150 = por %p148, %p149
    %p151 = scmp.ne.s32.totalorder %s137, %s138
    %p152 = scmp.eq.s32.totalorder %s18, 1
    %p153 = por %p151, %p152
    %p155 = scmp.ne.s32.totalorder %s138, %s154
    %p156 = scmp.eq.s32.totalorder %s18, 0
    %p157 = por %p155, %p156
    %s158 = ssub.s32 %s19, %s31
    %s159 = ssub.s32 %s20, %s27
    %s160 = sor.u32 %s158, %s159
    %p161 = scmp.eq.s32.totalorder %s160, 0
    %s163 = sadd.s32 %s162, 1
    %s164 = scalar_select %p161, %s162, %s163
    %p167 = pneg %p161
    %p168 = scmp.eq.s32.totalorder %s12, 1
    %p169 = por %p167, %p168
    %p170 = scmp.ne.s32.totalorder %s162, %s165
    %p171 = scmp.eq.s32.totalorder %s12, 0
    %p172 = por %p170, %p171
    %p173 = scmp.ne.s32.totalorder %s162, %s165
    %p174 = scmp.eq.s32.totalorder %s17, 1
    %p175 = por %p173, %p174
    %p176 = scmp.ne.s32.totalorder %s165, %s166
    %p177 = scmp.eq.s32.totalorder %s17, 0
    %p178 = por %p176, %p177
    %p179 = scmp.ne.s32.totalorder %s165, %s166
    %p180 = scmp.eq.s32.totalorder %s18, 1
    %p181 = por %p179, %p180
    %p183 = scmp.ne.s32.totalorder %s166, %s182
    %p184 = scmp.eq.s32.totalorder %s18, 0
    %p185 = por %p183, %p184
    %p186 = scmp.le.s32.totalorder 1, %s12
    %p187 = scmp.lt.s32.totalorder %s12, 3
    %p188 = pnand %p186, %p187
    %p189 = pneg %p188
    // Predicated region
    $region9: #{nonlocal_block.2} parent=5 // pred_check
      _
    $region10: #{nonlocal_block.2} parent=5 // pred_check_branch
      %191 = sbr.rel (%p188) target = $region12
    $region11: #{nonlocal_block.2} parent=5 // pred_region
      %s192 = ssub.s32 %s12, 1
      // Predicated region
      $region13: #{nonlocal_block.2} parent=11 // pred_check
        %p193 = pneg %p73
      $region14: #{nonlocal_block.2} parent=11 // pred_check_branch
        %195 = sbr.rel (%p193) target = $region16
      $region15: #{nonlocal_block.2} parent=11 // pred_region
        _
      $region16: #{nonlocal_block.2} parent=11 // pred_fallthru
        _
      // Predicated region
      $region17: #{nonlocal_block.2} parent=11 // pred_check
        %p196 = pneg %p94
      $region18: #{nonlocal_block.2} parent=11 // pred_check_branch
        %198 = sbr.rel (%p196) target = $region20
      $region19: #{nonlocal_block.2} parent=11 // pred_region
        _
      $region20: #{nonlocal_block.2} parent=11 // pred_fallthru
        _
    $region12: #{nonlocal_block.2} parent=5 // pred_fallthru
      _
    %p199 = scmp.lt.s32.totalorder %s12, 2
    // Predicated region
    $region21: #{nonlocal_block.2} parent=5 // pred_check
      %p200 = pneg %p199
    $region22: #{nonlocal_block.2} parent=5 // pred_check_branch
      %202 = sbr.rel (%p200) target = $region24
    $region23: #{nonlocal_block.2} parent=5 // pred_region
      // Predicated region
      $region25: #{nonlocal_block.2} parent=23 // pred_check
        %p203 = pneg %p46
      $region26: #{nonlocal_block.2} parent=23 // pred_check_branch
        %205 = sbr.rel (%p203) target = $region28
      $region27: #{nonlocal_block.2} parent=23 // pred_region
        %s206 = smul.u32 2, %s20
        %p207 = scmp.lt.s32.totalorder %s19, 1
        %s208 = scalar_select %p207, %s19, 1
        %p209 = scmp.lt.s32.totalorder %s206, 1
        %s210 = scalar_select %p209, %s206, 1
        %s211 = smul.addr %s208, 4
        %s212 = sadd.s32 %s210, %s211
        %s213 = smul.addr %s212, 8
        %s214 = scalar_lea.vmem %s0, %s213
        %s215 = smul.u32 2, %s20
      $region28: #{nonlocal_block.2} parent=23 // pred_fallthru
        _
    $region24: #{nonlocal_block.2} parent=5 // pred_fallthru
      _
    %p216 = scmp.le.s32.totalorder 1, %s12
    %p217 = scmp.lt.s32.totalorder %s12, 3
    %p218 = pnand %p216, %p217
    %p219 = pneg %p218
    // Predicated region
    $region29: #{nonlocal_block.2} parent=5 // pred_check
      _
    $region30: #{nonlocal_block.2} parent=5 // pred_check_branch
      %221 = sbr.rel (%p218) target = $region32
    $region31: #{nonlocal_block.2} parent=5 // pred_region
      %s222 = ssub.s32 %s12, 1
      %s223 = smul.u32 2, %s22
      %p224 = scmp.lt.s32.totalorder %s21, 1
      %s225 = scalar_select %p224, %s21, 1
      %p226 = scmp.lt.s32.totalorder %s223, 1
      %s227 = scalar_select %p226, %s223, 1
      %s228 = smul.addr %s225, 4
      %s229 = sadd.s32 %s227, %s228
      %s230 = smul.addr %s229, 8
      %s231 = scalar_lea.vmem %s0, %s230
      %p232 = pneg %p52
      %p233 = pneg %p49
      %p234 = pneg %p73
      %p235 = pneg %p70
      %p236 = pneg %p94
      %p237 = pneg %p91
      %p238 = pneg %p122
      %p239 = pneg %p119
      %s240 = smul.u32 32, %s22
      %p241 = scmp.lt.s32.totalorder %s21, 1
      %s242 = scalar_select %p241, %s21, 1
      %p243 = scmp.lt.s32.totalorder %s240, 31
      %s244 = scalar_select %p243, %s240, 31
      %s245 = smul.addr %s242, 32
      %s246 = sadd.s32 %s244, %s245
      %s247 = smul.addr %s246, 4
      %s248 = scalar_lea.vmem %s3, %s247
      %p249 = pneg %p150
      %p250 = pneg %p147
      %s251 = smul.u32 2, %s22
      %p252 = scmp.lt.s32.totalorder %s21, 1
      %s253 = scalar_select %p252, %s21, 1
      %p254 = scmp.lt.s32.totalorder %s251, 1
      %s255 = scalar_select %p254, %s251, 1
      %s256 = smul.addr %s253, 32
      %s257 = sadd.s32 %s255, %s256
      %s258 = smul.addr %s257, 4
      %s259 = scalar_lea.vmem %s4, %s258
      %p260 = pneg %p178
      %p261 = pneg %p175
      %s262 = smul.u32 2, %s22
      %p263 = scmp.lt.s32.totalorder %s21, 1
      %s264 = scalar_select %p263, %s21, 1
      %p265 = scmp.lt.s32.totalorder %s262, 1
      %s266 = scalar_select %p265, %s262, 1
      %s267 = smul.addr %s264, 32
      %s268 = sadd.s32 %s266, %s267
      %s269 = smul.addr %s268, 4
      %s270 = scalar_lea.vmem %s5, %s269
      %s271 = smul.u32 2, %s22
      %p272 = scmp.lt.s32.totalorder %s21, 1
      %s273 = scalar_select %p272, %s21, 1
      %p274 = scmp.lt.s32.totalorder %s271, 1
      %s275 = scalar_select %p274, %s271, 1
      %s276 = smul.addr %s273, 4
      %s277 = sadd.s32 %s275, %s276
      %s278 = smul.addr %s277, 8
      %s279 = scalar_lea.vmem %s0, %s278
      %s280 = smul.u32 2, %s22
      %s281 = smul.u32 32, %s22
      %p282 = scmp.lt.s32.totalorder %s21, 1
      %s283 = scalar_select %p282, %s21, 1
      %p284 = scmp.lt.s32.totalorder %s281, 31
      %s285 = scalar_select %p284, %s281, 31
      %s286 = smul.addr %s283, 32
      %s287 = sadd.s32 %s285, %s286
      %s288 = smul.addr %s287, 4
      %s289 = scalar_lea.vmem %s3, %s288
      %s290 = smul.u32 32, %s22
      %s291 = smul.u32 2, %s22
      %p292 = scmp.lt.s32.totalorder %s21, 1
      %s293 = scalar_select %p292, %s21, 1
      %p294 = scmp.lt.s32.totalorder %s291, 1
      %s295 = scalar_select %p294, %s291, 1
      %s296 = smul.addr %s293, 32
      %s297 = sadd.s32 %s295, %s296
      %s298 = smul.addr %s297, 4
      %s299 = scalar_lea.vmem %s4, %s298
      %s300 = smul.u32 2, %s22
      %s301 = smul.u32 2, %s22
      %p302 = scmp.lt.s32.totalorder %s21, 1
      %s303 = scalar_select %p302, %s21, 1
      %p304 = scmp.lt.s32.totalorder %s301, 1
      %s305 = scalar_select %p304, %s301, 1
      %s306 = smul.addr %s303, 32
      %s307 = sadd.s32 %s305, %s306
      %s308 = smul.addr %s307, 4
      %s309 = scalar_lea.vmem %s5, %s308
      %s310 = smul.u32 2, %s22
      %v312 = vld [vmem:[%s279] sm:$0xff]
      %v313 = vld [vmem:[%s279 + $0x8] sm:$0xff]
      %v314 = vld [vmem:[%s279 + $0x10] sm:$0xff]
      %v315 = vld [vmem:[%s279 + $0x18] sm:$0xff]
      %v316 = vpack.c.bf16 %v314, %v312
      %v317 = vpack.c.bf16 %v315, %v313
      %v318 = vld [vmem:[%s1] sm:$0xf]
      %v319 = vld [vmem:[%s1 + $0x4] sm:$0xf]
      %v320 = vld [vmem:[%s1 + $0x8] sm:$0xf]
      %v321 = vld [vmem:[%s1 + $0xc] sm:$0xf]
      %v322 = vld [vmem:[%s1 + $0x10] sm:$0xf]
      %v323 = vld [vmem:[%s1 + $0x14] sm:$0xf]
      %v324 = vld [vmem:[%s1 + $0x18] sm:$0xf]
      %v325 = vld [vmem:[%s1 + $0x1c] sm:$0xf]
      %v326 = vld [vmem:[%s1 + $0x20] sm:$0xf]
      %v327 = vld [vmem:[%s1 + $0x24] sm:$0xf]
      %v328 = vld [vmem:[%s1 + $0x28] sm:$0xf]
      %v329 = vld [vmem:[%s1 + $0x2c] sm:$0xf]
      %v330 = vld [vmem:[%s1 + $0x30] sm:$0xf]
      %v331 = vld [vmem:[%s1 + $0x34] sm:$0xf]
      %v332 = vld [vmem:[%s1 + $0x38] sm:$0xf]
      %v333 = vld [vmem:[%s1 + $0x3c] sm:$0xf]
      %v334 = vld [vmem:[%s1 + $0x40] sm:$0xf]
      %v335 = vld [vmem:[%s1 + $0x44] sm:$0xf]
      %v336 = vld [vmem:[%s1 + $0x48] sm:$0xf]
      %v337 = vld [vmem:[%s1 + $0x4c] sm:$0xf]
      %v338 = vld [vmem:[%s1 + $0x50] sm:$0xf]
      %v339 = vld [vmem:[%s1 + $0x54] sm:$0xf]
      %v340 = vld [vmem:[%s1 + $0x58] sm:$0xf]
      %v341 = vld [vmem:[%s1 + $0x5c] sm:$0xf]
      %v342 = vld [vmem:[%s1 + $0x60] sm:$0xf]
      %v343 = vld [vmem:[%s1 + $0x64] sm:$0xf]
      %v344 = vld [vmem:[%s1 + $0x68] sm:$0xf]
      %v345 = vld [vmem:[%s1 + $0x6c] sm:$0xf]
      %v346 = vld [vmem:[%s1 + $0x70] sm:$0xf]
      %v347 = vld [vmem:[%s1 + $0x74] sm:$0xf]
      %v348 = vld [vmem:[%s1 + $0x78] sm:$0xf]
      %v349 = vld [vmem:[%s1 + $0x7c] sm:$0xf]
      %v350 = vld [vmem:[%s1 + $0x80] sm:$0xf]
      %v351 = vld [vmem:[%s1 + $0x84] sm:$0xf]
      %v352 = vld [vmem:[%s1 + $0x88] sm:$0xf]
      %v353 = vld [vmem:[%s1 + $0x8c] sm:$0xf]
      %v354 = vld [vmem:[%s1 + $0x90] sm:$0xf]
      %v355 = vld [vmem:[%s1 + $0x94] sm:$0xf]
      %v356 = vld [vmem:[%s1 + $0x98] sm:$0xf]
      %v357 = vld [vmem:[%s1 + $0x9c] sm:$0xf]
      %v358 = vld [vmem:[%s1 + $0xa0] sm:$0xf]
      %v359 = vld [vmem:[%s1 + $0xa4] sm:$0xf]
      %v360 = vld [vmem:[%s1 + $0xa8] sm:$0xf]
      %v361 = vld [vmem:[%s1 + $0xac] sm:$0xf]
      %v362 = vld [vmem:[%s1 + $0xb0] sm:$0xf]
      %v363 = vld [vmem:[%s1 + $0xb4] sm:$0xf]
      %v364 = vld [vmem:[%s1 + $0xb8] sm:$0xf]
      %v365 = vld [vmem:[%s1 + $0xbc] sm:$0xf]
      %v366 = vld [vmem:[%s2] sm:$0xff]
      %v367 = vld [vmem:[%s2 + $0x8] sm:$0xff]
      %v368 = vld [vmem:[%s2 + $0x10] sm:$0xff]
      %v369 = vld [vmem:[%s2 + $0x18] sm:$0xff]
      %v370 = vld [vmem:[%s2 + $0x20] sm:$0xff]
      %v371 = vld [vmem:[%s2 + $0x28] sm:$0xff]
      %v372 = vld [vmem:[%s2 + $0x30] sm:$0xff]
      %v373 = vld [vmem:[%s2 + $0x38] sm:$0xff]
      %v374 = vld [vmem:[%s2 + $0x40] sm:$0xff]
      %v375 = vld [vmem:[%s2 + $0x48] sm:$0xff]
      %v376 = vld [vmem:[%s2 + $0x50] sm:$0xff]
      %v377 = vld [vmem:[%s2 + $0x58] sm:$0xff]
      %v378 = vld [vmem:[%s2 + $0x60] sm:$0xff]
      %v379 = vld [vmem:[%s2 + $0x68] sm:$0xff]
      %v380 = vld [vmem:[%s2 + $0x70] sm:$0xff]
      %v381 = vld [vmem:[%s2 + $0x78] sm:$0xff]
      %v382 = vld [vmem:[%s2 + $0x80] sm:$0xff]
      %v383 = vld [vmem:[%s2 + $0x88] sm:$0xff]
      %v384 = vld [vmem:[%s2 + $0x90] sm:$0xff]
      %v385 = vld [vmem:[%s2 + $0x98] sm:$0xff]
      %v386 = vld [vmem:[%s2 + $0xa0] sm:$0xff]
      %v387 = vld [vmem:[%s2 + $0xa8] sm:$0xff]
      %v388 = vld [vmem:[%s2 + $0xb0] sm:$0xff]
      %v389 = vld [vmem:[%s2 + $0xb8] sm:$0xff]
      %v390 = vld [vmem:[%s2 + $0xc0] sm:$0xff]
      %v391 = vld [vmem:[%s2 + $0xc8] sm:$0xff]
      %v392 = vld [vmem:[%s2 + $0xd0] sm:$0xff]
      %v393 = vld [vmem:[%s2 + $0xd8] sm:$0xff]
      %v394 = vld [vmem:[%s2 + $0xe0] sm:$0xff]
      %v395 = vld [vmem:[%s2 + $0xe8] sm:$0xff]
      %v396 = vld [vmem:[%s2 + $0xf0] sm:$0xff]
      %v397 = vld [vmem:[%s2 + $0xf8] sm:$0xff]
      %v398 = vld [vmem:[%s2 + $0x100] sm:$0xff]
      %v399 = vld [vmem:[%s2 + $0x108] sm:$0xff]
      %v400 = vld [vmem:[%s2 + $0x110] sm:$0xff]
      %v401 = vld [vmem:[%s2 + $0x118] sm:$0xff]
      %v402 = vld [vmem:[%s2 + $0x120] sm:$0xff]
      %v403 = vld [vmem:[%s2 + $0x128] sm:$0xff]
      %v404 = vld [vmem:[%s2 + $0x130] sm:$0xff]
      %v405 = vld [vmem:[%s2 + $0x138] sm:$0xff]
      %v406 = vld [vmem:[%s2 + $0x140] sm:$0xff]
      %v407 = vld [vmem:[%s2 + $0x148] sm:$0xff]
      %v408 = vld [vmem:[%s2 + $0x150] sm:$0xff]
      %v409 = vld [vmem:[%s2 + $0x158] sm:$0xff]
      %v410 = vld [vmem:[%s2 + $0x160] sm:$0xff]
      %v411 = vld [vmem:[%s2 + $0x168] sm:$0xff]
      %v412 = vld [vmem:[%s2 + $0x170] sm:$0xff]
      %v413 = vld [vmem:[%s2 + $0x178] sm:$0xff]
      %415 = vset.pattern.permute.xlu0 0
      %416 = vperm.xlu0 %415, %v366
      %v417 = vpop.permute.xlu0 %416
      %420 = vset.pattern.permute.xlu0 0
      %421 = vperm.xlu0 %420, %v367
      %v422 = vpop.permute.xlu0 %421
      %425 = vset.pattern.permute.xlu0 0
      %426 = vperm.xlu0 %425, %v368
      %v427 = vpop.permute.xlu0 %426
      %430 = vset.pattern.permute.xlu0 0
      %431 = vperm.xlu0 %430, %v369
      %v432 = vpop.permute.xlu0 %431
      %435 = vset.pattern.permute.xlu0 0
      %436 = vperm.xlu0 %435, %v370
      %v437 = vpop.permute.xlu0 %436
      %440 = vset.pattern.permute.xlu0 0
      %441 = vperm.xlu0 %440, %v371
      %v442 = vpop.permute.xlu0 %441
      %445 = vset.pattern.permute.xlu0 0
      %446 = vperm.xlu0 %445, %v372
      %v447 = vpop.permute.xlu0 %446
      %450 = vset.pattern.permute.xlu0 0
      %451 = vperm.xlu0 %450, %v373
      %v452 = vpop.permute.xlu0 %451
      %455 = vset.pattern.permute.xlu0 0
      %456 = vperm.xlu0 %455, %v374
      %v457 = vpop.permute.xlu0 %456
      %460 = vset.pattern.permute.xlu0 0
      %461 = vperm.xlu0 %460, %v375
      %v462 = vpop.permute.xlu0 %461
      %465 = vset.pattern.permute.xlu0 0
      %466 = vperm.xlu0 %465, %v376
      %v467 = vpop.permute.xlu0 %466
      %470 = vset.pattern.permute.xlu0 0
      %471 = vperm.xlu0 %470, %v377
      %v472 = vpop.permute.xlu0 %471
      %475 = vset.pattern.permute.xlu0 0
      %476 = vperm.xlu0 %475, %v378
      %v477 = vpop.permute.xlu0 %476
      %480 = vset.pattern.permute.xlu0 0
      %481 = vperm.xlu0 %480, %v379
      %v482 = vpop.permute.xlu0 %481
      %485 = vset.pattern.permute.xlu0 0
      %486 = vperm.xlu0 %485, %v380
      %v487 = vpop.permute.xlu0 %486
      %490 = vset.pattern.permute.xlu0 0
      %491 = vperm.xlu0 %490, %v381
      %v492 = vpop.permute.xlu0 %491
      %495 = vset.pattern.permute.xlu0 0
      %496 = vperm.xlu0 %495, %v382
      %v497 = vpop.permute.xlu0 %496
      %500 = vset.pattern.permute.xlu0 0
      %501 = vperm.xlu0 %500, %v383
      %v502 = vpop.permute.xlu0 %501
      %505 = vset.pattern.permute.xlu0 0
      %506 = vperm.xlu0 %505, %v384
      %v507 = vpop.permute.xlu0 %506
      %510 = vset.pattern.permute.xlu0 0
      %511 = vperm.xlu0 %510, %v385
      %v512 = vpop.permute.xlu0 %511
      %515 = vset.pattern.permute.xlu0 0
      %516 = vperm.xlu0 %515, %v386
      %v517 = vpop.permute.xlu0 %516
      %520 = vset.pattern.permute.xlu0 0
      %521 = vperm.xlu0 %520, %v387
      %v522 = vpop.permute.xlu0 %521
      %525 = vset.pattern.permute.xlu0 0
      %526 = vperm.xlu0 %525, %v388
      %v527 = vpop.permute.xlu0 %526
      %530 = vset.pattern.permute.xlu0 0
      %531 = vperm.xlu0 %530, %v389
      %v532 = vpop.permute.xlu0 %531
      %535 = vset.pattern.permute.xlu0 0
      %536 = vperm.xlu0 %535, %v390
      %v537 = vpop.permute.xlu0 %536
      %540 = vset.pattern.permute.xlu0 0
      %541 = vperm.xlu0 %540, %v391
      %v542 = vpop.permute.xlu0 %541
      %545 = vset.pattern.permute.xlu0 0
      %546 = vperm.xlu0 %545, %v392
      %v547 = vpop.permute.xlu0 %546
      %550 = vset.pattern.permute.xlu0 0
      %551 = vperm.xlu0 %550, %v393
      %v552 = vpop.permute.xlu0 %551
      %555 = vset.pattern.permute.xlu0 0
      %556 = vperm.xlu0 %555, %v394
      %v557 = vpop.permute.xlu0 %556
      %560 = vset.pattern.permute.xlu0 0
      %561 = vperm.xlu0 %560, %v395
      %v562 = vpop.permute.xlu0 %561
      %565 = vset.pattern.permute.xlu0 0
      %566 = vperm.xlu0 %565, %v396
      %v567 = vpop.permute.xlu0 %566
      %570 = vset.pattern.permute.xlu0 0
      %571 = vperm.xlu0 %570, %v397
      %v572 = vpop.permute.xlu0 %571
      %575 = vset.pattern.permute.xlu0 0
      %576 = vperm.xlu0 %575, %v398
      %v577 = vpop.permute.xlu0 %576
      %580 = vset.pattern.permute.xlu0 0
      %581 = vperm.xlu0 %580, %v399
      %v582 = vpop.permute.xlu0 %581
      %585 = vset.pattern.permute.xlu0 0
      %586 = vperm.xlu0 %585, %v400
      %v587 = vpop.permute.xlu0 %586
      %590 = vset.pattern.permute.xlu0 0
      %591 = vperm.xlu0 %590, %v401
      %v592 = vpop.permute.xlu0 %591
      %595 = vset.pattern.permute.xlu0 0
      %596 = vperm.xlu0 %595, %v402
      %v597 = vpop.permute.xlu0 %596
      %600 = vset.pattern.permute.xlu0 0
      %601 = vperm.xlu0 %600, %v403
      %v602 = vpop.permute.xlu0 %601
      %605 = vset.pattern.permute.xlu0 0
      %606 = vperm.xlu0 %605, %v404
      %v607 = vpop.permute.xlu0 %606
      %610 = vset.pattern.permute.xlu0 0
      %611 = vperm.xlu0 %610, %v405
      %v612 = vpop.permute.xlu0 %611
      %615 = vset.pattern.permute.xlu0 0
      %616 = vperm.xlu0 %615, %v406
      %v617 = vpop.permute.xlu0 %616
      %620 = vset.pattern.permute.xlu0 0
      %621 = vperm.xlu0 %620, %v407
      %v622 = vpop.permute.xlu0 %621
      %625 = vset.pattern.permute.xlu0 0
      %626 = vperm.xlu0 %625, %v408
      %v627 = vpop.permute.xlu0 %626
      %630 = vset.pattern.permute.xlu0 0
      %631 = vperm.xlu0 %630, %v409
      %v632 = vpop.permute.xlu0 %631
      %635 = vset.pattern.permute.xlu0 0
      %636 = vperm.xlu0 %635, %v410
      %v637 = vpop.permute.xlu0 %636
      %640 = vset.pattern.permute.xlu0 0
      %641 = vperm.xlu0 %640, %v411
      %v642 = vpop.permute.xlu0 %641
      %645 = vset.pattern.permute.xlu0 0
      %646 = vperm.xlu0 %645, %v412
      %v647 = vpop.permute.xlu0 %646
      %650 = vset.pattern.permute.xlu0 0
      %651 = vperm.xlu0 %650, %v413
      %v652 = vpop.permute.xlu0 %651
      %v702 = vunpack.c.l.b16 %v318
      %v703 = vunpack.c.l.b16 %v319
      %v704 = vunpack.c.l.b16 %v320
      %v705 = vunpack.c.l.b16 %v321
      %v706 = vunpack.c.l.b16 %v322
      %v707 = vunpack.c.l.b16 %v323
      %v708 = vunpack.c.l.b16 %v324
      %v709 = vunpack.c.l.b16 %v325
      %v710 = vunpack.c.l.b16 %v326
      %v711 = vunpack.c.l.b16 %v327
      %v712 = vunpack.c.l.b16 %v328
      %v713 = vunpack.c.l.b16 %v329
      %v714 = vunpack.c.l.b16 %v330
      %v715 = vunpack.c.l.b16 %v331
      %v716 = vunpack.c.l.b16 %v332
      %v717 = vunpack.c.l.b16 %v333
      %v718 = vunpack.c.l.b16 %v334
      %v719 = vunpack.c.l.b16 %v335
      %v720 = vunpack.c.l.b16 %v336
      %v721 = vunpack.c.l.b16 %v337
      %v722 = vunpack.c.l.b16 %v338
      %v723 = vunpack.c.l.b16 %v339
      %v724 = vunpack.c.l.b16 %v340
      %v725 = vunpack.c.l.b16 %v341
      %v726 = vunpack.c.l.b16 %v342
      %v727 = vunpack.c.l.b16 %v343
      %v728 = vunpack.c.l.b16 %v344
      %v729 = vunpack.c.l.b16 %v345
      %v730 = vunpack.c.l.b16 %v346
      %v731 = vunpack.c.l.b16 %v347
      %v732 = vunpack.c.l.b16 %v348
      %v733 = vunpack.c.l.b16 %v349
      %v734 = vunpack.c.l.b16 %v350
      %v735 = vunpack.c.l.b16 %v351
      %v736 = vunpack.c.l.b16 %v352
      %v737 = vunpack.c.l.b16 %v353
      %v738 = vunpack.c.l.b16 %v354
      %v739 = vunpack.c.l.b16 %v355
      %v740 = vunpack.c.l.b16 %v356
      %v741 = vunpack.c.l.b16 %v357
      %v742 = vunpack.c.l.b16 %v358
      %v743 = vunpack.c.l.b16 %v359
      %v744 = vunpack.c.l.b16 %v360
      %v745 = vunpack.c.l.b16 %v361
      %v746 = vunpack.c.l.b16 %v362
      %v747 = vunpack.c.l.b16 %v363
      %v748 = vunpack.c.l.b16 %v364
      %v749 = vunpack.c.l.b16 %v365
      %v750 = vpack.c.b16 %v703, %v702
      %v751 = vpack.c.b16 %v705, %v704
      %v752 = vpack.c.b16 %v707, %v706
      %v753 = vpack.c.b16 %v709, %v708
      %v754 = vpack.c.b16 %v711, %v710
      %v755 = vpack.c.b16 %v713, %v712
      %v756 = vpack.c.b16 %v715, %v714
      %v757 = vpack.c.b16 %v717, %v716
      %v758 = vpack.c.b16 %v719, %v718
      %v759 = vpack.c.b16 %v721, %v720
      %v760 = vpack.c.b16 %v723, %v722
      %v761 = vpack.c.b16 %v725, %v724
      %v762 = vpack.c.b16 %v727, %v726
      %v763 = vpack.c.b16 %v729, %v728
      %v764 = vpack.c.b16 %v731, %v730
      %v765 = vpack.c.b16 %v733, %v732
      %v766 = vpack.c.b16 %v735, %v734
      %v767 = vpack.c.b16 %v737, %v736
      %v768 = vpack.c.b16 %v739, %v738
      %v769 = vpack.c.b16 %v741, %v740
      %v770 = vpack.c.b16 %v743, %v742
      %v771 = vpack.c.b16 %v745, %v744
      %v772 = vpack.c.b16 %v747, %v746
      %v773 = vpack.c.b16 %v749, %v748
      %vm774 = vcmask 130048
      %v776 = vsel %vm774, %v750, 0
      %v779 = vsel %vm774, %v751, 0
      %v782 = vsel %vm774, %v752, 0
      %v785 = vsel %vm774, %v753, 0
      %v788 = vsel %vm774, %v754, 0
      %v791 = vsel %vm774, %v755, 0
      %v794 = vsel %vm774, %v756, 0
      %v797 = vsel %vm774, %v757, 0
      %v800 = vsel %vm774, %v758, 0
      %v803 = vsel %vm774, %v759, 0
      %v806 = vsel %vm774, %v760, 0
      %v809 = vsel %vm774, %v761, 0
      %v812 = vsel %vm774, %v762, 0
      %v815 = vsel %vm774, %v763, 0
      %v818 = vsel %vm774, %v764, 0
      %v821 = vsel %vm774, %v765, 0
      %v824 = vsel %vm774, %v766, 0
      %v827 = vsel %vm774, %v767, 0
      %v830 = vsel %vm774, %v768, 0
      %v833 = vsel %vm774, %v769, 0
      %v836 = vsel %vm774, %v770, 0
      %v839 = vsel %vm774, %v771, 0
      %v842 = vsel %vm774, %v772, 0
      %v845 = vsel %vm774, %v773, 0
      %847 = vmatprep.subr.bf16.mxu0 0
      %848 = vmatpush1.bf16.msra.mxu0 0
      %849 = vmatprep.subr.bf16.mxu0 0
      %850 = vmatpush1.bf16.msra.mxu0 0
      %851 = vmatprep.subr.bf16.mxu0 0
      %852 = vmatpush1.bf16.msra.mxu0 0
      %853 = vmatprep.subr.bf16.mxu0 0
      %854 = vmatpush1.bf16.msra.mxu0 0
      %855 = vmatprep.subr.bf16.mxu0 0
      %856 = vmatpush1.bf16.msra.mxu0 0
      %857 = vmatprep.subr.bf16.mxu0 0
      %858 = vmatpush1.bf16.msra.mxu0 0
      %859 = vmatprep.subr.bf16.mxu0 0
      %860 = vmatpush1.bf16.msra.mxu0 0
      %861 = vmatprep.subr.bf16.mxu0 %v317
      %862 = vmatpush1.bf16.msra.mxu0 %v316
      %863 = vmatprep.subr.bf16.mxu0 0
      %864 = vmatpush2.bf16.msra.mxu0 0
      %865 = vmatprep.subr.bf16.mxu0 0
      %866 = vmatpush2.bf16.msra.mxu0 0
      %867 = vmatprep.subr.bf16.mxu0 0
      %868 = vmatpush2.bf16.msra.mxu0 0
      %869 = vmatprep.subr.bf16.mxu0 0
      %870 = vmatpush2.bf16.msra.mxu0 0
      %871 = vmatprep.subr.bf16.mxu0 0
      %872 = vmatpush2.bf16.msra.mxu0 0
      %873 = vmatprep.subr.bf16.mxu0 0
      %874 = vmatpush2.bf16.msra.mxu0 0
      %875 = vmatprep.subr.bf16.mxu0 0
      %876 = vmatpush2.bf16.msra.mxu0 0
      %877 = vmatprep.subr.bf16.mxu0 0
      %878 = vmatpush2.bf16.msra.mxu0 0
      %879 = vmatprep.mubr.bf16.mxu0 0
      %880 = vmatmul.mubr.bf16.gmra.mxu0 %v776
      %v881 = vpop.f32.mrf.mxu0
      %v882 = vadd.f32 %v417, %v881
      %v883 = vpop.f32.mrf.mxu0
      %v884 = vadd.f32 %v417, %v883
      %v885 = vpop.f32.mrf.mxu0
      %v886 = vadd.f32 %v422, %v885
      %v887 = vpop.f32.mrf.mxu0
      %v888 = vadd.f32 %v422, %v887
      %889 = vmatprep.mubr.bf16.mxu0 0
      %890 = vmatmul.mubr.bf16.gmra.mxu0 %v779
      %v891 = vpop.f32.mrf.mxu0
      %v892 = vadd.f32 %v427, %v891
      %v893 = vpop.f32.mrf.mxu0
      %v894 = vadd.f32 %v427, %v893
      %v895 = vpop.f32.mrf.mxu0
      %v896 = vadd.f32 %v432, %v895
      %v897 = vpop.f32.mrf.mxu0
      %v898 = vadd.f32 %v432, %v897
      %899 = vmatprep.mubr.bf16.mxu0 0
      %900 = vmatmul.mubr.bf16.gmra.mxu0 %v782
      %v901 = vpop.f32.mrf.mxu0
      %v902 = vadd.f32 %v437, %v901
      %v903 = vpop.f32.mrf.mxu0
      %v904 = vadd.f32 %v437, %v903
      %v905 = vpop.f32.mrf.mxu0
      %v906 = vadd.f32 %v442, %v905
      %v907 = vpop.f32.mrf.mxu0
      %v908 = vadd.f32 %v442, %v907
      %909 = vmatprep.mubr.bf16.mxu0 0
      %910 = vmatmul.mubr.bf16.gmra.mxu0 %v785
      %v911 = vpop.f32.mrf.mxu0
      %v912 = vadd.f32 %v447, %v911
      %v913 = vpop.f32.mrf.mxu0
      %v914 = vadd.f32 %v447, %v913
      %v915 = vpop.f32.mrf.mxu0
      %v916 = vadd.f32 %v452, %v915
      %v917 = vpop.f32.mrf.mxu0
      %v918 = vadd.f32 %v452, %v917
      %919 = vmatprep.mubr.bf16.mxu0 0
      %920 = vmatmul.mubr.bf16.gmra.mxu0 %v788
      %v921 = vpop.f32.mrf.mxu0
      %v922 = vadd.f32 %v457, %v921
      %v923 = vpop.f32.mrf.mxu0
      %v924 = vadd.f32 %v457, %v923
      %v925 = vpop.f32.mrf.mxu0
      %v926 = vadd.f32 %v462, %v925
      %v927 = vpop.f32.mrf.mxu0
      %v928 = vadd.f32 %v462, %v927
      %929 = vmatprep.mubr.bf16.mxu0 0
      %930 = vmatmul.mubr.bf16.gmra.mxu0 %v791
      %v931 = vpop.f32.mrf.mxu0
      %v932 = vadd.f32 %v467, %v931
      %v933 = vpop.f32.mrf.mxu0
      %v934 = vadd.f32 %v467, %v933
      %v935 = vpop.f32.mrf.mxu0
      %v936 = vadd.f32 %v472, %v935
      %v937 = vpop.f32.mrf.mxu0
      %v938 = vadd.f32 %v472, %v937
      %939 = vmatprep.mubr.bf16.mxu0 0
      %940 = vmatmul.mubr.bf16.gmra.mxu0 %v794
      %v941 = vpop.f32.mrf.mxu0
      %v942 = vadd.f32 %v477, %v941
      %v943 = vpop.f32.mrf.mxu0
      %v944 = vadd.f32 %v477, %v943
      %v945 = vpop.f32.mrf.mxu0
      %v946 = vadd.f32 %v482, %v945
      %v947 = vpop.f32.mrf.mxu0
      %v948 = vadd.f32 %v482, %v947
      %949 = vmatprep.mubr.bf16.mxu0 0
      %950 = vmatmul.mubr.bf16.gmra.mxu0 %v797
      %v951 = vpop.f32.mrf.mxu0
      %v952 = vadd.f32 %v487, %v951
      %v953 = vpop.f32.mrf.mxu0
      %v954 = vadd.f32 %v487, %v953
      %v955 = vpop.f32.mrf.mxu0
      %v956 = vadd.f32 %v492, %v955
      %v957 = vpop.f32.mrf.mxu0
      %v958 = vadd.f32 %v492, %v957
      %959 = vmatprep.mubr.bf16.mxu0 0
      %960 = vmatmul.mubr.bf16.gmra.mxu0 %v800
      %v961 = vpop.f32.mrf.mxu0
      %v962 = vadd.f32 %v497, %v961
      %v963 = vpop.f32.mrf.mxu0
      %v964 = vadd.f32 %v497, %v963
      %v965 = vpop.f32.mrf.mxu0
      %v966 = vadd.f32 %v502, %v965
      %v967 = vpop.f32.mrf.mxu0
      %v968 = vadd.f32 %v502, %v967
      %969 = vmatprep.mubr.bf16.mxu0 0
      %970 = vmatmul.mubr.bf16.gmra.mxu0 %v803
      %v971 = vpop.f32.mrf.mxu0
      %v972 = vadd.f32 %v507, %v971
      %v973 = vpop.f32.mrf.mxu0
      %v974 = vadd.f32 %v507, %v973
      %v975 = vpop.f32.mrf.mxu0
      %v976 = vadd.f32 %v512, %v975
      %v977 = vpop.f32.mrf.mxu0
      %v978 = vadd.f32 %v512, %v977
      %979 = vmatprep.mubr.bf16.mxu0 0
      %980 = vmatmul.mubr.bf16.gmra.mxu0 %v806
      %v981 = vpop.f32.mrf.mxu0
      %v982 = vadd.f32 %v517, %v981
      %v983 = vpop.f32.mrf.mxu0
      %v984 = vadd.f32 %v517, %v983
      %v985 = vpop.f32.mrf.mxu0
      %v986 = vadd.f32 %v522, %v985
      %v987 = vpop.f32.mrf.mxu0
      %v988 = vadd.f32 %v522, %v987
      %989 = vmatprep.mubr.bf16.mxu0 0
      %990 = vmatmul.mubr.bf16.gmra.mxu0 %v809
      %v991 = vpop.f32.mrf.mxu0
      %v992 = vadd.f32 %v527, %v991
      %v993 = vpop.f32.mrf.mxu0
      %v994 = vadd.f32 %v527, %v993
      %v995 = vpop.f32.mrf.mxu0
      %v996 = vadd.f32 %v532, %v995
      %v997 = vpop.f32.mrf.mxu0
      %v998 = vadd.f32 %v532, %v997
      %999 = vmatprep.mubr.bf16.mxu0 0
      %1000 = vmatmul.mubr.bf16.gmra.mxu0 %v812
      %v1001 = vpop.f32.mrf.mxu0
      %v1002 = vadd.f32 %v537, %v1001
      %v1003 = vpop.f32.mrf.mxu0
      %v1004 = vadd.f32 %v537, %v1003
      %v1005 = vpop.f32.mrf.mxu0
      %v1006 = vadd.f32 %v542, %v1005
      %v1007 = vpop.f32.mrf.mxu0
      %v1008 = vadd.f32 %v542, %v1007
      %1009 = vmatprep.mubr.bf16.mxu0 0
      %1010 = vmatmul.mubr.bf16.gmra.mxu0 %v815
      %v1011 = vpop.f32.mrf.mxu0
      %v1012 = vadd.f32 %v547, %v1011
      %v1013 = vpop.f32.mrf.mxu0
      %v1014 = vadd.f32 %v547, %v1013
      %v1015 = vpop.f32.mrf.mxu0
      %v1016 = vadd.f32 %v552, %v1015
      %v1017 = vpop.f32.mrf.mxu0
      %v1018 = vadd.f32 %v552, %v1017
      %1019 = vmatprep.mubr.bf16.mxu0 0
      %1020 = vmatmul.mubr.bf16.gmra.mxu0 %v818
      %v1021 = vpop.f32.mrf.mxu0
      %v1022 = vadd.f32 %v557, %v1021
      %v1023 = vpop.f32.mrf.mxu0
      %v1024 = vadd.f32 %v557, %v1023
      %v1025 = vpop.f32.mrf.mxu0
      %v1026 = vadd.f32 %v562, %v1025
      %v1027 = vpop.f32.mrf.mxu0
      %v1028 = vadd.f32 %v562, %v1027
      %1029 = vmatprep.mubr.bf16.mxu0 0
      %1030 = vmatmul.mubr.bf16.gmra.mxu0 %v821
      %v1031 = vpop.f32.mrf.mxu0
      %v1032 = vadd.f32 %v567, %v1031
      %v1033 = vpop.f32.mrf.mxu0
      %v1034 = vadd.f32 %v567, %v1033
      %v1035 = vpop.f32.mrf.mxu0
      %v1036 = vadd.f32 %v572, %v1035
      %v1037 = vpop.f32.mrf.mxu0
      %v1038 = vadd.f32 %v572, %v1037
      %1039 = vmatprep.mubr.bf16.mxu0 0
      %1040 = vmatmul.mubr.bf16.gmra.mxu0 %v824
      %v1041 = vpop.f32.mrf.mxu0
      %v1042 = vadd.f32 %v577, %v1041
      %v1043 = vpop.f32.mrf.mxu0
      %v1044 = vadd.f32 %v577, %v1043
      %v1045 = vpop.f32.mrf.mxu0
      %v1046 = vadd.f32 %v582, %v1045
      %v1047 = vpop.f32.mrf.mxu0
      %v1048 = vadd.f32 %v582, %v1047
      %1049 = vmatprep.mubr.bf16.mxu0 0
      %1050 = vmatmul.mubr.bf16.gmra.mxu0 %v827
      %v1051 = vpop.f32.mrf.mxu0
      %v1052 = vadd.f32 %v587, %v1051
      %v1053 = vpop.f32.mrf.mxu0
      %v1054 = vadd.f32 %v587, %v1053
      %v1055 = vpop.f32.mrf.mxu0
      %v1056 = vadd.f32 %v592, %v1055
      %v1057 = vpop.f32.mrf.mxu0
      %v1058 = vadd.f32 %v592, %v1057
      %1059 = vmatprep.mubr.bf16.mxu0 0
      %1060 = vmatmul.mubr.bf16.gmra.mxu0 %v830
      %v1061 = vpop.f32.mrf.mxu0
      %v1062 = vadd.f32 %v597, %v1061
      %v1063 = vpop.f32.mrf.mxu0
      %v1064 = vadd.f32 %v597, %v1063
      %v1065 = vpop.f32.mrf.mxu0
      %v1066 = vadd.f32 %v602, %v1065
      %v1067 = vpop.f32.mrf.mxu0
      %v1068 = vadd.f32 %v602, %v1067
      %1069 = vmatprep.mubr.bf16.mxu0 0
      %1070 = vmatmul.mubr.bf16.gmra.mxu0 %v833
      %v1071 = vpop.f32.mrf.mxu0
      %v1072 = vadd.f32 %v607, %v1071
      %v1073 = vpop.f32.mrf.mxu0
      %v1074 = vadd.f32 %v607, %v1073
      %v1075 = vpop.f32.mrf.mxu0
      %v1076 = vadd.f32 %v612, %v1075
      %v1077 = vpop.f32.mrf.mxu0
      %v1078 = vadd.f32 %v612, %v1077
      %1079 = vmatprep.mubr.bf16.mxu0 0
      %1080 = vmatmul.mubr.bf16.gmra.mxu0 %v836
      %v1081 = vpop.f32.mrf.mxu0
      %v1082 = vadd.f32 %v617, %v1081
      %v1083 = vpop.f32.mrf.mxu0
      %v1084 = vadd.f32 %v617, %v1083
      %v1085 = vpop.f32.mrf.mxu0
      %v1086 = vadd.f32 %v622, %v1085
      %v1087 = vpop.f32.mrf.mxu0
      %v1088 = vadd.f32 %v622, %v1087
      %1089 = vmatprep.mubr.bf16.mxu0 0
      %1090 = vmatmul.mubr.bf16.gmra.mxu0 %v839
      %v1091 = vpop.f32.mrf.mxu0
      %v1092 = vadd.f32 %v627, %v1091
      %v1093 = vpop.f32.mrf.mxu0
      %v1094 = vadd.f32 %v627, %v1093
      %v1095 = vpop.f32.mrf.mxu0
      %v1096 = vadd.f32 %v632, %v1095
      %v1097 = vpop.f32.mrf.mxu0
      %v1098 = vadd.f32 %v632, %v1097
      %1099 = vmatprep.mubr.bf16.mxu0 0
      %1100 = vmatmul.mubr.bf16.gmra.mxu0 %v842
      %v1101 = vpop.f32.mrf.mxu0
      %v1102 = vadd.f32 %v637, %v1101
      %v1103 = vpop.f32.mrf.mxu0
      %v1104 = vadd.f32 %v637, %v1103
      %v1105 = vpop.f32.mrf.mxu0
      %v1106 = vadd.f32 %v642, %v1105
      %v1107 = vpop.f32.mrf.mxu0
      %v1108 = vadd.f32 %v642, %v1107
      %1109 = vmatprep.mubr.bf16.mxu0 0
      %1110 = vmatmul.mubr.bf16.gmra.mxu0 %v845
      %v1111 = vpop.f32.mrf.mxu0
      %v1112 = vadd.f32 %v647, %v1111
      %v1113 = vpop.f32.mrf.mxu0
      %v1114 = vadd.f32 %v647, %v1113
      %v1115 = vpop.f32.mrf.mxu0
      %v1116 = vadd.f32 %v652, %v1115
      %v1117 = vpop.f32.mrf.mxu0
      %v1118 = vadd.f32 %v652, %v1117
      %1119 = vdwg.mxu0
      %v1120 = vpack.c.bf16 %v886, %v882
      %v1121 = vpack.c.bf16 %v888, %v884
      %v1122 = vpack.c.bf16 %v896, %v892
      %v1123 = vpack.c.bf16 %v898, %v894
      %v1124 = vpack.c.bf16 %v906, %v902
      %v1125 = vpack.c.bf16 %v908, %v904
      %v1126 = vpack.c.bf16 %v916, %v912
      %v1127 = vpack.c.bf16 %v918, %v914
      %v1128 = vpack.c.bf16 %v926, %v922
      %v1129 = vpack.c.bf16 %v928, %v924
      %v1130 = vpack.c.bf16 %v936, %v932
      %v1131 = vpack.c.bf16 %v938, %v934
      %v1132 = vpack.c.bf16 %v946, %v942
      %v1133 = vpack.c.bf16 %v948, %v944
      %v1134 = vpack.c.bf16 %v956, %v952
      %v1135 = vpack.c.bf16 %v958, %v954
      %1136 = vxpose.xlu0.c.b16.start [1/8] %v1120, 128
      %1137 = vxpose.xlu0.c.b16.cont [2/8] %v1122, 128
      %1138 = vxpose.xlu0.c.b16.cont [3/8] %v1124, 128
      %1139 = vxpose.xlu0.c.b16.cont [4/8] %v1126, 128
      %1140 = vxpose.xlu0.c.b16.cont [5/8] %v1128, 128
      %1141 = vxpose.xlu0.c.b16.cont [6/8] %v1130, 128
      %1142 = vxpose.xlu0.c.b16.cont [7/8] %v1132, 128
      %1143 = vxpose.xlu0.c.b16.end [8/8] %v1134, 128
      %v1144 = vpop.trf.xlu0
      %v1145 = vpop.trf.xlu0
      %v1146 = vpop.trf.xlu0
      %v1147 = vpop.trf.xlu0
      %v1148 = vpop.trf.xlu0
      %v1149 = vpop.trf.xlu0
      %v1150 = vpop.trf.xlu0
      %v1151 = vpop.trf.xlu0
      %1152 = vxpose.xlu0.c.b16.start [1/8] %v1121, 128
      %1153 = vxpose.xlu0.c.b16.cont [2/8] %v1123, 128
      %1154 = vxpose.xlu0.c.b16.cont [3/8] %v1125, 128
      %1155 = vxpose.xlu0.c.b16.cont [4/8] %v1127, 128
      %1156 = vxpose.xlu0.c.b16.cont [5/8] %v1129, 128
      %1157 = vxpose.xlu0.c.b16.cont [6/8] %v1131, 128
      %1158 = vxpose.xlu0.c.b16.cont [7/8] %v1133, 128
      %1159 = vxpose.xlu0.c.b16.end [8/8] %v1135, 128
      %v1160 = vpop.trf.xlu0
      %v1161 = vpop.trf.xlu0
      %v1162 = vpop.trf.xlu0
      %v1163 = vpop.trf.xlu0
      %v1164 = vpop.trf.xlu0
      %v1165 = vpop.trf.xlu0
      %v1166 = vpop.trf.xlu0
      %v1167 = vpop.trf.xlu0
      %v1184 = vunpack.c.l.b16 %v1144
      %v1185 = vunpack.c.h.b16 %v1144
      %v1186 = vunpack.c.l.b16 %v1145
      %v1187 = vunpack.c.h.b16 %v1145
      %v1188 = vunpack.c.l.b16 %v1146
      %v1189 = vunpack.c.h.b16 %v1146
      %v1190 = vunpack.c.l.b16 %v1147
      %v1191 = vunpack.c.h.b16 %v1147
      %v1192 = vunpack.c.l.b16 %v1148
      %v1193 = vunpack.c.h.b16 %v1148
      %v1194 = vunpack.c.l.b16 %v1149
      %v1195 = vunpack.c.h.b16 %v1149
      %v1196 = vunpack.c.l.b16 %v1150
      %v1197 = vunpack.c.h.b16 %v1150
      %v1198 = vunpack.c.l.b16 %v1151
      %v1199 = vunpack.c.h.b16 %v1151
      %v1200 = vunpack.c.l.b16 %v1160
      %v1201 = vunpack.c.h.b16 %v1160
      %v1202 = vunpack.c.l.b16 %v1161
      %v1203 = vunpack.c.h.b16 %v1161
      %v1204 = vunpack.c.l.b16 %v1162
      %v1205 = vunpack.c.h.b16 %v1162
      %v1206 = vunpack.c.l.b16 %v1163
      %v1207 = vunpack.c.h.b16 %v1163
      %v1208 = vunpack.c.l.b16 %v1164
      %v1209 = vunpack.c.h.b16 %v1164
      %v1210 = vunpack.c.l.b16 %v1165
      %v1211 = vunpack.c.h.b16 %v1165
      %v1212 = vunpack.c.l.b16 %v1166
      %v1213 = vunpack.c.h.b16 %v1166
      %v1214 = vunpack.c.l.b16 %v1167
      %v1215 = vunpack.c.h.b16 %v1167
      %v1216 = vpack.c.b16 %v1184, %v1184
      %v1217 = vpack.c.b16 %v1185, %v1185
      %v1218 = vpack.c.b16 %v1186, %v1186
      %v1219 = vpack.c.b16 %v1187, %v1187
      %v1220 = vpack.c.b16 %v1188, %v1188
      %v1221 = vpack.c.b16 %v1189, %v1189
      %v1222 = vpack.c.b16 %v1190, %v1190
      %v1223 = vpack.c.b16 %v1191, %v1191
      %v1224 = vpack.c.b16 %v1192, %v1192
      %v1225 = vpack.c.b16 %v1193, %v1193
      %v1226 = vpack.c.b16 %v1194, %v1194
      %v1227 = vpack.c.b16 %v1195, %v1195
      %v1228 = vpack.c.b16 %v1196, %v1196
      %v1229 = vpack.c.b16 %v1197, %v1197
      %v1230 = vpack.c.b16 %v1198, %v1198
      %v1231 = vpack.c.b16 %v1199, %v1199
      %v1232 = vpack.c.b16 %v1200, %v1200
      %v1233 = vpack.c.b16 %v1201, %v1201
      %v1234 = vpack.c.b16 %v1202, %v1202
      %v1235 = vpack.c.b16 %v1203, %v1203
      %v1236 = vpack.c.b16 %v1204, %v1204
      %v1237 = vpack.c.b16 %v1205, %v1205
      %v1238 = vpack.c.b16 %v1206, %v1206
      %v1239 = vpack.c.b16 %v1207, %v1207
      %v1240 = vpack.c.b16 %v1208, %v1208
      %v1241 = vpack.c.b16 %v1209, %v1209
      %v1242 = vpack.c.b16 %v1210, %v1210
      %v1243 = vpack.c.b16 %v1211, %v1211
      %v1244 = vpack.c.b16 %v1212, %v1212
      %v1245 = vpack.c.b16 %v1213, %v1213
      %v1246 = vpack.c.b16 %v1214, %v1214
      %v1247 = vpack.c.b16 %v1215, %v1215
      %1280 = vst [vmem:[%s289] sm:$0xf] %v1216
      %1281 = vst [vmem:[%s289 + $0x4] sm:$0xf] %v1217
      %1282 = vst [vmem:[%s289 + $0x8] sm:$0xf] %v1218
      %1283 = vst [vmem:[%s289 + $0xc] sm:$0xf] %v1219
      %1284 = vst [vmem:[%s289 + $0x10] sm:$0xf] %v1220
      %1285 = vst [vmem:[%s289 + $0x14] sm:$0xf] %v1221
      %1286 = vst [vmem:[%s289 + $0x18] sm:$0xf] %v1222
      %1287 = vst [vmem:[%s289 + $0x1c] sm:$0xf] %v1223
      %1288 = vst [vmem:[%s289 + $0x20] sm:$0xf] %v1224
      %1289 = vst [vmem:[%s289 + $0x24] sm:$0xf] %v1225
      %1290 = vst [vmem:[%s289 + $0x28] sm:$0xf] %v1226
      %1291 = vst [vmem:[%s289 + $0x2c] sm:$0xf] %v1227
      %1292 = vst [vmem:[%s289 + $0x30] sm:$0xf] %v1228
      %1293 = vst [vmem:[%s289 + $0x34] sm:$0xf] %v1229
      %1294 = vst [vmem:[%s289 + $0x38] sm:$0xf] %v1230
      %1295 = vst [vmem:[%s289 + $0x3c] sm:$0xf] %v1231
      %1296 = vst [vmem:[%s289 + $0x40] sm:$0xf] %v1232
      %1297 = vst [vmem:[%s289 + $0x44] sm:$0xf] %v1233
      %1298 = vst [vmem:[%s289 + $0x48] sm:$0xf] %v1234
      %1299 = vst [vmem:[%s289 + $0x4c] sm:$0xf] %v1235
      %1300 = vst [vmem:[%s289 + $0x50] sm:$0xf] %v1236
      %1301 = vst [vmem:[%s289 + $0x54] sm:$0xf] %v1237
      %1302 = vst [vmem:[%s289 + $0x58] sm:$0xf] %v1238
      %1303 = vst [vmem:[%s289 + $0x5c] sm:$0xf] %v1239
      %1304 = vst [vmem:[%s289 + $0x60] sm:$0xf] %v1240
      %1305 = vst [vmem:[%s289 + $0x64] sm:$0xf] %v1241
      %1306 = vst [vmem:[%s289 + $0x68] sm:$0xf] %v1242
      %1307 = vst [vmem:[%s289 + $0x6c] sm:$0xf] %v1243
      %1308 = vst [vmem:[%s289 + $0x70] sm:$0xf] %v1244
      %1309 = vst [vmem:[%s289 + $0x74] sm:$0xf] %v1245
      %1310 = vst [vmem:[%s289 + $0x78] sm:$0xf] %v1246
      %1311 = vst [vmem:[%s289 + $0x7c] sm:$0xf] %v1247
      %v1312 = vpack.c.bf16 %v966, %v962
      %v1313 = vpack.c.bf16 %v968, %v964
      %v1314 = vpack.c.bf16 %v976, %v972
      %v1315 = vpack.c.bf16 %v978, %v974
      %v1316 = vpack.c.bf16 %v986, %v982
      %v1317 = vpack.c.bf16 %v988, %v984
      %v1318 = vpack.c.bf16 %v996, %v992
      %v1319 = vpack.c.bf16 %v998, %v994
      %v1320 = vpack.c.bf16 %v1006, %v1002
      %v1321 = vpack.c.bf16 %v1008, %v1004
      %v1322 = vpack.c.bf16 %v1016, %v1012
      %v1323 = vpack.c.bf16 %v1018, %v1014
      %v1324 = vpack.c.bf16 %v1026, %v1022
      %v1325 = vpack.c.bf16 %v1028, %v1024
      %v1326 = vpack.c.bf16 %v1036, %v1032
      %v1327 = vpack.c.bf16 %v1038, %v1034
      %v1344 = vunpack.c.l.b16 %v1312
      %v1345 = vunpack.c.l.b16 %v1313
      %v1346 = vunpack.c.h.b16 %v1312
      %v1347 = vunpack.c.h.b16 %v1313
      %v1348 = vunpack.c.l.b16 %v1314
      %v1349 = vunpack.c.l.b16 %v1315
      %v1350 = vunpack.c.h.b16 %v1314
      %v1351 = vunpack.c.h.b16 %v1315
      %v1352 = vunpack.c.l.b16 %v1316
      %v1353 = vunpack.c.l.b16 %v1317
      %v1354 = vunpack.c.h.b16 %v1316
      %v1355 = vunpack.c.h.b16 %v1317
      %v1356 = vunpack.c.l.b16 %v1318
      %v1357 = vunpack.c.l.b16 %v1319
      %v1358 = vunpack.c.h.b16 %v1318
      %v1359 = vunpack.c.h.b16 %v1319
      %v1360 = vunpack.c.l.b16 %v1320
      %v1361 = vunpack.c.l.b16 %v1321
      %v1362 = vunpack.c.h.b16 %v1320
      %v1363 = vunpack.c.h.b16 %v1321
      %v1364 = vunpack.c.l.b16 %v1322
      %v1365 = vunpack.c.l.b16 %v1323
      %v1366 = vunpack.c.h.b16 %v1322
      %v1367 = vunpack.c.h.b16 %v1323
      %v1368 = vunpack.c.l.b16 %v1324
      %v1369 = vunpack.c.l.b16 %v1325
      %v1370 = vunpack.c.h.b16 %v1324
      %v1371 = vunpack.c.h.b16 %v1325
      %v1372 = vunpack.c.l.b16 %v1326
      %v1373 = vunpack.c.l.b16 %v1327
      %v1374 = vunpack.c.h.b16 %v1326
      %v1375 = vunpack.c.h.b16 %v1327
      %v1376 = vpack.c.b16 %v1345, %v1344
      %v1377 = vpack.c.b16 %v1347, %v1346
      %v1378 = vpack.c.b16 %v1349, %v1348
      %v1379 = vpack.c.b16 %v1351, %v1350
      %v1380 = vpack.c.b16 %v1353, %v1352
      %v1381 = vpack.c.b16 %v1355, %v1354
      %v1382 = vpack.c.b16 %v1357, %v1356
      %v1383 = vpack.c.b16 %v1359, %v1358
      %v1384 = vpack.c.b16 %v1361, %v1360
      %v1385 = vpack.c.b16 %v1363, %v1362
      %v1386 = vpack.c.b16 %v1365, %v1364
      %v1387 = vpack.c.b16 %v1367, %v1366
      %v1388 = vpack.c.b16 %v1369, %v1368
      %v1389 = vpack.c.b16 %v1371, %v1370
      %v1390 = vpack.c.b16 %v1373, %v1372
      %v1391 = vpack.c.b16 %v1375, %v1374
      %1408 = vst [vmem:[%s299] sm:$0xff] %v1376
      %1409 = vst [vmem:[%s299 + $0x8] sm:$0xff] %v1377
      %1410 = vst [vmem:[%s299 + $0x10] sm:$0xff] %v1378
      %1411 = vst [vmem:[%s299 + $0x18] sm:$0xff] %v1379
      %1412 = vst [vmem:[%s299 + $0x20] sm:$0xff] %v1380
      %1413 = vst [vmem:[%s299 + $0x28] sm:$0xff] %v1381
      %1414 = vst [vmem:[%s299 + $0x30] sm:$0xff] %v1382
      %1415 = vst [vmem:[%s299 + $0x38] sm:$0xff] %v1383
      %1416 = vst [vmem:[%s299 + $0x40] sm:$0xff] %v1384
      %1417 = vst [vmem:[%s299 + $0x48] sm:$0xff] %v1385
      %1418 = vst [vmem:[%s299 + $0x50] sm:$0xff] %v1386
      %1419 = vst [vmem:[%s299 + $0x58] sm:$0xff] %v1387
      %1420 = vst [vmem:[%s299 + $0x60] sm:$0xff] %v1388
      %1421 = vst [vmem:[%s299 + $0x68] sm:$0xff] %v1389
      %1422 = vst [vmem:[%s299 + $0x70] sm:$0xff] %v1390
      %1423 = vst [vmem:[%s299 + $0x78] sm:$0xff] %v1391
      %v1424 = vpack.c.bf16 %v1046, %v1042
      %v1425 = vpack.c.bf16 %v1048, %v1044
      %v1426 = vpack.c.bf16 %v1056, %v1052
      %v1427 = vpack.c.bf16 %v1058, %v1054
      %v1428 = vpack.c.bf16 %v1066, %v1062
      %v1429 = vpack.c.bf16 %v1068, %v1064
      %v1430 = vpack.c.bf16 %v1076, %v1072
      %v1431 = vpack.c.bf16 %v1078, %v1074
      %v1432 = vpack.c.bf16 %v1086, %v1082
      %v1433 = vpack.c.bf16 %v1088, %v1084
      %v1434 = vpack.c.bf16 %v1096, %v1092
      %v1435 = vpack.c.bf16 %v1098, %v1094
      %v1436 = vpack.c.bf16 %v1106, %v1102
      %v1437 = vpack.c.bf16 %v1108, %v1104
      %v1438 = vpack.c.bf16 %v1116, %v1112
      %v1439 = vpack.c.bf16 %v1118, %v1114
      %v1456 = vunpack.c.l.b16 %v1424
      %v1457 = vunpack.c.l.b16 %v1425
      %v1458 = vunpack.c.h.b16 %v1424
      %v1459 = vunpack.c.h.b16 %v1425
      %v1460 = vunpack.c.l.b16 %v1426
      %v1461 = vunpack.c.l.b16 %v1427
      %v1462 = vunpack.c.h.b16 %v1426
      %v1463 = vunpack.c.h.b16 %v1427
      %v1464 = vunpack.c.l.b16 %v1428
      %v1465 = vunpack.c.l.b16 %v1429
      %v1466 = vunpack.c.h.b16 %v1428
      %v1467 = vunpack.c.h.b16 %v1429
      %v1468 = vunpack.c.l.b16 %v1430
      %v1469 = vunpack.c.l.b16 %v1431
      %v1470 = vunpack.c.h.b16 %v1430
      %v1471 = vunpack.c.h.b16 %v1431
      %v1472 = vunpack.c.l.b16 %v1432
      %v1473 = vunpack.c.l.b16 %v1433
      %v1474 = vunpack.c.h.b16 %v1432
      %v1475 = vunpack.c.h.b16 %v1433
      %v1476 = vunpack.c.l.b16 %v1434
      %v1477 = vunpack.c.l.b16 %v1435
      %v1478 = vunpack.c.h.b16 %v1434
      %v1479 = vunpack.c.h.b16 %v1435
      %v1480 = vunpack.c.l.b16 %v1436
      %v1481 = vunpack.c.l.b16 %v1437
      %v1482 = vunpack.c.h.b16 %v1436
      %v1483 = vunpack.c.h.b16 %v1437
      %v1484 = vunpack.c.l.b16 %v1438
      %v1485 = vunpack.c.l.b16 %v1439
      %v1486 = vunpack.c.h.b16 %v1438
      %v1487 = vunpack.c.h.b16 %v1439
      %v1488 = vpack.c.b16 %v1457, %v1456
      %v1489 = vpack.c.b16 %v1459, %v1458
      %v1490 = vpack.c.b16 %v1461, %v1460
      %v1491 = vpack.c.b16 %v1463, %v1462
      %v1492 = vpack.c.b16 %v1465, %v1464
      %v1493 = vpack.c.b16 %v1467, %v1466
      %v1494 = vpack.c.b16 %v1469, %v1468
      %v1495 = vpack.c.b16 %v1471, %v1470
      %v1496 = vpack.c.b16 %v1473, %v1472
      %v1497 = vpack.c.b16 %v1475, %v1474
      %v1498 = vpack.c.b16 %v1477, %v1476
      %v1499 = vpack.c.b16 %v1479, %v1478
      %v1500 = vpack.c.b16 %v1481, %v1480
      %v1501 = vpack.c.b16 %v1483, %v1482
      %v1502 = vpack.c.b16 %v1485, %v1484
      %v1503 = vpack.c.b16 %v1487, %v1486
      %1520 = vst [vmem:[%s309] sm:$0xff] %v1488
      %1521 = vst [vmem:[%s309 + $0x8] sm:$0xff] %v1489
      %1522 = vst [vmem:[%s309 + $0x10] sm:$0xff] %v1490
      %1523 = vst [vmem:[%s309 + $0x18] sm:$0xff] %v1491
      %1524 = vst [vmem:[%s309 + $0x20] sm:$0xff] %v1492
      %1525 = vst [vmem:[%s309 + $0x28] sm:$0xff] %v1493
      %1526 = vst [vmem:[%s309 + $0x30] sm:$0xff] %v1494
      %1527 = vst [vmem:[%s309 + $0x38] sm:$0xff] %v1495
      %1528 = vst [vmem:[%s309 + $0x40] sm:$0xff] %v1496
      %1529 = vst [vmem:[%s309 + $0x48] sm:$0xff] %v1497
      %1530 = vst [vmem:[%s309 + $0x50] sm:$0xff] %v1498
      %1531 = vst [vmem:[%s309 + $0x58] sm:$0xff] %v1499
      %1532 = vst [vmem:[%s309 + $0x60] sm:$0xff] %v1500
      %1533 = vst [vmem:[%s309 + $0x68] sm:$0xff] %v1501
      %1534 = vst [vmem:[%s309 + $0x70] sm:$0xff] %v1502
      %1535 = vst [vmem:[%s309 + $0x78] sm:$0xff] %v1503
      %s1536 = smul.u32 32, %s22
      %p1537 = scmp.lt.s32.totalorder %s21, 1
      %s1538 = scalar_select %p1537, %s21, 1
      %p1539 = scmp.lt.s32.totalorder %s1536, 31
      %s1540 = scalar_select %p1539, %s1536, 31
      %s1541 = smul.addr %s1538, 32
      %s1542 = sadd.s32 %s1540, %s1541
      %s1543 = smul.addr %s1542, 4
      %s1544 = scalar_lea.vmem %s3, %s1543
      %s1545 = smul.u32 2, %s22
      %p1546 = scmp.lt.s32.totalorder %s21, 1
      %s1547 = scalar_select %p1546, %s21, 1
      %p1548 = scmp.lt.s32.totalorder %s1545, 1
      %s1549 = scalar_select %p1548, %s1545, 1
      %s1550 = smul.addr %s1547, 32
      %s1551 = sadd.s32 %s1549, %s1550
      %s1552 = smul.addr %s1551, 4
      %s1553 = scalar_lea.vmem %s4, %s1552
      %s1554 = smul.u32 2, %s22
      %p1555 = scmp.lt.s32.totalorder %s21, 1
      %s1556 = scalar_select %p1555, %s21, 1
      %p1557 = scmp.lt.s32.totalorder %s1554, 1
      %s1558 = scalar_select %p1557, %s1554, 1
      %s1559 = smul.addr %s1556, 32
      %s1560 = sadd.s32 %s1558, %s1559
      %s1561 = smul.addr %s1560, 4
      %s1562 = scalar_lea.vmem %s5, %s1561
      // Predicated region
      $region33: #{nonlocal_block.2} parent=31 // pred_check
        %p1563 = pneg %p119
      $region34: #{nonlocal_block.2} parent=31 // pred_check_branch
        %1565 = sbr.rel (%p1563) target = $region36
      $region35: #{nonlocal_block.2} parent=31 // pred_region
        %s1566 = smul.u32 32, %s22
      $region36: #{nonlocal_block.2} parent=31 // pred_fallthru
        _
      // Predicated region
      $region37: #{nonlocal_block.2} parent=31 // pred_check
        %p1567 = pneg %p147
      $region38: #{nonlocal_block.2} parent=31 // pred_check_branch
        %1569 = sbr.rel (%p1567) target = $region40
      $region39: #{nonlocal_block.2} parent=31 // pred_region
        %s1570 = smul.u32 2, %s22
      $region40: #{nonlocal_block.2} parent=31 // pred_fallthru
        _
      // Predicated region
      $region41: #{nonlocal_block.2} parent=31 // pred_check
        %p1571 = pneg %p175
      $region42: #{nonlocal_block.2} parent=31 // pred_check_branch
        %1573 = sbr.rel (%p1571) target = $region44
      $region43: #{nonlocal_block.2} parent=31 // pred_region
        %s1574 = smul.u32 2, %s22
      $region44: #{nonlocal_block.2} parent=31 // pred_fallthru
        _
    $region32: #{nonlocal_block.2} parent=5 // pred_fallthru
      _
    %p1575 = scmp.le.s32.totalorder 2, %s12
    // Predicated region
    $region45: #{nonlocal_block.2} parent=5 // pred_check
      %p1576 = pneg %p1575
    $region46: #{nonlocal_block.2} parent=5 // pred_check_branch
      %1578 = sbr.rel (%p1576) target = $region48
    $region47: #{nonlocal_block.2} parent=5 // pred_region
      %s1579 = ssub.s32 %s12, 2
      // Predicated region
      $region49: #{nonlocal_block.2} parent=47 // pred_check
        %p1580 = pneg %p125
      $region50: #{nonlocal_block.2} parent=47 // pred_check_branch
        %1582 = sbr.rel (%p1580) target = $region52
      $region51: #{nonlocal_block.2} parent=47 // pred_region
        %s1583 = smul.u32 32, %s24
        %p1584 = scmp.lt.s32.totalorder %s23, 1
        %s1585 = scalar_select %p1584, %s23, 1
        %p1586 = scmp.lt.s32.totalorder %s1583, 31
        %s1587 = scalar_select %p1586, %s1583, 31
        %s1588 = smul.addr %s1585, 32
        %s1589 = sadd.s32 %s1587, %s1588
        %s1590 = smul.addr %s1589, 4
        %s1591 = scalar_lea.vmem %s3, %s1590
      $region52: #{nonlocal_block.2} parent=47 // pred_fallthru
        _
      // Predicated region
      $region53: #{nonlocal_block.2} parent=47 // pred_check
        %p1592 = pneg %p153
      $region54: #{nonlocal_block.2} parent=47 // pred_check_branch
        %1594 = sbr.rel (%p1592) target = $region56
      $region55: #{nonlocal_block.2} parent=47 // pred_region
        %s1595 = smul.u32 2, %s24
        %p1596 = scmp.lt.s32.totalorder %s23, 1
        %s1597 = scalar_select %p1596, %s23, 1
        %p1598 = scmp.lt.s32.totalorder %s1595, 1
        %s1599 = scalar_select %p1598, %s1595, 1
        %s1600 = smul.addr %s1597, 32
        %s1601 = sadd.s32 %s1599, %s1600
        %s1602 = smul.addr %s1601, 4
        %s1603 = scalar_lea.vmem %s4, %s1602
      $region56: #{nonlocal_block.2} parent=47 // pred_fallthru
        _
      // Predicated region
      $region57: #{nonlocal_block.2} parent=47 // pred_check
        %p1604 = pneg %p181
      $region58: #{nonlocal_block.2} parent=47 // pred_check_branch
        %1606 = sbr.rel (%p1604) target = $region60
      $region59: #{nonlocal_block.2} parent=47 // pred_region
        %s1607 = smul.u32 2, %s24
        %p1608 = scmp.lt.s32.totalorder %s23, 1
        %s1609 = scalar_select %p1608, %s23, 1
        %p1610 = scmp.lt.s32.totalorder %s1607, 1
        %s1611 = scalar_select %p1610, %s1607, 1
        %s1612 = smul.addr %s1609, 32
        %s1613 = sadd.s32 %s1611, %s1612
        %s1614 = smul.addr %s1613, 4
        %s1615 = scalar_lea.vmem %s5, %s1614
      $region60: #{nonlocal_block.2} parent=47 // pred_fallthru
        _
    $region48: #{nonlocal_block.2} parent=5 // pred_fallthru
      _
  $region6: #{nonlocal_block.2} parent=0 // loop_footer
    %s16 = sadd.s32 1, %s12
  $region7: #{nonlocal_block.2} parent=0 // loop_footer_branch
    %11 = sbr.rel target = $region3
  $region8: #{nonlocal_block.2} parent=0 // loop_exit
    _

// kernel: nonlocal_block.3
$region0: #{nonlocal_block.3}
  #allocation0 [shape = 'u32[]', space=smem, size = 0x4, offset = 0x4, fixed_abs, tag = 'smem constant byte address 0x4 - core index']
  #allocation1 [shape = 'u32[144,128]{1,0:T(1,128)}', space=vmem, size = 0x12000, scoped, tag = 'internal scratch']
  #allocation2 [shape = 'f32[128,1]{1,0:T(8,128)}', space=vmem, size = 0x10000, scoped, tag = 'scratch operand']
  #allocation3 [shape = 'f32[128,1]{1,0:T(8,128)}', space=vmem, size = 0x10000, scoped, tag = 'scratch operand']
  #allocation4 [shape = 'f32[128,128]{1,0:T(8,128)}', space=vmem, size = 0x10000, scoped, tag = 'scratch operand']
  %s0 = inlined_call_operand.vmem [shape: bf16[2,256,128], index: 0, kind: input, shape index: {}]
  %s1 = inlined_call_operand.vmem [shape: bf16[2,128,256], index: 1, kind: input, shape index: {}]
  %s2 = inlined_call_operand.vmem [shape: bf16[2,128,256], index: 2, kind: input, shape index: {}]
  %s3 = inlined_call_operand.vmem [shape: f32[2,16,256], index: 3, kind: input, shape index: {}, may-alias: {3,6}]
  %s4 = inlined_call_operand.vmem [shape: bf16[16,128], index: 4, kind: input, shape index: {}]
  %s5 = inlined_call_operand.vmem [shape: f32[16,1], index: 5, kind: input, shape index: {}]
  %s6 = inlined_call_operand.vmem [shape: f32[2,16,256], index: 6, kind: output, shape index: {}, may-alias: {3,6}]
  %s7 = sld [smem:[#allocation0]]
  $region219: #{nonlocal_block.3} parent=0
    _
  %s9 = ssub.s32 1, %s7
  %s10 = scalar_select 0, %s9, %s7
  $region1: #{nonlocal_block.3} parent=0
    #allocation5 [shape = 'u8[65536]{0}', space=vmem, size = 0x10000, scoped, tag = 'input window, operand 1']
    #allocation6 [shape = 'u8[65536]{0}', space=vmem, size = 0x10000, scoped, tag = 'input window, operand 2']
    #allocation7 [shape = 'u8[16384]{0}', space=vmem, size = 0x4000, scoped, tag = 'input window, operand 3']
    #allocation8 [shape = 'u8[16384]{0}', space=vmem, size = 0x4000, scoped, tag = 'output window, operand 0']
    loop: start=0, step=1, limit=10
    $region2: #{nonlocal_block.3} parent=1 // loop_pre_header
      _
    $region3: #{nonlocal_block.3} parent=1 // loop_header
      %s12 = sphi 0, %s16
      %p13 = scmp.ge.s32.totalorder %s12, 10
      %s19 = sphi 0, %s38
      %s20 = sphi 0, %s34
      %s21 = sphi 0, %s30
      %s22 = sphi 0, %s19
      %s23 = sphi 0, %s20
      %s24 = sphi 0, %s21
      %s25 = sphi 0, %s22
      %s26 = sphi 0, %s23
      %s27 = sphi 0, %s24
      %s43 = sphi 0, %s45
      %s46 = sphi 0, %s43
      %s47 = sphi 0, %s46
      %s63 = sphi 0, %s47
      %s71 = sphi 0, %s73
      %s74 = sphi 0, %s71
      %s75 = sphi 0, %s74
      %s91 = sphi 0, %s75
      %s99 = sphi 0, %s101
      %s102 = sphi 0, %s99
      %s103 = sphi 0, %s102
      %s119 = sphi 0, %s103
      %s127 = sphi 0, %s129
      %s130 = sphi 0, %s127
      %s131 = sphi 0, %s130
      %s147 = sphi 0, %s131
      %s151 = sphi 0, %s151
      %s153 = sphi 0, %s151
      %s154 = sphi 0, %s153
      %s168 = sphi 0, %s154
      %s172 = sphi 0, %s172
      %s174 = sphi 0, %s172
      %s175 = sphi 0, %s174
      %s189 = sphi 0, %s175
      %s197 = sphi 0, %s199
      %s200 = sphi 0, %s197
      %s201 = sphi 0, %s200
      %s217 = sphi 0, %s201
    $region4: #{nonlocal_block.3} parent=1 // loop_header_branch
      %15 = sbr.rel (%p13) target = $region8
    $region5: #{nonlocal_block.3} parent=1 // loop_body
      %s17 = ssub.s32 %s12, 1
      %s18 = ssub.s32 %s12, 2
      %s28 = sadd.s32 1, %s21
      %p29 = scmp.ge.s32.totalorder %s28, 2
      %s30 = scalar_select %p29, 0, %s28
      %s31 = sadd.s32 1, %s20
      %s32 = scalar_select %p29, %s31, %s20
      %p33 = scmp.ge.s32.totalorder %s32, 2
      %s34 = scalar_select %p33, 0, %s32
      %s35 = sadd.s32 1, %s19
      %s36 = scalar_select %p33, %s35, %s19
      %p37 = scmp.ge.s32.totalorder %s36, 2
      %s38 = scalar_select %p37, 0, %s36
      %s39 = ssub.s32 %s19, %s38
      %s40 = ssub.s32 %s20, %s34
      %s41 = sor.u32 %s39, %s40
      %p42 = scmp.eq.s32.totalorder %s41, 0
      %s44 = sadd.s32 %s43, 1
      %s45 = scalar_select %p42, %s43, %s44
      %p48 = pneg %p42
      %p49 = scmp.eq.s32.totalorder %s12, 7
      %p50 = por %p48, %p49
      %p51 = scmp.ne.s32.totalorder %s43, %s46
      %p52 = scmp.eq.s32.totalorder %s12, 0
      %p53 = por %p51, %p52
      %p54 = scmp.ne.s32.totalorder %s43, %s46
      %p55 = scmp.eq.s32.totalorder %s17, 7
      %p56 = por %p54, %p55
      %p57 = scmp.ne.s32.totalorder %s46, %s47
      %p58 = scmp.eq.s32.totalorder %s17, 0
      %p59 = por %p57, %p58
      %p60 = scmp.ne.s32.totalorder %s46, %s47
      %p61 = scmp.eq.s32.totalorder %s18, 7
      %p62 = por %p60, %p61
      %p64 = scmp.ne.s32.totalorder %s47, %s63
      %p65 = scmp.eq.s32.totalorder %s18, 0
      %p66 = por %p64, %p65
      %s67 = ssub.s32 %s19, %s38
      %s68 = ssub.s32 %s21, %s30
      %s69 = sor.u32 %s67, %s68
      %p70 = scmp.eq.s32.totalorder %s69, 0
      %s72 = sadd.s32 %s71, 1
      %s73 = scalar_select %p70, %s71, %s72
      %p76 = pneg %p70
      %p77 = scmp.eq.s32.totalorder %s12, 7
      %p78 = por %p76, %p77
      %p79 = scmp.ne.s32.totalorder %s71, %s74
      %p80 = scmp.eq.s32.totalorder %s12, 0
      %p81 = por %p79, %p80
      %p82 = scmp.ne.s32.totalorder %s71, %s74
      %p83 = scmp.eq.s32.totalorder %s17, 7
      %p84 = por %p82, %p83
      %p85 = scmp.ne.s32.totalorder %s74, %s75
      %p86 = scmp.eq.s32.totalorder %s17, 0
      %p87 = por %p85, %p86
      %p88 = scmp.ne.s32.totalorder %s74, %s75
      %p89 = scmp.eq.s32.totalorder %s18, 7
      %p90 = por %p88, %p89
      %p92 = scmp.ne.s32.totalorder %s75, %s91
      %p93 = scmp.eq.s32.totalorder %s18, 0
      %p94 = por %p92, %p93
      %s95 = ssub.s32 %s19, %s38
      %s96 = ssub.s32 %s21, %s30
      %s97 = sor.u32 %s95, %s96
      %p98 = scmp.eq.s32.totalorder %s97, 0
      %s100 = sadd.s32 %s99, 1
      %s101 = scalar_select %p98, %s99, %s100
      %p104 = pneg %p98
      %p105 = scmp.eq.s32.totalorder %s12, 7
      %p106 = por %p104, %p105
      %p107 = scmp.ne.s32.totalorder %s99, %s102
      %p108 = scmp.eq.s32.totalorder %s12, 0
      %p109 = por %p107, %p108
      %p110 = scmp.ne.s32.totalorder %s99, %s102
      %p111 = scmp.eq.s32.totalorder %s17, 7
      %p112 = por %p110, %p111
      %p113 = scmp.ne.s32.totalorder %s102, %s103
      %p114 = scmp.eq.s32.totalorder %s17, 0
      %p115 = por %p113, %p114
      %p116 = scmp.ne.s32.totalorder %s102, %s103
      %p117 = scmp.eq.s32.totalorder %s18, 7
      %p118 = por %p116, %p117
      %p120 = scmp.ne.s32.totalorder %s103, %s119
      %p121 = scmp.eq.s32.totalorder %s18, 0
      %p122 = por %p120, %p121
      %s123 = ssub.s32 %s19, %s38
      %s124 = ssub.s32 %s20, %s34
      %s125 = sor.u32 %s123, %s124
      %p126 = scmp.eq.s32.totalorder %s125, 0
      %s128 = sadd.s32 %s127, 1
      %s129 = scalar_select %p126, %s127, %s128
      %p132 = pneg %p126
      %p133 = scmp.eq.s32.totalorder %s12, 7
      %p134 = por %p132, %p133
      %p135 = scmp.ne.s32.totalorder %s127, %s130
      %p136 = scmp.eq.s32.totalorder %s12, 0
      %p137 = por %p135, %p136
      %p138 = scmp.ne.s32.totalorder %s127, %s130
      %p139 = scmp.eq.s32.totalorder %s17, 7
      %p140 = por %p138, %p139
      %p141 = scmp.ne.s32.totalorder %s130, %s131
      %p142 = scmp.eq.s32.totalorder %s17, 0
      %p143 = por %p141, %p142
      %p144 = scmp.ne.s32.totalorder %s130, %s131
      %p145 = scmp.eq.s32.totalorder %s18, 7
      %p146 = por %p144, %p145
      %p148 = scmp.ne.s32.totalorder %s131, %s147
      %p149 = scmp.eq.s32.totalorder %s18, 0
      %p150 = por %p148, %p149
      %s152 = sadd.s32 %s151, 1
      %p155 = scmp.eq.s32.totalorder %s12, 7
      %p156 = scmp.ne.s32.totalorder %s151, %s153
      %p157 = scmp.eq.s32.totalorder %s12, 0
      %p158 = por %p156, %p157
      %p159 = scmp.ne.s32.totalorder %s151, %s153
      %p160 = scmp.eq.s32.totalorder %s17, 7
      %p161 = por %p159, %p160
      %p162 = scmp.ne.s32.totalorder %s153, %s154
      %p163 = scmp.eq.s32.totalorder %s17, 0
      %p164 = por %p162, %p163
      %p165 = scmp.ne.s32.totalorder %s153, %s154
      %p166 = scmp.eq.s32.totalorder %s18, 7
      %p167 = por %p165, %p166
      %p169 = scmp.ne.s32.totalorder %s154, %s168
      %p170 = scmp.eq.s32.totalorder %s18, 0
      %p171 = por %p169, %p170
      %s173 = sadd.s32 %s172, 1
      %p176 = scmp.eq.s32.totalorder %s12, 7
      %p177 = scmp.ne.s32.totalorder %s172, %s174
      %p178 = scmp.eq.s32.totalorder %s12, 0
      %p179 = por %p177, %p178
      %p180 = scmp.ne.s32.totalorder %s172, %s174
      %p181 = scmp.eq.s32.totalorder %s17, 7
      %p182 = por %p180, %p181
      %p183 = scmp.ne.s32.totalorder %s174, %s175
      %p184 = scmp.eq.s32.totalorder %s17, 0
      %p185 = por %p183, %p184
      %p186 = scmp.ne.s32.totalorder %s174, %s175
      %p187 = scmp.eq.s32.totalorder %s18, 7
      %p188 = por %p186, %p187
      %p190 = scmp.ne.s32.totalorder %s175, %s189
      %p191 = scmp.eq.s32.totalorder %s18, 0
      %p192 = por %p190, %p191
      %s193 = ssub.s32 %s19, %s38
      %s194 = ssub.s32 %s20, %s34
      %s195 = sor.u32 %s193, %s194
      %p196 = scmp.eq.s32.totalorder %s195, 0
      %s198 = sadd.s32 %s197, 1
      %s199 = scalar_select %p196, %s197, %s198
      %p202 = pneg %p196
      %p203 = scmp.eq.s32.totalorder %s12, 7
      %p204 = por %p202, %p203
      %p205 = scmp.ne.s32.totalorder %s197, %s200
      %p206 = scmp.eq.s32.totalorder %s12, 0
      %p207 = por %p205, %p206
      %p208 = scmp.ne.s32.totalorder %s197, %s200
      %p209 = scmp.eq.s32.totalorder %s17, 7
      %p210 = por %p208, %p209
      %p211 = scmp.ne.s32.totalorder %s200, %s201
      %p212 = scmp.eq.s32.totalorder %s17, 0
      %p213 = por %p211, %p212
      %p214 = scmp.ne.s32.totalorder %s200, %s201
      %p215 = scmp.eq.s32.totalorder %s18, 7
      %p216 = por %p214, %p215
      %p218 = scmp.ne.s32.totalorder %s201, %s217
      %p219 = scmp.eq.s32.totalorder %s18, 0
      %p220 = por %p218, %p219
      %p221 = scmp.le.s32.totalorder 1, %s12
      %p222 = scmp.lt.s32.totalorder %s12, 9
      %p223 = pnand %p221, %p222
      %p224 = pneg %p223
      // Predicated region
      $region9: #{nonlocal_block.3} parent=5 // pred_check
        _
      $region10: #{nonlocal_block.3} parent=5 // pred_check_branch
        %226 = sbr.rel (%p223) target = $region12
      $region11: #{nonlocal_block.3} parent=5 // pred_region
        %s227 = ssub.s32 %s12, 1
        // Predicated region
        $region13: #{nonlocal_block.3} parent=11 // pred_check
          %p228 = pneg %p164
        $region14: #{nonlocal_block.3} parent=11 // pred_check_branch
          %230 = sbr.rel (%p228) target = $region16
        $region15: #{nonlocal_block.3} parent=11 // pred_region
          _
        $region16: #{nonlocal_block.3} parent=11 // pred_fallthru
          _
        // Predicated region
        $region17: #{nonlocal_block.3} parent=11 // pred_check
          %p231 = pneg %p185
        $region18: #{nonlocal_block.3} parent=11 // pred_check_branch
          %233 = sbr.rel (%p231) target = $region20
        $region19: #{nonlocal_block.3} parent=11 // pred_region
          _
        $region20: #{nonlocal_block.3} parent=11 // pred_fallthru
          _
      $region12: #{nonlocal_block.3} parent=5 // pred_fallthru
        _
      %p234 = scmp.lt.s32.totalorder %s12, 8
      // Predicated region
      $region21: #{nonlocal_block.3} parent=5 // pred_check
        %p235 = pneg %p234
      $region22: #{nonlocal_block.3} parent=5 // pred_check_branch
        %237 = sbr.rel (%p235) target = $region24
      $region23: #{nonlocal_block.3} parent=5 // pred_region
        // Predicated region
        $region25: #{nonlocal_block.3} parent=23 // pred_check
          %p238 = pneg %p53
        $region26: #{nonlocal_block.3} parent=23 // pred_check_branch
          %240 = sbr.rel (%p238) target = $region28
        $region27: #{nonlocal_block.3} parent=23 // pred_region
          %s241 = smul.u32 16, %s20
          %p242 = scmp.lt.s32.totalorder %s19, 1
          %s243 = scalar_select %p242, %s19, 1
          %p244 = scmp.lt.s32.totalorder %s241, 31
          %s245 = scalar_select %p244, %s241, 31
          %s246 = smul.addr %s243, 32
          %s247 = sadd.s32 %s245, %s246
          %s248 = smul.addr %s247, 4
          %s249 = scalar_lea.vmem %s0, %s248
          %s250 = smul.u32 16, %s20
        $region28: #{nonlocal_block.3} parent=23 // pred_fallthru
          _
        // Predicated region
        $region29: #{nonlocal_block.3} parent=23 // pred_check
          %p251 = pneg %p81
        $region30: #{nonlocal_block.3} parent=23 // pred_check_branch
          %253 = sbr.rel (%p251) target = $region32
        $region31: #{nonlocal_block.3} parent=23 // pred_region
          %s254 = sand.u32 %s71, 1
          %s255 = sand.u32 %s71, 1
          %s256 = smul.addr %s255, 64
          %s257 = scalar_lea.vmem [#allocation5], %s256
          %s258 = smul.addr %s19, 32
          %s259 = sadd.s32 %s21, %s258
          %s260 = smul.addr %s259, 4
          %s261 = scalar_lea.vmem %s1, %s260
          // Predicated region
          $region33: #{nonlocal_block.3} parent=31 // pred_check
            _
          $region34: #{nonlocal_block.3} parent=31 // pred_check_branch
            %263 = sbr.rel (0) target = $region36
          $region35: #{nonlocal_block.3} parent=31 // pred_region
            // Predicated region
            $region37: #{nonlocal_block.3} parent=35 // pred_check
              _
            $region38: #{nonlocal_block.3} parent=35 // pred_check_branch
              %265 = sbr.rel target = $region40
            $region39: #{nonlocal_block.3} parent=35 // pred_region
              // Predicated region
              $region52: #{nonlocal_block.3} parent=39 // pred_check
                _
              $region53: #{nonlocal_block.3} parent=39 // pred_check_branch
                %311 = sbr.rel (0) target = $region55
              $region54: #{nonlocal_block.3} parent=39 // pred_region
                loop: start=0, step=1, limit=1
                $region56: #{nonlocal_block.3} parent=54 // loop_pre_header
                  _
                $region57: #{nonlocal_block.3} parent=54 // loop_header
                  %s313 = sphi 0, %s317
                  %p314 = scmp.ge.s32.totalorder %s313, 1
                  %s318 = sphi %s261, %s261
                  %s319 = sphi %s257, %s257
                $region58: #{nonlocal_block.3} parent=54 // loop_header_branch
                  %316 = sbr.rel (%p314) target = $region62
                $region59: #{nonlocal_block.3} parent=54 // loop_body
                  _
                $region60: #{nonlocal_block.3} parent=54 // loop_footer
                  %s317 = sadd.s32 1, %s313
                $region61: #{nonlocal_block.3} parent=54 // loop_footer_branch
                  %312 = sbr.rel target = $region57
                $region62: #{nonlocal_block.3} parent=54 // loop_exit
                  _
                %s321 = ssub.s32 16, 1
                loop: start=0, step=1, limit=1
                $region63: #{nonlocal_block.3} parent=54 // loop_pre_header
                  _
                $region64: #{nonlocal_block.3} parent=54 // loop_header
                  %s323 = sphi 0, %s327
                  %p324 = scmp.ge.s32.totalorder %s323, 1
                  %s328 = sphi %s261, %s261
                  %s329 = sphi %s257, %s257
                $region65: #{nonlocal_block.3} parent=54 // loop_header_branch
                  %326 = sbr.rel (%p324) target = $region69
                $region66: #{nonlocal_block.3} parent=54 // loop_body
                  %v330 = vld [vmem:[%s328] sm:%s321]
                  %331 = vst [vmem:[%s329] sm:%s321] %v330
                  %v332 = vld [vmem:[%s328 + $0x8] sm:%s321]
                  %333 = vst [vmem:[%s329 + $0x4] sm:%s321] %v332
                  %v334 = vld [vmem:[%s328 + $0x10] sm:%s321]
                  %335 = vst [vmem:[%s329 + $0x8] sm:%s321] %v334
                  %v336 = vld [vmem:[%s328 + $0x18] sm:%s321]
                  %337 = vst [vmem:[%s329 + $0xc] sm:%s321] %v336
                  %v338 = vld [vmem:[%s328 + $0x20] sm:%s321]
                  %339 = vst [vmem:[%s329 + $0x10] sm:%s321] %v338
                  %v340 = vld [vmem:[%s328 + $0x28] sm:%s321]
                  %341 = vst [vmem:[%s329 + $0x14] sm:%s321] %v340
                  %v342 = vld [vmem:[%s328 + $0x30] sm:%s321]
                  %343 = vst [vmem:[%s329 + $0x18] sm:%s321] %v342
                  %v344 = vld [vmem:[%s328 + $0x38] sm:%s321]
                  %345 = vst [vmem:[%s329 + $0x1c] sm:%s321] %v344
                  %v346 = vld [vmem:[%s328 + $0x40] sm:%s321]
                  %347 = vst [vmem:[%s329 + $0x20] sm:%s321] %v346
                  %v348 = vld [vmem:[%s328 + $0x48] sm:%s321]
                  %349 = vst [vmem:[%s329 + $0x24] sm:%s321] %v348
                  %v350 = vld [vmem:[%s328 + $0x50] sm:%s321]
                  %351 = vst [vmem:[%s329 + $0x28] sm:%s321] %v350
                  %v352 = vld [vmem:[%s328 + $0x58] sm:%s321]
                  %353 = vst [vmem:[%s329 + $0x2c] sm:%s321] %v352
                  %v354 = vld [vmem:[%s328 + $0x60] sm:%s321]
                  %355 = vst [vmem:[%s329 + $0x30] sm:%s321] %v354
                  %v356 = vld [vmem:[%s328 + $0x68] sm:%s321]
                  %357 = vst [vmem:[%s329 + $0x34] sm:%s321] %v356
                  %v358 = vld [vmem:[%s328 + $0x70] sm:%s321]
                  %359 = vst [vmem:[%s329 + $0x38] sm:%s321] %v358
                  %v360 = vld [vmem:[%s328 + $0x78] sm:%s321]
                  %361 = vst [vmem:[%s329 + $0x3c] sm:%s321] %v360
                $region67: #{nonlocal_block.3} parent=54 // loop_footer
                  %s327 = sadd.s32 1, %s323
                $region68: #{nonlocal_block.3} parent=54 // loop_footer_branch
                  %322 = sbr.rel target = $region64
                $region69: #{nonlocal_block.3} parent=54 // loop_exit
                  _
              $region55: #{nonlocal_block.3} parent=39 // pred_fallthru
                _
            $region40: #{nonlocal_block.3} parent=35 // pred_fallthru
              _
            // Predicated region
            $region41: #{nonlocal_block.3} parent=35 // pred_check
              _
            $region42: #{nonlocal_block.3} parent=35 // pred_check_branch
              %267 = sbr.rel (0) target = $region44
            $region43: #{nonlocal_block.3} parent=35 // pred_region
              %s269 = ssub.s32 16, 1
              loop: start=0, step=1, limit=1
              $region45: #{nonlocal_block.3} parent=43 // loop_pre_header
                _
              $region46: #{nonlocal_block.3} parent=43 // loop_header
                %s271 = sphi 0, %s275
                %p272 = scmp.ge.s32.totalorder %s271, 1
                %s276 = sphi %s261, %s261
                %s277 = sphi %s257, %s257
              $region47: #{nonlocal_block.3} parent=43 // loop_header_branch
                %274 = sbr.rel (%p272) target = $region51
              $region48: #{nonlocal_block.3} parent=43 // loop_body
                %v278 = vld [vmem:[%s276] sm:%s269]
                %279 = vst [vmem:[%s277] sm:%s269] %v278
                %v280 = vld [vmem:[%s276 + $0x8] sm:%s269]
                %281 = vst [vmem:[%s277 + $0x4] sm:%s269] %v280
                %v282 = vld [vmem:[%s276 + $0x10] sm:%s269]
                %283 = vst [vmem:[%s277 + $0x8] sm:%s269] %v282
                %v284 = vld [vmem:[%s276 + $0x18] sm:%s269]
                %285 = vst [vmem:[%s277 + $0xc] sm:%s269] %v284
                %v286 = vld [vmem:[%s276 + $0x20] sm:%s269]
                %287 = vst [vmem:[%s277 + $0x10] sm:%s269] %v286
                %v288 = vld [vmem:[%s276 + $0x28] sm:%s269]
                %289 = vst [vmem:[%s277 + $0x14] sm:%s269] %v288
                %v290 = vld [vmem:[%s276 + $0x30] sm:%s269]
                %291 = vst [vmem:[%s277 + $0x18] sm:%s269] %v290
                %v292 = vld [vmem:[%s276 + $0x38] sm:%s269]
                %293 = vst [vmem:[%s277 + $0x1c] sm:%s269] %v292
                %v294 = vld [vmem:[%s276 + $0x40] sm:%s269]
                %295 = vst [vmem:[%s277 + $0x20] sm:%s269] %v294
                %v296 = vld [vmem:[%s276 + $0x48] sm:%s269]
                %297 = vst [vmem:[%s277 + $0x24] sm:%s269] %v296
                %v298 = vld [vmem:[%s276 + $0x50] sm:%s269]
                %299 = vst [vmem:[%s277 + $0x28] sm:%s269] %v298
                %v300 = vld [vmem:[%s276 + $0x58] sm:%s269]
                %301 = vst [vmem:[%s277 + $0x2c] sm:%s269] %v300
                %v302 = vld [vmem:[%s276 + $0x60] sm:%s269]
                %303 = vst [vmem:[%s277 + $0x30] sm:%s269] %v302
                %v304 = vld [vmem:[%s276 + $0x68] sm:%s269]
                %305 = vst [vmem:[%s277 + $0x34] sm:%s269] %v304
                %v306 = vld [vmem:[%s276 + $0x70] sm:%s269]
                %307 = vst [vmem:[%s277 + $0x38] sm:%s269] %v306
                %v308 = vld [vmem:[%s276 + $0x78] sm:%s269]
                %309 = vst [vmem:[%s277 + $0x3c] sm:%s269] %v308
              $region49: #{nonlocal_block.3} parent=43 // loop_footer
                %s275 = sadd.s32 1, %s271
              $region50: #{nonlocal_block.3} parent=43 // loop_footer_branch
                %270 = sbr.rel target = $region46
              $region51: #{nonlocal_block.3} parent=43 // loop_exit
                _
            $region44: #{nonlocal_block.3} parent=35 // pred_fallthru
              _
          $region36: #{nonlocal_block.3} parent=31 // pred_fallthru
            _
          %362 = vnop
        $region32: #{nonlocal_block.3} parent=23 // pred_fallthru
          _
        // Predicated region
        $region70: #{nonlocal_block.3} parent=23 // pred_check
          %p363 = pneg %p109
        $region71: #{nonlocal_block.3} parent=23 // pred_check_branch
          %365 = sbr.rel (%p363) target = $region73
        $region72: #{nonlocal_block.3} parent=23 // pred_region
          %s366 = sand.u32 %s99, 1
          %s367 = sand.u32 %s99, 1
          %s368 = smul.addr %s367, 64
          %s369 = scalar_lea.vmem [#allocation6], %s368
          %s370 = smul.addr %s19, 32
          %s371 = sadd.s32 %s21, %s370
          %s372 = smul.addr %s371, 4
          %s373 = scalar_lea.vmem %s2, %s372
          // Predicated region
          $region74: #{nonlocal_block.3} parent=72 // pred_check
            _
          $region75: #{nonlocal_block.3} parent=72 // pred_check_branch
            %375 = sbr.rel (0) target = $region77
          $region76: #{nonlocal_block.3} parent=72 // pred_region
            // Predicated region
            $region78: #{nonlocal_block.3} parent=76 // pred_check
              _
            $region79: #{nonlocal_block.3} parent=76 // pred_check_branch
              %377 = sbr.rel target = $region81
            $region80: #{nonlocal_block.3} parent=76 // pred_region
              // Predicated region
              $region93: #{nonlocal_block.3} parent=80 // pred_check
                _
              $region94: #{nonlocal_block.3} parent=80 // pred_check_branch
                %423 = sbr.rel (0) target = $region96
              $region95: #{nonlocal_block.3} parent=80 // pred_region
                loop: start=0, step=1, limit=1
                $region97: #{nonlocal_block.3} parent=95 // loop_pre_header
                  _
                $region98: #{nonlocal_block.3} parent=95 // loop_header
                  %s425 = sphi 0, %s429
                  %p426 = scmp.ge.s32.totalorder %s425, 1
                  %s430 = sphi %s373, %s373
                  %s431 = sphi %s369, %s369
                $region99: #{nonlocal_block.3} parent=95 // loop_header_branch
                  %428 = sbr.rel (%p426) target = $region103
                $region100: #{nonlocal_block.3} parent=95 // loop_body
                  _
                $region101: #{nonlocal_block.3} parent=95 // loop_footer
                  %s429 = sadd.s32 1, %s425
                $region102: #{nonlocal_block.3} parent=95 // loop_footer_branch
                  %424 = sbr.rel target = $region98
                $region103: #{nonlocal_block.3} parent=95 // loop_exit
                  _
                %s433 = ssub.s32 16, 1
                loop: start=0, step=1, limit=1
                $region104: #{nonlocal_block.3} parent=95 // loop_pre_header
                  _
                $region105: #{nonlocal_block.3} parent=95 // loop_header
                  %s435 = sphi 0, %s439
                  %p436 = scmp.ge.s32.totalorder %s435, 1
                  %s440 = sphi %s373, %s373
                  %s441 = sphi %s369, %s369
                $region106: #{nonlocal_block.3} parent=95 // loop_header_branch
                  %438 = sbr.rel (%p436) target = $region110
                $region107: #{nonlocal_block.3} parent=95 // loop_body
                  %v442 = vld [vmem:[%s440] sm:%s433]
                  %443 = vst [vmem:[%s441] sm:%s433] %v442
                  %v444 = vld [vmem:[%s440 + $0x8] sm:%s433]
                  %445 = vst [vmem:[%s441 + $0x4] sm:%s433] %v444
                  %v446 = vld [vmem:[%s440 + $0x10] sm:%s433]
                  %447 = vst [vmem:[%s441 + $0x8] sm:%s433] %v446
                  %v448 = vld [vmem:[%s440 + $0x18] sm:%s433]
                  %449 = vst [vmem:[%s441 + $0xc] sm:%s433] %v448
                  %v450 = vld [vmem:[%s440 + $0x20] sm:%s433]
                  %451 = vst [vmem:[%s441 + $0x10] sm:%s433] %v450
                  %v452 = vld [vmem:[%s440 + $0x28] sm:%s433]
                  %453 = vst [vmem:[%s441 + $0x14] sm:%s433] %v452
                  %v454 = vld [vmem:[%s440 + $0x30] sm:%s433]
                  %455 = vst [vmem:[%s441 + $0x18] sm:%s433] %v454
                  %v456 = vld [vmem:[%s440 + $0x38] sm:%s433]
                  %457 = vst [vmem:[%s441 + $0x1c] sm:%s433] %v456
                  %v458 = vld [vmem:[%s440 + $0x40] sm:%s433]
                  %459 = vst [vmem:[%s441 + $0x20] sm:%s433] %v458
                  %v460 = vld [vmem:[%s440 + $0x48] sm:%s433]
                  %461 = vst [vmem:[%s441 + $0x24] sm:%s433] %v460
                  %v462 = vld [vmem:[%s440 + $0x50] sm:%s433]
                  %463 = vst [vmem:[%s441 + $0x28] sm:%s433] %v462
                  %v464 = vld [vmem:[%s440 + $0x58] sm:%s433]
                  %465 = vst [vmem:[%s441 + $0x2c] sm:%s433] %v464
                  %v466 = vld [vmem:[%s440 + $0x60] sm:%s433]
                  %467 = vst [vmem:[%s441 + $0x30] sm:%s433] %v466
                  %v468 = vld [vmem:[%s440 + $0x68] sm:%s433]
                  %469 = vst [vmem:[%s441 + $0x34] sm:%s433] %v468
                  %v470 = vld [vmem:[%s440 + $0x70] sm:%s433]
                  %471 = vst [vmem:[%s441 + $0x38] sm:%s433] %v470
                  %v472 = vld [vmem:[%s440 + $0x78] sm:%s433]
                  %473 = vst [vmem:[%s441 + $0x3c] sm:%s433] %v472
                $region108: #{nonlocal_block.3} parent=95 // loop_footer
                  %s439 = sadd.s32 1, %s435
                $region109: #{nonlocal_block.3} parent=95 // loop_footer_branch
                  %434 = sbr.rel target = $region105
                $region110: #{nonlocal_block.3} parent=95 // loop_exit
                  _
              $region96: #{nonlocal_block.3} parent=80 // pred_fallthru
                _
            $region81: #{nonlocal_block.3} parent=76 // pred_fallthru
              _
            // Predicated region
            $region82: #{nonlocal_block.3} parent=76 // pred_check
              _
            $region83: #{nonlocal_block.3} parent=76 // pred_check_branch
              %379 = sbr.rel (0) target = $region85
            $region84: #{nonlocal_block.3} parent=76 // pred_region
              %s381 = ssub.s32 16, 1
              loop: start=0, step=1, limit=1
              $region86: #{nonlocal_block.3} parent=84 // loop_pre_header
                _
              $region87: #{nonlocal_block.3} parent=84 // loop_header
                %s383 = sphi 0, %s387
                %p384 = scmp.ge.s32.totalorder %s383, 1
                %s388 = sphi %s373, %s373
                %s389 = sphi %s369, %s369
              $region88: #{nonlocal_block.3} parent=84 // loop_header_branch
                %386 = sbr.rel (%p384) target = $region92
              $region89: #{nonlocal_block.3} parent=84 // loop_body
                %v390 = vld [vmem:[%s388] sm:%s381]
                %391 = vst [vmem:[%s389] sm:%s381] %v390
                %v392 = vld [vmem:[%s388 + $0x8] sm:%s381]
                %393 = vst [vmem:[%s389 + $0x4] sm:%s381] %v392
                %v394 = vld [vmem:[%s388 + $0x10] sm:%s381]
                %395 = vst [vmem:[%s389 + $0x8] sm:%s381] %v394
                %v396 = vld [vmem:[%s388 + $0x18] sm:%s381]
                %397 = vst [vmem:[%s389 + $0xc] sm:%s381] %v396
                %v398 = vld [vmem:[%s388 + $0x20] sm:%s381]
                %399 = vst [vmem:[%s389 + $0x10] sm:%s381] %v398
                %v400 = vld [vmem:[%s388 + $0x28] sm:%s381]
                %401 = vst [vmem:[%s389 + $0x14] sm:%s381] %v400
                %v402 = vld [vmem:[%s388 + $0x30] sm:%s381]
                %403 = vst [vmem:[%s389 + $0x18] sm:%s381] %v402
                %v404 = vld [vmem:[%s388 + $0x38] sm:%s381]
                %405 = vst [vmem:[%s389 + $0x1c] sm:%s381] %v404
                %v406 = vld [vmem:[%s388 + $0x40] sm:%s381]
                %407 = vst [vmem:[%s389 + $0x20] sm:%s381] %v406
                %v408 = vld [vmem:[%s388 + $0x48] sm:%s381]
                %409 = vst [vmem:[%s389 + $0x24] sm:%s381] %v408
                %v410 = vld [vmem:[%s388 + $0x50] sm:%s381]
                %411 = vst [vmem:[%s389 + $0x28] sm:%s381] %v410
                %v412 = vld [vmem:[%s388 + $0x58] sm:%s381]
                %413 = vst [vmem:[%s389 + $0x2c] sm:%s381] %v412
                %v414 = vld [vmem:[%s388 + $0x60] sm:%s381]
                %415 = vst [vmem:[%s389 + $0x30] sm:%s381] %v414
                %v416 = vld [vmem:[%s388 + $0x68] sm:%s381]
                %417 = vst [vmem:[%s389 + $0x34] sm:%s381] %v416
                %v418 = vld [vmem:[%s388 + $0x70] sm:%s381]
                %419 = vst [vmem:[%s389 + $0x38] sm:%s381] %v418
                %v420 = vld [vmem:[%s388 + $0x78] sm:%s381]
                %421 = vst [vmem:[%s389 + $0x3c] sm:%s381] %v420
              $region90: #{nonlocal_block.3} parent=84 // loop_footer
                %s387 = sadd.s32 1, %s383
              $region91: #{nonlocal_block.3} parent=84 // loop_footer_branch
                %382 = sbr.rel target = $region87
              $region92: #{nonlocal_block.3} parent=84 // loop_exit
                _
            $region85: #{nonlocal_block.3} parent=76 // pred_fallthru
              _
          $region77: #{nonlocal_block.3} parent=72 // pred_fallthru
            _
          %474 = vnop
        $region73: #{nonlocal_block.3} parent=23 // pred_fallthru
          _
        // Predicated region
        $region111: #{nonlocal_block.3} parent=23 // pred_check
          %p475 = pneg %p137
        $region112: #{nonlocal_block.3} parent=23 // pred_check_branch
          %477 = sbr.rel (%p475) target = $region114
        $region113: #{nonlocal_block.3} parent=23 // pred_region
          %s478 = sand.u32 %s127, 1
          %s479 = sand.u32 %s127, 1
          %s480 = smul.addr %s479, 16
          %s481 = scalar_lea.vmem [#allocation7], %s480
          %s482 = smul.addr %s19, 4
          %s483 = sadd.s32 %s20, %s482
          %s484 = smul.addr %s483, 8
          %s485 = scalar_lea.vmem %s3, %s484
          // Predicated region
          $region115: #{nonlocal_block.3} parent=113 // pred_check
            _
          $region116: #{nonlocal_block.3} parent=113 // pred_check_branch
            %487 = sbr.rel (0) target = $region118
          $region117: #{nonlocal_block.3} parent=113 // pred_region
            // Predicated region
            $region119: #{nonlocal_block.3} parent=117 // pred_check
              _
            $region120: #{nonlocal_block.3} parent=117 // pred_check_branch
              %489 = sbr.rel (0) target = $region122
            $region121: #{nonlocal_block.3} parent=117 // pred_region
              // Predicated region
              $region134: #{nonlocal_block.3} parent=121 // pred_check
                _
              $region135: #{nonlocal_block.3} parent=121 // pred_check_branch
                %507 = sbr.rel (0) target = $region137
              $region136: #{nonlocal_block.3} parent=121 // pred_region
                loop: start=0, step=1, limit=1
                $region138: #{nonlocal_block.3} parent=136 // loop_pre_header
                  _
                $region139: #{nonlocal_block.3} parent=136 // loop_header
                  %s509 = sphi 0, %s513
                  %p510 = scmp.ge.s32.totalorder %s509, 1
                  %s514 = sphi %s485, %s485
                  %s515 = sphi %s481, %s481
                $region140: #{nonlocal_block.3} parent=136 // loop_header_branch
                  %512 = sbr.rel (%p510) target = $region144
                $region141: #{nonlocal_block.3} parent=136 // loop_body
                  %v516 = vld [vmem:[%s514] sm:$0xff]
                  %517 = vst [vmem:[%s515] sm:$0xff] %v516
                  %v518 = vld [vmem:[%s514 + $0x10] sm:$0xff]
                  %519 = vst [vmem:[%s515 + $0x8] sm:$0xff] %v518
                $region142: #{nonlocal_block.3} parent=136 // loop_footer
                  %s513 = sadd.s32 1, %s509
                $region143: #{nonlocal_block.3} parent=136 // loop_footer_branch
                  %508 = sbr.rel target = $region139
                $region144: #{nonlocal_block.3} parent=136 // loop_exit
                  _
              $region137: #{nonlocal_block.3} parent=121 // pred_fallthru
                _
              // Predicated region
              $region145: #{nonlocal_block.3} parent=121 // pred_check
                _
              $region146: #{nonlocal_block.3} parent=121 // pred_check_branch
                %521 = sbr.rel target = $region148
              $region147: #{nonlocal_block.3} parent=121 // pred_region
                _
              $region148: #{nonlocal_block.3} parent=121 // pred_fallthru
                _
            $region122: #{nonlocal_block.3} parent=117 // pred_fallthru
              _
            // Predicated region
            $region123: #{nonlocal_block.3} parent=117 // pred_check
              _
            $region124: #{nonlocal_block.3} parent=117 // pred_check_branch
              %491 = sbr.rel target = $region126
            $region125: #{nonlocal_block.3} parent=117 // pred_region
              %s493 = ssub.s32 256, 1
              loop: start=0, step=1, limit=1
              $region127: #{nonlocal_block.3} parent=125 // loop_pre_header
                _
              $region128: #{nonlocal_block.3} parent=125 // loop_header
                %s495 = sphi 0, %s499
                %p496 = scmp.ge.s32.totalorder %s495, 1
                %s500 = sphi %s485, %s485
                %s501 = sphi %s481, %s481
              $region129: #{nonlocal_block.3} parent=125 // loop_header_branch
                %498 = sbr.rel (%p496) target = $region133
              $region130: #{nonlocal_block.3} parent=125 // loop_body
                %v502 = vld [vmem:[%s500] sm:%s493]
                %503 = vst [vmem:[%s501] sm:%s493] %v502
                %v504 = vld [vmem:[%s500 + $0x10] sm:%s493]
                %505 = vst [vmem:[%s501 + $0x8] sm:%s493] %v504
              $region131: #{nonlocal_block.3} parent=125 // loop_footer
                %s499 = sadd.s32 1, %s495
              $region132: #{nonlocal_block.3} parent=125 // loop_footer_branch
                %494 = sbr.rel target = $region128
              $region133: #{nonlocal_block.3} parent=125 // loop_exit
                _
            $region126: #{nonlocal_block.3} parent=117 // pred_fallthru
              _
          $region118: #{nonlocal_block.3} parent=113 // pred_fallthru
            _
          %522 = vnop
        $region114: #{nonlocal_block.3} parent=23 // pred_fallthru
          _
      $region24: #{nonlocal_block.3} parent=5 // pred_fallthru
        _
      %p523 = scmp.le.s32.totalorder 1, %s12
      %p524 = scmp.lt.s32.totalorder %s12, 9
      %p525 = pnand %p523, %p524
      %p526 = pneg %p525
      // Predicated region
      $region149: #{nonlocal_block.3} parent=5 // pred_check
        _
      $region150: #{nonlocal_block.3} parent=5 // pred_check_branch
        %528 = sbr.rel (%p525) target = $region152
      $region151: #{nonlocal_block.3} parent=5 // pred_region
        %s529 = ssub.s32 %s12, 1
        %s530 = sand.u32 %s74, 1
        %s531 = sand.u32 %s74, 1
        %s532 = smul.addr %s531, 64
        %s533 = scalar_lea.vmem [#allocation5], %s532
        // Predicated region
        $region153: #{nonlocal_block.3} parent=151 // pred_check
          %p534 = pneg %p87
        $region154: #{nonlocal_block.3} parent=151 // pred_check_branch
          %536 = sbr.rel (%p534) target = $region156
        $region155: #{nonlocal_block.3} parent=151 // pred_region
          _
        $region156: #{nonlocal_block.3} parent=151 // pred_fallthru
          _
        %s537 = sand.u32 %s102, 1
        %s538 = sand.u32 %s102, 1
        %s539 = smul.addr %s538, 64
        %s540 = scalar_lea.vmem [#allocation6], %s539
        // Predicated region
        $region157: #{nonlocal_block.3} parent=151 // pred_check
          %p541 = pneg %p115
        $region158: #{nonlocal_block.3} parent=151 // pred_check_branch
          %543 = sbr.rel (%p541) target = $region160
        $region159: #{nonlocal_block.3} parent=151 // pred_region
          _
        $region160: #{nonlocal_block.3} parent=151 // pred_fallthru
          _
        %s544 = sand.u32 %s130, 1
        %s545 = sand.u32 %s130, 1
        %s546 = smul.addr %s545, 16
        %s547 = scalar_lea.vmem [#allocation7], %s546
        // Predicated region
        $region161: #{nonlocal_block.3} parent=151 // pred_check
          %p548 = pneg %p143
        $region162: #{nonlocal_block.3} parent=151 // pred_check_branch
          %550 = sbr.rel (%p548) target = $region164
        $region163: #{nonlocal_block.3} parent=151 // pred_region
          _
        $region164: #{nonlocal_block.3} parent=151 // pred_fallthru
          _
        %s551 = smul.u32 16, %s23
        %p552 = scmp.lt.s32.totalorder %s22, 1
        %s553 = scalar_select %p552, %s22, 1
        %p554 = scmp.lt.s32.totalorder %s551, 31
        %s555 = scalar_select %p554, %s551, 31
        %s556 = smul.addr %s553, 32
        %s557 = sadd.s32 %s555, %s556
        %s558 = smul.addr %s557, 4
        %s559 = scalar_lea.vmem %s0, %s558
        %p560 = pneg %p59
        %p561 = pneg %p56
        %s562 = sand.u32 %s74, 1
        %s563 = sand.u32 %s74, 1
        %s564 = smul.addr %s563, 64
        %s565 = scalar_lea.vmem [#allocation5], %s564
        %p566 = pneg %p87
        %p567 = pneg %p84
        %s568 = sand.u32 %s102, 1
        %s569 = sand.u32 %s102, 1
        %s570 = smul.addr %s569, 64
        %s571 = scalar_lea.vmem [#allocation6], %s570
        %p572 = pneg %p115
        %p573 = pneg %p112
        %s574 = sand.u32 %s130, 1
        %s575 = sand.u32 %s130, 1
        %s576 = smul.addr %s575, 16
        %s577 = scalar_lea.vmem [#allocation7], %s576
        %p578 = pneg %p143
        %p579 = pneg %p140
        %p580 = pneg %p164
        %p581 = pneg %p161
        %p582 = pneg %p185
        %p583 = pneg %p182
        %p584 = pneg %p213
        %p585 = pneg %p210
        %s586 = sand.u32 %s200, 1
        %s587 = sand.u32 %s200, 1
        %s588 = smul.addr %s587, 16
        %s589 = scalar_lea.vmem [#allocation8], %s588
        %s590 = smul.u32 16, %s23
        %p591 = scmp.lt.s32.totalorder %s22, 1
        %s592 = scalar_select %p591, %s22, 1
        %p593 = scmp.lt.s32.totalorder %s590, 31
        %s594 = scalar_select %p593, %s590, 31
        %s595 = smul.addr %s592, 32
        %s596 = sadd.s32 %s594, %s595
        %s597 = smul.addr %s596, 4
        %s598 = scalar_lea.vmem %s0, %s597
        %s599 = smul.u32 16, %s23
        %p601 = scmp.eq.s32.totalorder %s24, 0
        // Predicated region
        $region165: #{nonlocal_block.3} parent=151 // pred_check
          %p602 = pneg %p601
        $region166: #{nonlocal_block.3} parent=151 // pred_check_branch
          %604 = sbr.rel (%p602) target = $region168
        $region167: #{nonlocal_block.3} parent=151 // pred_region
          %vm605 = vcmask 7168
          %606 = vst.msk [vmem:[#allocation2] sm:$0xff] %vm605, -inf
          %607 = vst.msk [vmem:[#allocation2 + $0x8] sm:$0xff] %vm605, -inf
          %608 = vst.msk [vmem:[#allocation2 + $0x10] sm:$0xff] %vm605, -inf
          %609 = vst.msk [vmem:[#allocation2 + $0x18] sm:$0xff] %vm605, -inf
          %610 = vst.msk [vmem:[#allocation2 + $0x20] sm:$0xff] %vm605, -inf
          %611 = vst.msk [vmem:[#allocation2 + $0x28] sm:$0xff] %vm605, -inf
          %612 = vst.msk [vmem:[#allocation2 + $0x30] sm:$0xff] %vm605, -inf
          %613 = vst.msk [vmem:[#allocation2 + $0x38] sm:$0xff] %vm605, -inf
          %614 = vst.msk [vmem:[#allocation2 + $0x40] sm:$0xff] %vm605, -inf
          %615 = vst.msk [vmem:[#allocation2 + $0x48] sm:$0xff] %vm605, -inf
          %616 = vst.msk [vmem:[#allocation2 + $0x50] sm:$0xff] %vm605, -inf
          %617 = vst.msk [vmem:[#allocation2 + $0x58] sm:$0xff] %vm605, -inf
          %618 = vst.msk [vmem:[#allocation2 + $0x60] sm:$0xff] %vm605, -inf
          %619 = vst.msk [vmem:[#allocation2 + $0x68] sm:$0xff] %vm605, -inf
          %620 = vst.msk [vmem:[#allocation2 + $0x70] sm:$0xff] %vm605, -inf
          %621 = vst.msk [vmem:[#allocation2 + $0x78] sm:$0xff] %vm605, -inf
          %622 = vst.msk [vmem:[#allocation3] sm:$0xff] %vm605, 0.0
          %623 = vst.msk [vmem:[#allocation3 + $0x8] sm:$0xff] %vm605, 0.0
          %624 = vst.msk [vmem:[#allocation3 + $0x10] sm:$0xff] %vm605, 0.0
          %625 = vst.msk [vmem:[#allocation3 + $0x18] sm:$0xff] %vm605, 0.0
          %626 = vst.msk [vmem:[#allocation3 + $0x20] sm:$0xff] %vm605, 0.0
          %627 = vst.msk [vmem:[#allocation3 + $0x28] sm:$0xff] %vm605, 0.0
          %628 = vst.msk [vmem:[#allocation3 + $0x30] sm:$0xff] %vm605, 0.0
          %629 = vst.msk [vmem:[#allocation3 + $0x38] sm:$0xff] %vm605, 0.0
          %630 = vst.msk [vmem:[#allocation3 + $0x40] sm:$0xff] %vm605, 0.0
          %631 = vst.msk [vmem:[#allocation3 + $0x48] sm:$0xff] %vm605, 0.0
          %632 = vst.msk [vmem:[#allocation3 + $0x50] sm:$0xff] %vm605, 0.0
          %633 = vst.msk [vmem:[#allocation3 + $0x58] sm:$0xff] %vm605, 0.0
          %634 = vst.msk [vmem:[#allocation3 + $0x60] sm:$0xff] %vm605, 0.0
          %635 = vst.msk [vmem:[#allocation3 + $0x68] sm:$0xff] %vm605, 0.0
          %636 = vst.msk [vmem:[#allocation3 + $0x70] sm:$0xff] %vm605, 0.0
          %637 = vst.msk [vmem:[#allocation3 + $0x78] sm:$0xff] %vm605, 0.0
          %638 = vst [vmem:[#allocation4] sm:$0xff] 0.0
          %639 = vst [vmem:[#allocation4 + $0x8] sm:$0xff] 0.0
          %640 = vst [vmem:[#allocation4 + $0x10] sm:$0xff] 0.0
          %641 = vst [vmem:[#allocation4 + $0x18] sm:$0xff] 0.0
          %642 = vst [vmem:[#allocation4 + $0x20] sm:$0xff] 0.0
          %643 = vst [vmem:[#allocation4 + $0x28] sm:$0xff] 0.0
          %644 = vst [vmem:[#allocation4 + $0x30] sm:$0xff] 0.0
          %645 = vst [vmem:[#allocation4 + $0x38] sm:$0xff] 0.0
          %646 = vst [vmem:[#allocation4 + $0x40] sm:$0xff] 0.0
          %647 = vst [vmem:[#allocation4 + $0x48] sm:$0xff] 0.0
          %648 = vst [vmem:[#allocation4 + $0x50] sm:$0xff] 0.0
          %649 = vst [vmem:[#allocation4 + $0x58] sm:$0xff] 0.0
          %650 = vst [vmem:[#allocation4 + $0x60] sm:$0xff] 0.0
          %651 = vst [vmem:[#allocation4 + $0x68] sm:$0xff] 0.0
          %652 = vst [vmem:[#allocation4 + $0x70] sm:$0xff] 0.0
          %653 = vst [vmem:[#allocation4 + $0x78] sm:$0xff] 0.0
        $region168: #{nonlocal_block.3} parent=151 // pred_fallthru
          _
        %v654 = vld [vmem:[%s598] sm:$0xf]
        %v655 = vld [vmem:[%s598 + $0x4] sm:$0xf]
        %v656 = vld [vmem:[%s598 + $0x8] sm:$0xf]
        %v657 = vld [vmem:[%s598 + $0xc] sm:$0xf]
        %v658 = vld [vmem:[%s598 + $0x10] sm:$0xf]
        %v659 = vld [vmem:[%s598 + $0x14] sm:$0xf]
        %v660 = vld [vmem:[%s598 + $0x18] sm:$0xf]
        %v661 = vld [vmem:[%s598 + $0x1c] sm:$0xf]
        %v662 = vld [vmem:[%s598 + $0x20] sm:$0xf]
        %v663 = vld [vmem:[%s598 + $0x24] sm:$0xf]
        %v664 = vld [vmem:[%s598 + $0x28] sm:$0xf]
        %v665 = vld [vmem:[%s598 + $0x2c] sm:$0xf]
        %v666 = vld [vmem:[%s598 + $0x30] sm:$0xf]
        %v667 = vld [vmem:[%s598 + $0x34] sm:$0xf]
        %v668 = vld [vmem:[%s598 + $0x38] sm:$0xf]
        %v669 = vld [vmem:[%s598 + $0x3c] sm:$0xf]
        %v670 = vld [vmem:[%s533] sm:$0xf]
        %v671 = vld [vmem:[%s533 + $0x4] sm:$0xf]
        %v672 = vld [vmem:[%s533 + $0x8] sm:$0xf]
        %v673 = vld [vmem:[%s533 + $0xc] sm:$0xf]
        %v674 = vld [vmem:[%s533 + $0x10] sm:$0xf]
        %v675 = vld [vmem:[%s533 + $0x14] sm:$0xf]
        %v676 = vld [vmem:[%s533 + $0x18] sm:$0xf]
        %v677 = vld [vmem:[%s533 + $0x1c] sm:$0xf]
        %v678 = vld [vmem:[%s533 + $0x20] sm:$0xf]
        %v679 = vld [vmem:[%s533 + $0x24] sm:$0xf]
        %v680 = vld [vmem:[%s533 + $0x28] sm:$0xf]
        %v681 = vld [vmem:[%s533 + $0x2c] sm:$0xf]
        %v682 = vld [vmem:[%s533 + $0x30] sm:$0xf]
        %v683 = vld [vmem:[%s533 + $0x34] sm:$0xf]
        %v684 = vld [vmem:[%s533 + $0x38] sm:$0xf]
        %v685 = vld [vmem:[%s533 + $0x3c] sm:$0xf]
        %v702 = vunpack.c.l.b16 %v654
        %v703 = vunpack.c.l.b16 %v655
        %v704 = vunpack.c.l.b16 %v656
        %v705 = vunpack.c.l.b16 %v657
        %v706 = vunpack.c.l.b16 %v658
        %v707 = vunpack.c.l.b16 %v659
        %v708 = vunpack.c.l.b16 %v660
        %v709 = vunpack.c.l.b16 %v661
        %v710 = vunpack.c.l.b16 %v662
        %v711 = vunpack.c.l.b16 %v663
        %v712 = vunpack.c.l.b16 %v664
        %v713 = vunpack.c.l.b16 %v665
        %v714 = vunpack.c.l.b16 %v666
        %v715 = vunpack.c.l.b16 %v667
        %v716 = vunpack.c.l.b16 %v668
        %v717 = vunpack.c.l.b16 %v669
        %v718 = vpack.c.b16 %v703, %v702
        %v719 = vpack.c.b16 %v705, %v704
        %v720 = vpack.c.b16 %v707, %v706
        %v721 = vpack.c.b16 %v709, %v708
        %v722 = vpack.c.b16 %v711, %v710
        %v723 = vpack.c.b16 %v713, %v712
        %v724 = vpack.c.b16 %v715, %v714
        %v725 = vpack.c.b16 %v717, %v716
        %v750 = vunpack.c.l.b16 %v670
        %v751 = vunpack.c.l.b16 %v671
        %v752 = vunpack.c.l.b16 %v672
        %v753 = vunpack.c.l.b16 %v673
        %v754 = vunpack.c.l.b16 %v674
        %v755 = vunpack.c.l.b16 %v675
        %v756 = vunpack.c.l.b16 %v676
        %v757 = vunpack.c.l.b16 %v677
        %v758 = vunpack.c.l.b16 %v678
        %v759 = vunpack.c.l.b16 %v679
        %v760 = vunpack.c.l.b16 %v680
        %v761 = vunpack.c.l.b16 %v681
        %v762 = vunpack.c.l.b16 %v682
        %v763 = vunpack.c.l.b16 %v683
        %v764 = vunpack.c.l.b16 %v684
        %v765 = vunpack.c.l.b16 %v685
        %v766 = vpack.c.b16 %v751, %v750
        %v767 = vpack.c.b16 %v753, %v752
        %v768 = vpack.c.b16 %v755, %v754
        %v769 = vpack.c.b16 %v757, %v756
        %v770 = vpack.c.b16 %v759, %v758
        %v771 = vpack.c.b16 %v761, %v760
        %v772 = vpack.c.b16 %v763, %v762
        %v773 = vpack.c.b16 %v765, %v764
        %782 = vmatprep.subr.bf16.mxu0 0
        %783 = vmatpush1.bf16.msra.mxu0 %v773
        %784 = vmatprep.subr.bf16.mxu0 0
        %785 = vmatpush1.bf16.msra.mxu0 %v772
        %786 = vmatprep.subr.bf16.mxu0 0
        %787 = vmatpush1.bf16.msra.mxu0 %v771
        %788 = vmatprep.subr.bf16.mxu0 0
        %789 = vmatpush1.bf16.msra.mxu0 %v770
        %790 = vmatprep.subr.bf16.mxu0 0
        %791 = vmatpush1.bf16.msra.mxu0 %v769
        %792 = vmatprep.subr.bf16.mxu0 0
        %793 = vmatpush1.bf16.msra.mxu0 %v768
        %794 = vmatprep.subr.bf16.mxu0 0
        %795 = vmatpush1.bf16.msra.mxu0 %v767
        %796 = vmatprep.subr.bf16.mxu0 0
        %797 = vmatpush1.bf16.msra.mxu0 %v766
        %798 = vmatprep.subr.bf16.mxu0 0
        %799 = vmatpush2.bf16.msra.mxu0 0
        %800 = vmatprep.subr.bf16.mxu0 0
        %801 = vmatpush2.bf16.msra.mxu0 0
        %802 = vmatprep.subr.bf16.mxu0 0
        %803 = vmatpush2.bf16.msra.mxu0 0
        %804 = vmatprep.subr.bf16.mxu0 0
        %805 = vmatpush2.bf16.msra.mxu0 0
        %806 = vmatprep.subr.bf16.mxu0 0
        %807 = vmatpush2.bf16.msra.mxu0 0
        %808 = vmatprep.subr.bf16.mxu0 0
        %809 = vmatpush2.bf16.msra.mxu0 0
        %810 = vmatprep.subr.bf16.mxu0 0
        %811 = vmatpush2.bf16.msra.mxu0 0
        %812 = vmatprep.subr.bf16.mxu0 0
        %813 = vmatpush2.bf16.msra.mxu0 0
        %814 = vmatprep.mubr.bf16.mxu0 0
        %815 = vmatmul.mubr.bf16.gmra.mxu0 %v718
        %v816 = vpop.f32.mrf.mxu0
        %v817 = vadd.f32 0.0, %v816
        %v818 = vpop.f32.mrf.mxu0
        %v819 = vpop.f32.mrf.mxu0
        %v820 = vadd.f32 0.0, %v819
        %v821 = vpop.f32.mrf.mxu0
        %822 = vmatprep.mubr.bf16.mxu0 0
        %823 = vmatmul.mubr.bf16.gmra.mxu0 %v719
        %v824 = vpop.f32.mrf.mxu0
        %v825 = vadd.f32 0.0, %v824
        %v826 = vpop.f32.mrf.mxu0
        %v827 = vpop.f32.mrf.mxu0
        %v828 = vadd.f32 0.0, %v827
        %v829 = vpop.f32.mrf.mxu0
        %830 = vmatprep.mubr.bf16.mxu0 0
        %831 = vmatmul.mubr.bf16.gmra.mxu0 %v720
        %v832 = vpop.f32.mrf.mxu0
        %v833 = vadd.f32 0.0, %v832
        %v834 = vpop.f32.mrf.mxu0
        %v835 = vpop.f32.mrf.mxu0
        %v836 = vadd.f32 0.0, %v835
        %v837 = vpop.f32.mrf.mxu0
        %838 = vmatprep.mubr.bf16.mxu0 0
        %839 = vmatmul.mubr.bf16.gmra.mxu0 %v721
        %v840 = vpop.f32.mrf.mxu0
        %v841 = vadd.f32 0.0, %v840
        %v842 = vpop.f32.mrf.mxu0
        %v843 = vpop.f32.mrf.mxu0
        %v844 = vadd.f32 0.0, %v843
        %v845 = vpop.f32.mrf.mxu0
        %846 = vmatprep.mubr.bf16.mxu0 0
        %847 = vmatmul.mubr.bf16.gmra.mxu0 %v722
        %v848 = vpop.f32.mrf.mxu0
        %v849 = vadd.f32 0.0, %v848
        %v850 = vpop.f32.mrf.mxu0
        %v851 = vpop.f32.mrf.mxu0
        %v852 = vadd.f32 0.0, %v851
        %v853 = vpop.f32.mrf.mxu0
        %854 = vmatprep.mubr.bf16.mxu0 0
        %855 = vmatmul.mubr.bf16.gmra.mxu0 %v723
        %v856 = vpop.f32.mrf.mxu0
        %v857 = vadd.f32 0.0, %v856
        %v858 = vpop.f32.mrf.mxu0
        %v859 = vpop.f32.mrf.mxu0
        %v860 = vadd.f32 0.0, %v859
        %v861 = vpop.f32.mrf.mxu0
        %862 = vmatprep.mubr.bf16.mxu0 0
        %863 = vmatmul.mubr.bf16.gmra.mxu0 %v724
        %v864 = vpop.f32.mrf.mxu0
        %v865 = vadd.f32 0.0, %v864
        %v866 = vpop.f32.mrf.mxu0
        %v867 = vpop.f32.mrf.mxu0
        %v868 = vadd.f32 0.0, %v867
        %v869 = vpop.f32.mrf.mxu0
        %870 = vmatprep.mubr.bf16.mxu0 0
        %871 = vmatmul.mubr.bf16.gmra.mxu0 %v725
        %v872 = vpop.f32.mrf.mxu0
        %v873 = vadd.f32 0.0, %v872
        %v874 = vpop.f32.mrf.mxu0
        %v875 = vpop.f32.mrf.mxu0
        %v876 = vadd.f32 0.0, %v875
        %v877 = vpop.f32.mrf.mxu0
        %878 = vdwg.mxu0
        %v879 = vld [vmem:[#allocation2] sm:$0xff]
        %v880 = vld [vmem:[#allocation2 + $0x8] sm:$0xff]
        %v881 = vld [vmem:[#allocation2 + $0x10] sm:$0xff]
        %v882 = vld [vmem:[#allocation2 + $0x18] sm:$0xff]
        %v883 = vld [vmem:[#allocation2 + $0x20] sm:$0xff]
        %v884 = vld [vmem:[#allocation2 + $0x28] sm:$0xff]
        %v885 = vld [vmem:[#allocation2 + $0x30] sm:$0xff]
        %v886 = vld [vmem:[#allocation2 + $0x38] sm:$0xff]
        %v887 = vld [vmem:[#allocation2 + $0x40] sm:$0xff]
        %v888 = vld [vmem:[#allocation2 + $0x48] sm:$0xff]
        %v889 = vld [vmem:[#allocation2 + $0x50] sm:$0xff]
        %v890 = vld [vmem:[#allocation2 + $0x58] sm:$0xff]
        %v891 = vld [vmem:[#allocation2 + $0x60] sm:$0xff]
        %v892 = vld [vmem:[#allocation2 + $0x68] sm:$0xff]
        %v893 = vld [vmem:[#allocation2 + $0x70] sm:$0xff]
        %v894 = vld [vmem:[#allocation2 + $0x78] sm:$0xff]
        %895 = vmax.xlane.f32.xlu0 %v817
        %v896 = vpop.xlane.xlu0 %895
        %897 = vmax.xlane.f32.xlu0 %v820
        %v898 = vpop.xlane.xlu0 %897
        %899 = vmax.xlane.f32.xlu0 %v825
        %v900 = vpop.xlane.xlu0 %899
        %901 = vmax.xlane.f32.xlu0 %v828
        %v902 = vpop.xlane.xlu0 %901
        %903 = vmax.xlane.f32.xlu0 %v833
        %v904 = vpop.xlane.xlu0 %903
        %905 = vmax.xlane.f32.xlu0 %v836
        %v906 = vpop.xlane.xlu0 %905
        %907 = vmax.xlane.f32.xlu0 %v841
        %v908 = vpop.xlane.xlu0 %907
        %909 = vmax.xlane.f32.xlu0 %v844
        %v910 = vpop.xlane.xlu0 %909
        %911 = vmax.xlane.f32.xlu0 %v849
        %v912 = vpop.xlane.xlu0 %911
        %913 = vmax.xlane.f32.xlu0 %v852
        %v914 = vpop.xlane.xlu0 %913
        %915 = vmax.xlane.f32.xlu0 %v857
        %v916 = vpop.xlane.xlu0 %915
        %917 = vmax.xlane.f32.xlu0 %v860
        %v918 = vpop.xlane.xlu0 %917
        %919 = vmax.xlane.f32.xlu0 %v865
        %v920 = vpop.xlane.xlu0 %919
        %921 = vmax.xlane.f32.xlu0 %v868
        %v922 = vpop.xlane.xlu0 %921
        %923 = vmax.xlane.f32.xlu0 %v873
        %v924 = vpop.xlane.xlu0 %923
        %925 = vmax.xlane.f32.xlu0 %v876
        %v926 = vpop.xlane.xlu0 %925
        %v927 = vmax.f32 %v879, %v896
        %v928 = vmax.f32 %v880, %v898
        %v929 = vmax.f32 %v881, %v900
        %v930 = vmax.f32 %v882, %v902
        %v931 = vmax.f32 %v883, %v904
        %v932 = vmax.f32 %v884, %v906
        %v933 = vmax.f32 %v885, %v908
        %v934 = vmax.f32 %v886, %v910
        %v935 = vmax.f32 %v887, %v912
        %v936 = vmax.f32 %v888, %v914
        %v937 = vmax.f32 %v889, %v916
        %v938 = vmax.f32 %v890, %v918
        %v939 = vmax.f32 %v891, %v920
        %v940 = vmax.f32 %v892, %v922
        %v941 = vmax.f32 %v893, %v924
        %v942 = vmax.f32 %v894, %v926
        %v943 = vsub.f32 %v879, %v927
        %v944 = vsub.f32 %v880, %v928
        %v945 = vsub.f32 %v881, %v929
        %v946 = vsub.f32 %v882, %v930
        %v947 = vsub.f32 %v883, %v931
        %v948 = vsub.f32 %v884, %v932
        %v949 = vsub.f32 %v885, %v933
        %v950 = vsub.f32 %v886, %v934
        %v951 = vsub.f32 %v887, %v935
        %v952 = vsub.f32 %v888, %v936
        %v953 = vsub.f32 %v889, %v937
        %v954 = vsub.f32 %v890, %v938
        %v955 = vsub.f32 %v891, %v939
        %v956 = vsub.f32 %v892, %v940
        %v957 = vsub.f32 %v893, %v941
        %v958 = vsub.f32 %v894, %v942
        %v959 = vmul.f32 %v943, 1.442695
        %v960 = vpow.pop %v959
        %v961 = vmul.f32 %v944, 1.442695
        %v962 = vpow.pop %v961
        %v963 = vmul.f32 %v945, 1.442695
        %v964 = vpow.pop %v963
        %v965 = vmul.f32 %v946, 1.442695
        %v966 = vpow.pop %v965
        %v967 = vmul.f32 %v947, 1.442695
        %v968 = vpow.pop %v967
        %v969 = vmul.f32 %v948, 1.442695
        %v970 = vpow.pop %v969
        %v971 = vmul.f32 %v949, 1.442695
        %v972 = vpow.pop %v971
        %v973 = vmul.f32 %v950, 1.442695
        %v974 = vpow.pop %v973
        %v975 = vmul.f32 %v951, 1.442695
        %v976 = vpow.pop %v975
        %v977 = vmul.f32 %v952, 1.442695
        %v978 = vpow.pop %v977
        %v979 = vmul.f32 %v953, 1.442695
        %v980 = vpow.pop %v979
        %v981 = vmul.f32 %v954, 1.442695
        %v982 = vpow.pop %v981
        %v983 = vmul.f32 %v955, 1.442695
        %v984 = vpow.pop %v983
        %v985 = vmul.f32 %v956, 1.442695
        %v986 = vpow.pop %v985
        %v987 = vmul.f32 %v957, 1.442695
        %v988 = vpow.pop %v987
        %v989 = vmul.f32 %v958, 1.442695
        %v990 = vpow.pop %v989
        %992 = vset.pattern.permute.xlu0 0
        %993 = vperm.xlu0 %992, %v927
        %v994 = vpop.permute.xlu0 %993
        %997 = vset.pattern.permute.xlu0 0
        %998 = vperm.xlu0 %997, %v928
        %v999 = vpop.permute.xlu0 %998
        %1002 = vset.pattern.permute.xlu0 0
        %1003 = vperm.xlu0 %1002, %v929
        %v1004 = vpop.permute.xlu0 %1003
        %1007 = vset.pattern.permute.xlu0 0
        %1008 = vperm.xlu0 %1007, %v930
        %v1009 = vpop.permute.xlu0 %1008
        %1012 = vset.pattern.permute.xlu0 0
        %1013 = vperm.xlu0 %1012, %v931
        %v1014 = vpop.permute.xlu0 %1013
        %1017 = vset.pattern.permute.xlu0 0
        %1018 = vperm.xlu0 %1017, %v932
        %v1019 = vpop.permute.xlu0 %1018
        %1022 = vset.pattern.permute.xlu0 0
        %1023 = vperm.xlu0 %1022, %v933
        %v1024 = vpop.permute.xlu0 %1023
        %1027 = vset.pattern.permute.xlu0 0
        %1028 = vperm.xlu0 %1027, %v934
        %v1029 = vpop.permute.xlu0 %1028
        %1032 = vset.pattern.permute.xlu0 0
        %1033 = vperm.xlu0 %1032, %v935
        %v1034 = vpop.permute.xlu0 %1033
        %1037 = vset.pattern.permute.xlu0 0
        %1038 = vperm.xlu0 %1037, %v936
        %v1039 = vpop.permute.xlu0 %1038
        %1042 = vset.pattern.permute.xlu0 0
        %1043 = vperm.xlu0 %1042, %v937
        %v1044 = vpop.permute.xlu0 %1043
        %1047 = vset.pattern.permute.xlu0 0
        %1048 = vperm.xlu0 %1047, %v938
        %v1049 = vpop.permute.xlu0 %1048
        %1052 = vset.pattern.permute.xlu0 0
        %1053 = vperm.xlu0 %1052, %v939
        %v1054 = vpop.permute.xlu0 %1053
        %1057 = vset.pattern.permute.xlu0 0
        %1058 = vperm.xlu0 %1057, %v940
        %v1059 = vpop.permute.xlu0 %1058
        %1062 = vset.pattern.permute.xlu0 0
        %1063 = vperm.xlu0 %1062, %v941
        %v1064 = vpop.permute.xlu0 %1063
        %1067 = vset.pattern.permute.xlu0 0
        %1068 = vperm.xlu0 %1067, %v942
        %v1069 = vpop.permute.xlu0 %1068
        %v1071 = vsub.f32 %v817, %v994
        %v1072 = vsub.f32 %v820, %v999
        %v1073 = vsub.f32 %v825, %v1004
        %v1074 = vsub.f32 %v828, %v1009
        %v1075 = vsub.f32 %v833, %v1014
        %v1076 = vsub.f32 %v836, %v1019
        %v1077 = vsub.f32 %v841, %v1024
        %v1078 = vsub.f32 %v844, %v1029
        %v1079 = vsub.f32 %v849, %v1034
        %v1080 = vsub.f32 %v852, %v1039
        %v1081 = vsub.f32 %v857, %v1044
        %v1082 = vsub.f32 %v860, %v1049
        %v1083 = vsub.f32 %v865, %v1054
        %v1084 = vsub.f32 %v868, %v1059
        %v1085 = vsub.f32 %v873, %v1064
        %v1086 = vsub.f32 %v876, %v1069
        %v1087 = vmul.f32 %v1071, 1.442695
        %v1088 = vpow.pop %v1087
        %v1089 = vmul.f32 %v1072, 1.442695
        %v1090 = vpow.pop %v1089
        %v1091 = vmul.f32 %v1073, 1.442695
        %v1092 = vpow.pop %v1091
        %v1093 = vmul.f32 %v1074, 1.442695
        %v1094 = vpow.pop %v1093
        %v1095 = vmul.f32 %v1075, 1.442695
        %v1096 = vpow.pop %v1095
        %v1097 = vmul.f32 %v1076, 1.442695
        %v1098 = vpow.pop %v1097
        %v1099 = vmul.f32 %v1077, 1.442695
        %v1100 = vpow.pop %v1099
        %v1101 = vmul.f32 %v1078, 1.442695
        %v1102 = vpow.pop %v1101
        %v1103 = vmul.f32 %v1079, 1.442695
        %v1104 = vpow.pop %v1103
        %v1105 = vmul.f32 %v1080, 1.442695
        %v1106 = vpow.pop %v1105
        %v1107 = vmul.f32 %v1081, 1.442695
        %v1108 = vpow.pop %v1107
        %v1109 = vmul.f32 %v1082, 1.442695
        %v1110 = vpow.pop %v1109
        %v1111 = vmul.f32 %v1083, 1.442695
        %v1112 = vpow.pop %v1111
        %v1113 = vmul.f32 %v1084, 1.442695
        %v1114 = vpow.pop %v1113
        %v1115 = vmul.f32 %v1085, 1.442695
        %v1116 = vpow.pop %v1115
        %v1117 = vmul.f32 %v1086, 1.442695
        %v1118 = vpow.pop %v1117
        %v1119 = vld [vmem:[#allocation3] sm:$0xff]
        %v1120 = vld [vmem:[#allocation3 + $0x8] sm:$0xff]
        %v1121 = vld [vmem:[#allocation3 + $0x10] sm:$0xff]
        %v1122 = vld [vmem:[#allocation3 + $0x18] sm:$0xff]
        %v1123 = vld [vmem:[#allocation3 + $0x20] sm:$0xff]
        %v1124 = vld [vmem:[#allocation3 + $0x28] sm:$0xff]
        %v1125 = vld [vmem:[#allocation3 + $0x30] sm:$0xff]
        %v1126 = vld [vmem:[#allocation3 + $0x38] sm:$0xff]
        %v1127 = vld [vmem:[#allocation3 + $0x40] sm:$0xff]
        %v1128 = vld [vmem:[#allocation3 + $0x48] sm:$0xff]
        %v1129 = vld [vmem:[#allocation3 + $0x50] sm:$0xff]
        %v1130 = vld [vmem:[#allocation3 + $0x58] sm:$0xff]
        %v1131 = vld [vmem:[#allocation3 + $0x60] sm:$0xff]
        %v1132 = vld [vmem:[#allocation3 + $0x68] sm:$0xff]
        %v1133 = vld [vmem:[#allocation3 + $0x70] sm:$0xff]
        %v1134 = vld [vmem:[#allocation3 + $0x78] sm:$0xff]
        %v1135 = vmul.f32 %v960, %v1119
        %v1136 = vmul.f32 %v962, %v1120
        %v1137 = vmul.f32 %v964, %v1121
        %v1138 = vmul.f32 %v966, %v1122
        %v1139 = vmul.f32 %v968, %v1123
        %v1140 = vmul.f32 %v970, %v1124
        %v1141 = vmul.f32 %v972, %v1125
        %v1142 = vmul.f32 %v974, %v1126
        %v1143 = vmul.f32 %v976, %v1127
        %v1144 = vmul.f32 %v978, %v1128
        %v1145 = vmul.f32 %v980, %v1129
        %v1146 = vmul.f32 %v982, %v1130
        %v1147 = vmul.f32 %v984, %v1131
        %v1148 = vmul.f32 %v986, %v1132
        %v1149 = vmul.f32 %v988, %v1133
        %v1150 = vmul.f32 %v990, %v1134
        %1151 = vadd.xlane.f32.xlu0 %v1088
        %v1152 = vpop.xlane.xlu0 %1151
        %1153 = vadd.xlane.f32.xlu0 %v1090
        %v1154 = vpop.xlane.xlu0 %1153
        %1155 = vadd.xlane.f32.xlu0 %v1092
        %v1156 = vpop.xlane.xlu0 %1155
        %1157 = vadd.xlane.f32.xlu0 %v1094
        %v1158 = vpop.xlane.xlu0 %1157
        %1159 = vadd.xlane.f32.xlu0 %v1096
        %v1160 = vpop.xlane.xlu0 %1159
        %1161 = vadd.xlane.f32.xlu0 %v1098
        %v1162 = vpop.xlane.xlu0 %1161
        %1163 = vadd.xlane.f32.xlu0 %v1100
        %v1164 = vpop.xlane.xlu0 %1163
        %1165 = vadd.xlane.f32.xlu0 %v1102
        %v1166 = vpop.xlane.xlu0 %1165
        %1167 = vadd.xlane.f32.xlu0 %v1104
        %v1168 = vpop.xlane.xlu0 %1167
        %1169 = vadd.xlane.f32.xlu0 %v1106
        %v1170 = vpop.xlane.xlu0 %1169
        %1171 = vadd.xlane.f32.xlu0 %v1108
        %v1172 = vpop.xlane.xlu0 %1171
        %1173 = vadd.xlane.f32.xlu0 %v1110
        %v1174 = vpop.xlane.xlu0 %1173
        %1175 = vadd.xlane.f32.xlu0 %v1112
        %v1176 = vpop.xlane.xlu0 %1175
        %1177 = vadd.xlane.f32.xlu0 %v1114
        %v1178 = vpop.xlane.xlu0 %1177
        %1179 = vadd.xlane.f32.xlu0 %v1116
        %v1180 = vpop.xlane.xlu0 %1179
        %1181 = vadd.xlane.f32.xlu0 %v1118
        %v1182 = vpop.xlane.xlu0 %1181
        %v1183 = vadd.f32 %v1135, %v1152
        %v1184 = vadd.f32 %v1136, %v1154
        %v1185 = vadd.f32 %v1137, %v1156
        %v1186 = vadd.f32 %v1138, %v1158
        %v1187 = vadd.f32 %v1139, %v1160
        %v1188 = vadd.f32 %v1140, %v1162
        %v1189 = vadd.f32 %v1141, %v1164
        %v1190 = vadd.f32 %v1142, %v1166
        %v1191 = vadd.f32 %v1143, %v1168
        %v1192 = vadd.f32 %v1144, %v1170
        %v1193 = vadd.f32 %v1145, %v1172
        %v1194 = vadd.f32 %v1146, %v1174
        %v1195 = vadd.f32 %v1147, %v1176
        %v1196 = vadd.f32 %v1148, %v1178
        %v1197 = vadd.f32 %v1149, %v1180
        %v1198 = vadd.f32 %v1150, %v1182
        %vm1199 = vcmask 7168
        %1200 = vst.msk [vmem:[#allocation3] sm:$0xff] %vm1199, %v1183
        %1201 = vst.msk [vmem:[#allocation3 + $0x8] sm:$0xff] %vm1199, %v1184
        %1202 = vst.msk [vmem:[#allocation3 + $0x10] sm:$0xff] %vm1199, %v1185
        %1203 = vst.msk [vmem:[#allocation3 + $0x18] sm:$0xff] %vm1199, %v1186
        %1204 = vst.msk [vmem:[#allocation3 + $0x20] sm:$0xff] %vm1199, %v1187
        %1205 = vst.msk [vmem:[#allocation3 + $0x28] sm:$0xff] %vm1199, %v1188
        %1206 = vst.msk [vmem:[#allocation3 + $0x30] sm:$0xff] %vm1199, %v1189
        %1207 = vst.msk [vmem:[#allocation3 + $0x38] sm:$0xff] %vm1199, %v1190
        %1208 = vst.msk [vmem:[#allocation3 + $0x40] sm:$0xff] %vm1199, %v1191
        %1209 = vst.msk [vmem:[#allocation3 + $0x48] sm:$0xff] %vm1199, %v1192
        %1210 = vst.msk [vmem:[#allocation3 + $0x50] sm:$0xff] %vm1199, %v1193
        %1211 = vst.msk [vmem:[#allocation3 + $0x58] sm:$0xff] %vm1199, %v1194
        %1212 = vst.msk [vmem:[#allocation3 + $0x60] sm:$0xff] %vm1199, %v1195
        %1213 = vst.msk [vmem:[#allocation3 + $0x68] sm:$0xff] %vm1199, %v1196
        %1214 = vst.msk [vmem:[#allocation3 + $0x70] sm:$0xff] %vm1199, %v1197
        %1215 = vst.msk [vmem:[#allocation3 + $0x78] sm:$0xff] %vm1199, %v1198
        %v1216 = vld [vmem:[#allocation4] sm:$0xff]
        %v1217 = vld [vmem:[#allocation4 + $0x8] sm:$0xff]
        %v1218 = vld [vmem:[#allocation4 + $0x10] sm:$0xff]
        %v1219 = vld [vmem:[#allocation4 + $0x18] sm:$0xff]
        %v1220 = vld [vmem:[#allocation4 + $0x20] sm:$0xff]
        %v1221 = vld [vmem:[#allocation4 + $0x28] sm:$0xff]
        %v1222 = vld [vmem:[#allocation4 + $0x30] sm:$0xff]
        %v1223 = vld [vmem:[#allocation4 + $0x38] sm:$0xff]
        %v1224 = vld [vmem:[#allocation4 + $0x40] sm:$0xff]
        %v1225 = vld [vmem:[#allocation4 + $0x48] sm:$0xff]
        %v1226 = vld [vmem:[#allocation4 + $0x50] sm:$0xff]
        %v1227 = vld [vmem:[#allocation4 + $0x58] sm:$0xff]
        %v1228 = vld [vmem:[#allocation4 + $0x60] sm:$0xff]
        %v1229 = vld [vmem:[#allocation4 + $0x68] sm:$0xff]
        %v1230 = vld [vmem:[#allocation4 + $0x70] sm:$0xff]
        %v1231 = vld [vmem:[#allocation4 + $0x78] sm:$0xff]
        %1233 = vset.pattern.permute.xlu0 0
        %1234 = vperm.xlu0 %1233, %v960
        %v1235 = vpop.permute.xlu0 %1234
        %1238 = vset.pattern.permute.xlu0 0
        %1239 = vperm.xlu0 %1238, %v962
        %v1240 = vpop.permute.xlu0 %1239
        %1243 = vset.pattern.permute.xlu0 0
        %1244 = vperm.xlu0 %1243, %v964
        %v1245 = vpop.permute.xlu0 %1244
        %1248 = vset.pattern.permute.xlu0 0
        %1249 = vperm.xlu0 %1248, %v966
        %v1250 = vpop.permute.xlu0 %1249
        %1253 = vset.pattern.permute.xlu0 0
        %1254 = vperm.xlu0 %1253, %v968
        %v1255 = vpop.permute.xlu0 %1254
        %1258 = vset.pattern.permute.xlu0 0
        %1259 = vperm.xlu0 %1258, %v970
        %v1260 = vpop.permute.xlu0 %1259
        %1263 = vset.pattern.permute.xlu0 0
        %1264 = vperm.xlu0 %1263, %v972
        %v1265 = vpop.permute.xlu0 %1264
        %1268 = vset.pattern.permute.xlu0 0
        %1269 = vperm.xlu0 %1268, %v974
        %v1270 = vpop.permute.xlu0 %1269
        %1273 = vset.pattern.permute.xlu0 0
        %1274 = vperm.xlu0 %1273, %v976
        %v1275 = vpop.permute.xlu0 %1274
        %1278 = vset.pattern.permute.xlu0 0
        %1279 = vperm.xlu0 %1278, %v978
        %v1280 = vpop.permute.xlu0 %1279
        %1283 = vset.pattern.permute.xlu0 0
        %1284 = vperm.xlu0 %1283, %v980
        %v1285 = vpop.permute.xlu0 %1284
        %1288 = vset.pattern.permute.xlu0 0
        %1289 = vperm.xlu0 %1288, %v982
        %v1290 = vpop.permute.xlu0 %1289
        %1293 = vset.pattern.permute.xlu0 0
        %1294 = vperm.xlu0 %1293, %v984
        %v1295 = vpop.permute.xlu0 %1294
        %1298 = vset.pattern.permute.xlu0 0
        %1299 = vperm.xlu0 %1298, %v986
        %v1300 = vpop.permute.xlu0 %1299
        %1303 = vset.pattern.permute.xlu0 0
        %1304 = vperm.xlu0 %1303, %v988
        %v1305 = vpop.permute.xlu0 %1304
        %1308 = vset.pattern.permute.xlu0 0
        %1309 = vperm.xlu0 %1308, %v990
        %v1310 = vpop.permute.xlu0 %1309
        %v1312 = vmul.f32 %v1235, %v1216
        %v1313 = vmul.f32 %v1240, %v1217
        %v1314 = vmul.f32 %v1245, %v1218
        %v1315 = vmul.f32 %v1250, %v1219
        %v1316 = vmul.f32 %v1255, %v1220
        %v1317 = vmul.f32 %v1260, %v1221
        %v1318 = vmul.f32 %v1265, %v1222
        %v1319 = vmul.f32 %v1270, %v1223
        %v1320 = vmul.f32 %v1275, %v1224
        %v1321 = vmul.f32 %v1280, %v1225
        %v1322 = vmul.f32 %v1285, %v1226
        %v1323 = vmul.f32 %v1290, %v1227
        %v1324 = vmul.f32 %v1295, %v1228
        %v1325 = vmul.f32 %v1300, %v1229
        %v1326 = vmul.f32 %v1305, %v1230
        %v1327 = vmul.f32 %v1310, %v1231
        %v1328 = vpack.c.bf16 %v1090, %v1088
        %v1329 = vpack.c.bf16 %v1094, %v1092
        %v1330 = vpack.c.bf16 %v1098, %v1096
        %v1331 = vpack.c.bf16 %v1102, %v1100
        %v1332 = vpack.c.bf16 %v1106, %v1104
        %v1333 = vpack.c.bf16 %v1110, %v1108
        %v1334 = vpack.c.bf16 %v1114, %v1112
        %v1335 = vpack.c.bf16 %v1118, %v1116
        %v1336 = vld [vmem:[%s540] sm:$0xf]
        %v1337 = vld [vmem:[%s540 + $0x4] sm:$0xf]
        %v1338 = vld [vmem:[%s540 + $0x8] sm:$0xf]
        %v1339 = vld [vmem:[%s540 + $0xc] sm:$0xf]
        %v1340 = vld [vmem:[%s540 + $0x10] sm:$0xf]
        %v1341 = vld [vmem:[%s540 + $0x14] sm:$0xf]
        %v1342 = vld [vmem:[%s540 + $0x18] sm:$0xf]
        %v1343 = vld [vmem:[%s540 + $0x1c] sm:$0xf]
        %v1344 = vld [vmem:[%s540 + $0x20] sm:$0xf]
        %v1345 = vld [vmem:[%s540 + $0x24] sm:$0xf]
        %v1346 = vld [vmem:[%s540 + $0x28] sm:$0xf]
        %v1347 = vld [vmem:[%s540 + $0x2c] sm:$0xf]
        %v1348 = vld [vmem:[%s540 + $0x30] sm:$0xf]
        %v1349 = vld [vmem:[%s540 + $0x34] sm:$0xf]
        %v1350 = vld [vmem:[%s540 + $0x38] sm:$0xf]
        %v1351 = vld [vmem:[%s540 + $0x3c] sm:$0xf]
        %v1368 = vunpack.c.l.b16 %v1336
        %v1369 = vunpack.c.l.b16 %v1337
        %v1370 = vunpack.c.l.b16 %v1338
        %v1371 = vunpack.c.l.b16 %v1339
        %v1372 = vunpack.c.l.b16 %v1340
        %v1373 = vunpack.c.l.b16 %v1341
        %v1374 = vunpack.c.l.b16 %v1342
        %v1375 = vunpack.c.l.b16 %v1343
        %v1376 = vunpack.c.l.b16 %v1344
        %v1377 = vunpack.c.l.b16 %v1345
        %v1378 = vunpack.c.l.b16 %v1346
        %v1379 = vunpack.c.l.b16 %v1347
        %v1380 = vunpack.c.l.b16 %v1348
        %v1381 = vunpack.c.l.b16 %v1349
        %v1382 = vunpack.c.l.b16 %v1350
        %v1383 = vunpack.c.l.b16 %v1351
        %v1384 = vpack.c.b16 %v1369, %v1368
        %v1385 = vpack.c.b16 %v1371, %v1370
        %v1386 = vpack.c.b16 %v1373, %v1372
        %v1387 = vpack.c.b16 %v1375, %v1374
        %v1388 = vpack.c.b16 %v1377, %v1376
        %v1389 = vpack.c.b16 %v1379, %v1378
        %v1390 = vpack.c.b16 %v1381, %v1380
        %v1391 = vpack.c.b16 %v1383, %v1382
        %1400 = vmatprep.subr.bf16.mxu0 0
        %1401 = vmatpush1.bf16.xpose.msra.mxu0 %v1391
        %1402 = vmatprep.subr.bf16.mxu0 0
        %1403 = vmatpush1.bf16.xpose.msra.mxu0 %v1390
        %1404 = vmatprep.subr.bf16.mxu0 0
        %1405 = vmatpush1.bf16.xpose.msra.mxu0 %v1389
        %1406 = vmatprep.subr.bf16.mxu0 0
        %1407 = vmatpush1.bf16.xpose.msra.mxu0 %v1388
        %1408 = vmatprep.subr.bf16.mxu0 0
        %1409 = vmatpush1.bf16.xpose.msra.mxu0 %v1387
        %1410 = vmatprep.subr.bf16.mxu0 0
        %1411 = vmatpush1.bf16.xpose.msra.mxu0 %v1386
        %1412 = vmatprep.subr.bf16.mxu0 0
        %1413 = vmatpush1.bf16.xpose.msra.mxu0 %v1385
        %1414 = vmatprep.subr.bf16.mxu0 0
        %1415 = vmatpush1.bf16.xpose.msra.mxu0 %v1384
        %1416 = vmatprep.subr.bf16.mxu0 0
        %1417 = vmatpush2.bf16.xpose.msra.mxu0 0
        %1418 = vmatprep.subr.bf16.mxu0 0
        %1419 = vmatpush2.bf16.xpose.msra.mxu0 0
        %1420 = vmatprep.subr.bf16.mxu0 0
        %1421 = vmatpush2.bf16.xpose.msra.mxu0 0
        %1422 = vmatprep.subr.bf16.mxu0 0
        %1423 = vmatpush2.bf16.xpose.msra.mxu0 0
        %1424 = vmatprep.subr.bf16.mxu0 0
        %1425 = vmatpush2.bf16.xpose.msra.mxu0 0
        %1426 = vmatprep.subr.bf16.mxu0 0
        %1427 = vmatpush2.bf16.xpose.msra.mxu0 0
        %1428 = vmatprep.subr.bf16.mxu0 0
        %1429 = vmatpush2.bf16.xpose.msra.mxu0 0
        %1430 = vmatprep.subr.bf16.mxu0 0
        %1431 = vmatpush2.bf16.xpose.msra.mxu0 0
        %1432 = vmatprep.mubr.bf16.mxu0 0
        %1433 = vmatmul.mubr.bf16.gmra.mxu0 %v1328
        %v1434 = vpop.f32.mrf.mxu0
        %v1435 = vadd.f32 0.0, %v1434
        %v1436 = vpop.f32.mrf.mxu0
        %v1437 = vpop.f32.mrf.mxu0
        %v1438 = vadd.f32 0.0, %v1437
        %v1439 = vpop.f32.mrf.mxu0
        %1440 = vmatprep.mubr.bf16.mxu0 0
        %1441 = vmatmul.mubr.bf16.gmra.mxu0 %v1329
        %v1442 = vpop.f32.mrf.mxu0
        %v1443 = vadd.f32 0.0, %v1442
        %v1444 = vpop.f32.mrf.mxu0
        %v1445 = vpop.f32.mrf.mxu0
        %v1446 = vadd.f32 0.0, %v1445
        %v1447 = vpop.f32.mrf.mxu0
        %1448 = vmatprep.mubr.bf16.mxu0 0
        %1449 = vmatmul.mubr.bf16.gmra.mxu0 %v1330
        %v1450 = vpop.f32.mrf.mxu0
        %v1451 = vadd.f32 0.0, %v1450
        %v1452 = vpop.f32.mrf.mxu0
        %v1453 = vpop.f32.mrf.mxu0
        %v1454 = vadd.f32 0.0, %v1453
        %v1455 = vpop.f32.mrf.mxu0
        %1456 = vmatprep.mubr.bf16.mxu0 0
        %1457 = vmatmul.mubr.bf16.gmra.mxu0 %v1331
        %v1458 = vpop.f32.mrf.mxu0
        %v1459 = vadd.f32 0.0, %v1458
        %v1460 = vpop.f32.mrf.mxu0
        %v1461 = vpop.f32.mrf.mxu0
        %v1462 = vadd.f32 0.0, %v1461
        %v1463 = vpop.f32.mrf.mxu0
        %1464 = vmatprep.mubr.bf16.mxu0 0
        %1465 = vmatmul.mubr.bf16.gmra.mxu0 %v1332
        %v1466 = vpop.f32.mrf.mxu0
        %v1467 = vadd.f32 0.0, %v1466
        %v1468 = vpop.f32.mrf.mxu0
        %v1469 = vpop.f32.mrf.mxu0
        %v1470 = vadd.f32 0.0, %v1469
        %v1471 = vpop.f32.mrf.mxu0
        %1472 = vmatprep.mubr.bf16.mxu0 0
        %1473 = vmatmul.mubr.bf16.gmra.mxu0 %v1333
        %v1474 = vpop.f32.mrf.mxu0
        %v1475 = vadd.f32 0.0, %v1474
        %v1476 = vpop.f32.mrf.mxu0
        %v1477 = vpop.f32.mrf.mxu0
        %v1478 = vadd.f32 0.0, %v1477
        %v1479 = vpop.f32.mrf.mxu0
        %1480 = vmatprep.mubr.bf16.mxu0 0
        %1481 = vmatmul.mubr.bf16.gmra.mxu0 %v1334
        %v1482 = vpop.f32.mrf.mxu0
        %v1483 = vadd.f32 0.0, %v1482
        %v1484 = vpop.f32.mrf.mxu0
        %v1485 = vpop.f32.mrf.mxu0
        %v1486 = vadd.f32 0.0, %v1485
        %v1487 = vpop.f32.mrf.mxu0
        %1488 = vmatprep.mubr.bf16.mxu0 0
        %1489 = vmatmul.mubr.bf16.gmra.mxu0 %v1335
        %v1490 = vpop.f32.mrf.mxu0
        %v1491 = vadd.f32 0.0, %v1490
        %v1492 = vpop.f32.mrf.mxu0
        %v1493 = vpop.f32.mrf.mxu0
        %v1494 = vadd.f32 0.0, %v1493
        %v1495 = vpop.f32.mrf.mxu0
        %1496 = vdwg.mxu0
        %v1497 = vadd.f32 %v1312, %v1435
        %v1498 = vadd.f32 %v1313, %v1438
        %v1499 = vadd.f32 %v1314, %v1443
        %v1500 = vadd.f32 %v1315, %v1446
        %v1501 = vadd.f32 %v1316, %v1451
        %v1502 = vadd.f32 %v1317, %v1454
        %v1503 = vadd.f32 %v1318, %v1459
        %v1504 = vadd.f32 %v1319, %v1462
        %v1505 = vadd.f32 %v1320, %v1467
        %v1506 = vadd.f32 %v1321, %v1470
        %v1507 = vadd.f32 %v1322, %v1475
        %v1508 = vadd.f32 %v1323, %v1478
        %v1509 = vadd.f32 %v1324, %v1483
        %v1510 = vadd.f32 %v1325, %v1486
        %v1511 = vadd.f32 %v1326, %v1491
        %v1512 = vadd.f32 %v1327, %v1494
        %1513 = vst [vmem:[#allocation4] sm:$0xff] %v1497
        %1514 = vst [vmem:[#allocation4 + $0x8] sm:$0xff] %v1498
        %1515 = vst [vmem:[#allocation4 + $0x10] sm:$0xff] %v1499
        %1516 = vst [vmem:[#allocation4 + $0x18] sm:$0xff] %v1500
        %1517 = vst [vmem:[#allocation4 + $0x20] sm:$0xff] %v1501
        %1518 = vst [vmem:[#allocation4 + $0x28] sm:$0xff] %v1502
        %1519 = vst [vmem:[#allocation4 + $0x30] sm:$0xff] %v1503
        %1520 = vst [vmem:[#allocation4 + $0x38] sm:$0xff] %v1504
        %1521 = vst [vmem:[#allocation4 + $0x40] sm:$0xff] %v1505
        %1522 = vst [vmem:[#allocation4 + $0x48] sm:$0xff] %v1506
        %1523 = vst [vmem:[#allocation4 + $0x50] sm:$0xff] %v1507
        %1524 = vst [vmem:[#allocation4 + $0x58] sm:$0xff] %v1508
        %1525 = vst [vmem:[#allocation4 + $0x60] sm:$0xff] %v1509
        %1526 = vst [vmem:[#allocation4 + $0x68] sm:$0xff] %v1510
        %1527 = vst [vmem:[#allocation4 + $0x70] sm:$0xff] %v1511
        %1528 = vst [vmem:[#allocation4 + $0x78] sm:$0xff] %v1512
        %1529 = vst.msk [vmem:[#allocation2] sm:$0xff] %vm1199, %v927
        %1530 = vst.msk [vmem:[#allocation2 + $0x8] sm:$0xff] %vm1199, %v928
        %1531 = vst.msk [vmem:[#allocation2 + $0x10] sm:$0xff] %vm1199, %v929
        %1532 = vst.msk [vmem:[#allocation2 + $0x18] sm:$0xff] %vm1199, %v930
        %1533 = vst.msk [vmem:[#allocation2 + $0x20] sm:$0xff] %vm1199, %v931
        %1534 = vst.msk [vmem:[#allocation2 + $0x28] sm:$0xff] %vm1199, %v932
        %1535 = vst.msk [vmem:[#allocation2 + $0x30] sm:$0xff] %vm1199, %v933
        %1536 = vst.msk [vmem:[#allocation2 + $0x38] sm:$0xff] %vm1199, %v934
        %1537 = vst.msk [vmem:[#allocation2 + $0x40] sm:$0xff] %vm1199, %v935
        %1538 = vst.msk [vmem:[#allocation2 + $0x48] sm:$0xff] %vm1199, %v936
        %1539 = vst.msk [vmem:[#allocation2 + $0x50] sm:$0xff] %vm1199, %v937
        %1540 = vst.msk [vmem:[#allocation2 + $0x58] sm:$0xff] %vm1199, %v938
        %1541 = vst.msk [vmem:[#allocation2 + $0x60] sm:$0xff] %vm1199, %v939
        %1542 = vst.msk [vmem:[#allocation2 + $0x68] sm:$0xff] %vm1199, %v940
        %1543 = vst.msk [vmem:[#allocation2 + $0x70] sm:$0xff] %vm1199, %v941
        %1544 = vst.msk [vmem:[#allocation2 + $0x78] sm:$0xff] %vm1199, %v942
        %p1545 = scmp.eq.s32.totalorder %s24, 1
        // Predicated region
        $region169: #{nonlocal_block.3} parent=151 // pred_check
          %p1546 = pneg %p1545
        $region170: #{nonlocal_block.3} parent=151 // pred_check_branch
          %1548 = sbr.rel (%p1546) target = $region172
        $region171: #{nonlocal_block.3} parent=151 // pred_region
          %v1549 = vld [vmem:[#allocation4] sm:$0xff]
          %v1550 = vld [vmem:[#allocation4 + $0x8] sm:$0xff]
          %v1551 = vld [vmem:[#allocation4 + $0x10] sm:$0xff]
          %v1552 = vld [vmem:[#allocation4 + $0x18] sm:$0xff]
          %v1553 = vld [vmem:[#allocation4 + $0x20] sm:$0xff]
          %v1554 = vld [vmem:[#allocation4 + $0x28] sm:$0xff]
          %v1555 = vld [vmem:[#allocation4 + $0x30] sm:$0xff]
          %v1556 = vld [vmem:[#allocation4 + $0x38] sm:$0xff]
          %v1557 = vld [vmem:[#allocation4 + $0x40] sm:$0xff]
          %v1558 = vld [vmem:[#allocation4 + $0x48] sm:$0xff]
          %v1559 = vld [vmem:[#allocation4 + $0x50] sm:$0xff]
          %v1560 = vld [vmem:[#allocation4 + $0x58] sm:$0xff]
          %v1561 = vld [vmem:[#allocation4 + $0x60] sm:$0xff]
          %v1562 = vld [vmem:[#allocation4 + $0x68] sm:$0xff]
          %v1563 = vld [vmem:[#allocation4 + $0x70] sm:$0xff]
          %v1564 = vld [vmem:[#allocation4 + $0x78] sm:$0xff]
          %v1565 = vld [vmem:[#allocation3] sm:$0xff]
          %v1566 = vld [vmem:[#allocation3 + $0x8] sm:$0xff]
          %v1567 = vld [vmem:[#allocation3 + $0x10] sm:$0xff]
          %v1568 = vld [vmem:[#allocation3 + $0x18] sm:$0xff]
          %v1569 = vld [vmem:[#allocation3 + $0x20] sm:$0xff]
          %v1570 = vld [vmem:[#allocation3 + $0x28] sm:$0xff]
          %v1571 = vld [vmem:[#allocation3 + $0x30] sm:$0xff]
          %v1572 = vld [vmem:[#allocation3 + $0x38] sm:$0xff]
          %v1573 = vld [vmem:[#allocation3 + $0x40] sm:$0xff]
          %v1574 = vld [vmem:[#allocation3 + $0x48] sm:$0xff]
          %v1575 = vld [vmem:[#allocation3 + $0x50] sm:$0xff]
          %v1576 = vld [vmem:[#allocation3 + $0x58] sm:$0xff]
          %v1577 = vld [vmem:[#allocation3 + $0x60] sm:$0xff]
          %v1578 = vld [vmem:[#allocation3 + $0x68] sm:$0xff]
          %v1579 = vld [vmem:[#allocation3 + $0x70] sm:$0xff]
          %v1580 = vld [vmem:[#allocation3 + $0x78] sm:$0xff]
          %v1581 = vrcp.pop %v1565
          %v1582 = vrcp.pop %v1566
          %v1583 = vrcp.pop %v1567
          %v1584 = vrcp.pop %v1568
          %v1585 = vrcp.pop %v1569
          %v1586 = vrcp.pop %v1570
          %v1587 = vrcp.pop %v1571
          %v1588 = vrcp.pop %v1572
          %v1589 = vrcp.pop %v1573
          %v1590 = vrcp.pop %v1574
          %v1591 = vrcp.pop %v1575
          %v1592 = vrcp.pop %v1576
          %v1593 = vrcp.pop %v1577
          %v1594 = vrcp.pop %v1578
          %v1595 = vrcp.pop %v1579
          %v1596 = vrcp.pop %v1580
          %1598 = vset.pattern.permute.xlu0 0
          %1599 = vperm.xlu0 %1598, %v1581
          %v1600 = vpop.permute.xlu0 %1599
          %1603 = vset.pattern.permute.xlu0 0
          %1604 = vperm.xlu0 %1603, %v1582
          %v1605 = vpop.permute.xlu0 %1604
          %1608 = vset.pattern.permute.xlu0 0
          %1609 = vperm.xlu0 %1608, %v1583
          %v1610 = vpop.permute.xlu0 %1609
          %1613 = vset.pattern.permute.xlu0 0
          %1614 = vperm.xlu0 %1613, %v1584
          %v1615 = vpop.permute.xlu0 %1614
          %1618 = vset.pattern.permute.xlu0 0
          %1619 = vperm.xlu0 %1618, %v1585
          %v1620 = vpop.permute.xlu0 %1619
          %1623 = vset.pattern.permute.xlu0 0
          %1624 = vperm.xlu0 %1623, %v1586
          %v1625 = vpop.permute.xlu0 %1624
          %1628 = vset.pattern.permute.xlu0 0
          %1629 = vperm.xlu0 %1628, %v1587
          %v1630 = vpop.permute.xlu0 %1629
          %1633 = vset.pattern.permute.xlu0 0
          %1634 = vperm.xlu0 %1633, %v1588
          %v1635 = vpop.permute.xlu0 %1634
          %1638 = vset.pattern.permute.xlu0 0
          %1639 = vperm.xlu0 %1638, %v1589
          %v1640 = vpop.permute.xlu0 %1639
          %1643 = vset.pattern.permute.xlu0 0
          %1644 = vperm.xlu0 %1643, %v1590
          %v1645 = vpop.permute.xlu0 %1644
          %1648 = vset.pattern.permute.xlu0 0
          %1649 = vperm.xlu0 %1648, %v1591
          %v1650 = vpop.permute.xlu0 %1649
          %1653 = vset.pattern.permute.xlu0 0
          %1654 = vperm.xlu0 %1653, %v1592
          %v1655 = vpop.permute.xlu0 %1654
          %1658 = vset.pattern.permute.xlu0 0
          %1659 = vperm.xlu0 %1658, %v1593
          %v1660 = vpop.permute.xlu0 %1659
          %1663 = vset.pattern.permute.xlu0 0
          %1664 = vperm.xlu0 %1663, %v1594
          %v1665 = vpop.permute.xlu0 %1664
          %1668 = vset.pattern.permute.xlu0 0
          %1669 = vperm.xlu0 %1668, %v1595
          %v1670 = vpop.permute.xlu0 %1669
          %1673 = vset.pattern.permute.xlu0 0
          %1674 = vperm.xlu0 %1673, %v1596
          %v1675 = vpop.permute.xlu0 %1674
          %v1677 = vmul.f32 %v1549, %v1600
          %v1678 = vmul.f32 %v1550, %v1605
          %v1679 = vmul.f32 %v1551, %v1610
          %v1680 = vmul.f32 %v1552, %v1615
          %v1681 = vmul.f32 %v1553, %v1620
          %v1682 = vmul.f32 %v1554, %v1625
          %v1683 = vmul.f32 %v1555, %v1630
          %v1684 = vmul.f32 %v1556, %v1635
          %v1685 = vmul.f32 %v1557, %v1640
          %v1686 = vmul.f32 %v1558, %v1645
          %v1687 = vmul.f32 %v1559, %v1650
          %v1688 = vmul.f32 %v1560, %v1655
          %v1689 = vmul.f32 %v1561, %v1660
          %v1690 = vmul.f32 %v1562, %v1665
          %v1691 = vmul.f32 %v1563, %v1670
          %v1692 = vmul.f32 %v1564, %v1675
          %v1693 = vld [vmem:[%s4] sm:$0xf]
          %v1694 = vld [vmem:[%s4 + $0x4] sm:$0xf]
          %v1695 = vpack.c.bf16 %v1678, %v1677
          %v1696 = vpack.c.bf16 %v1680, %v1679
          %v1697 = vpack.c.bf16 %v1682, %v1681
          %v1698 = vpack.c.bf16 %v1684, %v1683
          %v1699 = vpack.c.bf16 %v1686, %v1685
          %v1700 = vpack.c.bf16 %v1688, %v1687
          %v1701 = vpack.c.bf16 %v1690, %v1689
          %v1702 = vpack.c.bf16 %v1692, %v1691
          %v1703 = vld [vmem:[%s5] sm:$0xff]
          %v1704 = vld [vmem:[%s5 + $0x8] sm:$0xff]
          %1706 = vset.pattern.permute.xlu0 0
          %1707 = vperm.xlu0 %1706, %v1703
          %v1708 = vpop.permute.xlu0 %1707
          %1711 = vset.pattern.permute.xlu0 0
          %1712 = vperm.xlu0 %1711, %v1704
          %v1713 = vpop.permute.xlu0 %1712
          %v1717 = vunpack.c.l.b16 %v1693
          %v1718 = vunpack.c.l.b16 %v1694
          %v1719 = vpack.c.b16 %v1718, %v1717
          %1721 = vmatprep.subr.bf16.mxu0 0
          %1722 = vmatpush1.bf16.xpose.msra.mxu0 %v1702
          %1723 = vmatprep.subr.bf16.mxu0 0
          %1724 = vmatpush1.bf16.xpose.msra.mxu0 %v1701
          %1725 = vmatprep.subr.bf16.mxu0 0
          %1726 = vmatpush1.bf16.xpose.msra.mxu0 %v1700
          %1727 = vmatprep.subr.bf16.mxu0 0
          %1728 = vmatpush1.bf16.xpose.msra.mxu0 %v1699
          %1729 = vmatprep.subr.bf16.mxu0 0
          %1730 = vmatpush1.bf16.xpose.msra.mxu0 %v1698
          %1731 = vmatprep.subr.bf16.mxu0 0
          %1732 = vmatpush1.bf16.xpose.msra.mxu0 %v1697
          %1733 = vmatprep.subr.bf16.mxu0 0
          %1734 = vmatpush1.bf16.xpose.msra.mxu0 %v1696
          %1735 = vmatprep.subr.bf16.mxu0 0
          %1736 = vmatpush1.bf16.xpose.msra.mxu0 %v1695
          %1737 = vmatprep.subr.bf16.mxu0 0
          %1738 = vmatpush2.bf16.xpose.msra.mxu0 0
          %1739 = vmatprep.subr.bf16.mxu0 0
          %1740 = vmatpush2.bf16.xpose.msra.mxu0 0
          %1741 = vmatprep.subr.bf16.mxu0 0
          %1742 = vmatpush2.bf16.xpose.msra.mxu0 0
          %1743 = vmatprep.subr.bf16.mxu0 0
          %1744 = vmatpush2.bf16.xpose.msra.mxu0 0
          %1745 = vmatprep.subr.bf16.mxu0 0
          %1746 = vmatpush2.bf16.xpose.msra.mxu0 0
          %1747 = vmatprep.subr.bf16.mxu0 0
          %1748 = vmatpush2.bf16.xpose.msra.mxu0 0
          %1749 = vmatprep.subr.bf16.mxu0 0
          %1750 = vmatpush2.bf16.xpose.msra.mxu0 0
          %1751 = vmatprep.subr.bf16.mxu0 0
          %1752 = vmatpush2.bf16.xpose.msra.mxu0 0
          %1753 = vmatprep.mubr.bf16.mxu0 0
          %1754 = vmatmul.mubr.bf16.gmra.mxu0 %v1719
          %v1755 = vpop.f32.mrf.mxu0
          %v1756 = vadd.f32 %v1708, %v1755
          %v1757 = vpop.f32.mrf.mxu0
          %v1758 = vpop.f32.mrf.mxu0
          %v1759 = vadd.f32 %v1713, %v1758
          %v1760 = vpop.f32.mrf.mxu0
          %1761 = vdwg.mxu0
          %v1762 = vld [vmem:[%s547] sm:$0xff]
          %v1763 = vld [vmem:[%s547 + $0x8] sm:$0xff]
          %v1764 = vadd.f32 %v1756, %v1762
          %v1765 = vadd.f32 %v1759, %v1763
          %1766 = vst [vmem:[%s589] sm:$0xff] %v1764
          %1767 = vst [vmem:[%s589 + $0x8] sm:$0xff] %v1765
        $region172: #{nonlocal_block.3} parent=151 // pred_fallthru
          _
        %s1768 = sand.u32 %s200, 1
        %s1769 = sand.u32 %s200, 1
        %s1770 = smul.addr %s1769, 16
        %s1771 = scalar_lea.vmem [#allocation8], %s1770
        // Predicated region
        $region173: #{nonlocal_block.3} parent=151 // pred_check
          %p1772 = pneg %p210
        $region174: #{nonlocal_block.3} parent=151 // pred_check_branch
          %1774 = sbr.rel (%p1772) target = $region176
        $region175: #{nonlocal_block.3} parent=151 // pred_region
          %s1775 = smul.addr %s22, 4
          %s1776 = sadd.s32 %s23, %s1775
          %s1777 = smul.addr %s1776, 8
          %s1778 = scalar_lea.vmem %s6, %s1777
          // Predicated region
          $region177: #{nonlocal_block.3} parent=175 // pred_check
            _
          $region178: #{nonlocal_block.3} parent=175 // pred_check_branch
            %1780 = sbr.rel (0) target = $region180
          $region179: #{nonlocal_block.3} parent=175 // pred_region
            // Predicated region
            $region181: #{nonlocal_block.3} parent=179 // pred_check
              _
            $region182: #{nonlocal_block.3} parent=179 // pred_check_branch
              %1782 = sbr.rel (0) target = $region184
            $region183: #{nonlocal_block.3} parent=179 // pred_region
              // Predicated region
              $region196: #{nonlocal_block.3} parent=183 // pred_check
                _
              $region197: #{nonlocal_block.3} parent=183 // pred_check_branch
                %1800 = sbr.rel (0) target = $region199
              $region198: #{nonlocal_block.3} parent=183 // pred_region
                loop: start=0, step=1, limit=1
                $region200: #{nonlocal_block.3} parent=198 // loop_pre_header
                  _
                $region201: #{nonlocal_block.3} parent=198 // loop_header
                  %s1802 = sphi 0, %s1806
                  %p1803 = scmp.ge.s32.totalorder %s1802, 1
                  %s1807 = sphi %s1771, %s1771
                  %s1808 = sphi %s1778, %s1778
                $region202: #{nonlocal_block.3} parent=198 // loop_header_branch
                  %1805 = sbr.rel (%p1803) target = $region206
                $region203: #{nonlocal_block.3} parent=198 // loop_body
                  %v1809 = vld [vmem:[%s1807] sm:$0xff]
                  %1810 = vst [vmem:[%s1808] sm:$0xff] %v1809
                  %v1811 = vld [vmem:[%s1807 + $0x8] sm:$0xff]
                  %1812 = vst [vmem:[%s1808 + $0x10] sm:$0xff] %v1811
                $region204: #{nonlocal_block.3} parent=198 // loop_footer
                  %s1806 = sadd.s32 1, %s1802
                $region205: #{nonlocal_block.3} parent=198 // loop_footer_branch
                  %1801 = sbr.rel target = $region201
                $region206: #{nonlocal_block.3} parent=198 // loop_exit
                  _
              $region199: #{nonlocal_block.3} parent=183 // pred_fallthru
                _
              // Predicated region
              $region207: #{nonlocal_block.3} parent=183 // pred_check
                _
              $region208: #{nonlocal_block.3} parent=183 // pred_check_branch
                %1814 = sbr.rel target = $region210
              $region209: #{nonlocal_block.3} parent=183 // pred_region
                _
              $region210: #{nonlocal_block.3} parent=183 // pred_fallthru
                _
            $region184: #{nonlocal_block.3} parent=179 // pred_fallthru
              _
            // Predicated region
            $region185: #{nonlocal_block.3} parent=179 // pred_check
              _
            $region186: #{nonlocal_block.3} parent=179 // pred_check_branch
              %1784 = sbr.rel target = $region188
            $region187: #{nonlocal_block.3} parent=179 // pred_region
              %s1786 = ssub.s32 256, 1
              loop: start=0, step=1, limit=1
              $region189: #{nonlocal_block.3} parent=187 // loop_pre_header
                _
              $region190: #{nonlocal_block.3} parent=187 // loop_header
                %s1788 = sphi 0, %s1792
                %p1789 = scmp.ge.s32.totalorder %s1788, 1
                %s1793 = sphi %s1771, %s1771
                %s1794 = sphi %s1778, %s1778
              $region191: #{nonlocal_block.3} parent=187 // loop_header_branch
                %1791 = sbr.rel (%p1789) target = $region195
              $region192: #{nonlocal_block.3} parent=187 // loop_body
                %v1795 = vld [vmem:[%s1793] sm:%s1786]
                %1796 = vst [vmem:[%s1794] sm:%s1786] %v1795
                %v1797 = vld [vmem:[%s1793 + $0x8] sm:%s1786]
                %1798 = vst [vmem:[%s1794 + $0x10] sm:%s1786] %v1797
              $region193: #{nonlocal_block.3} parent=187 // loop_footer
                %s1792 = sadd.s32 1, %s1788
              $region194: #{nonlocal_block.3} parent=187 // loop_footer_branch
                %1787 = sbr.rel target = $region190
              $region195: #{nonlocal_block.3} parent=187 // loop_exit
                _
            $region188: #{nonlocal_block.3} parent=179 // pred_fallthru
              _
          $region180: #{nonlocal_block.3} parent=175 // pred_fallthru
            _
          %1815 = vnop
        $region176: #{nonlocal_block.3} parent=151 // pred_fallthru
          _
      $region152: #{nonlocal_block.3} parent=5 // pred_fallthru
        _
      %p1816 = scmp.le.s32.totalorder 2, %s12
      // Predicated region
      $region211: #{nonlocal_block.3} parent=5 // pred_check
        %p1817 = pneg %p1816
      $region212: #{nonlocal_block.3} parent=5 // pred_check_branch
        %1819 = sbr.rel (%p1817) target = $region214
      $region213: #{nonlocal_block.3} parent=5 // pred_region
        %s1820 = ssub.s32 %s12, 2
        // Predicated region
        $region215: #{nonlocal_block.3} parent=213 // pred_check
          %p1821 = pneg %p216
        $region216: #{nonlocal_block.3} parent=213 // pred_check_branch
          %1823 = sbr.rel (%p1821) target = $region218
        $region217: #{nonlocal_block.3} parent=213 // pred_region
          %s1824 = sand.u32 %s201, 1
          %s1825 = sand.u32 %s201, 1
          %s1826 = smul.addr %s1825, 16
          %s1827 = scalar_lea.vmem [#allocation8], %s1826
        $region218: #{nonlocal_block.3} parent=213 // pred_fallthru
          _
      $region214: #{nonlocal_block.3} parent=5 // pred_fallthru
        _
    $region6: #{nonlocal_block.3} parent=1 // loop_footer
      %s16 = sadd.s32 1, %s12
    $region7: #{nonlocal_block.3} parent=1 // loop_footer_branch
      %11 = sbr.rel target = $region3
    $region8: #{nonlocal_block.3} parent=1 // loop_exit
      _

</llo_original>
